<compile_context>
chip_gen: v5e
topology: v5e:2x2
jax: 0.10.0
libtpu: 0.0.40
codegen_flags: <defaults>
</compile_context>

<pallas_src>
import functools

import jax
import jax.numpy as jnp
from jax.experimental import pallas as pl
from jax.experimental.pallas import tpu as pltpu

_BN_EPS = 1e-5
MATMUL_DTYPE = jnp.float32   # bf16 on v6e/v7x once the tolerance is re-validated


def _round_up(x, m):
    return (x + m - 1) // m * m


def _mm(a, b):
    return jnp.dot(a.astype(MATMUL_DTYPE), b.astype(MATMUL_DTYPE),
                   preferred_element_type=jnp.float32)


# ----------------------------- in-kernel helpers ---------------------------- #

def _conv7x7_packed(padded, w_packed, bias, H, W, Wp):
    """One K=49*Cin matmul over lane-shifted windows of a flat padded image.

    padded:   (Cin_pad, Hp*Wp) fully replicate-padded image, pixels on lanes.
    w_packed: (Cout_pad, 49*Cin_pad) with k = (dy*7+dx)*Cin_pad + ci.
    Returns (Cout_pad, H*Wp); columns u in [W, Wp) of each row are don't-care.
    """
    cin = padded.shape[0]
    span = H * Wp
    # 8 lanes of slack so the last tap's window slice stays in bounds.
    src = jnp.concatenate([padded, jnp.zeros((cin, 8), padded.dtype)], axis=1)
    windows = [src[:, dy * Wp + dx: dy * Wp + dx + span]
               for dy in range(7) for dx in range(7)]
    slab = jnp.concatenate(windows, axis=0)            # (49*Cin_pad, H*Wp)
    return _mm(w_packed, slab) + bias


def _repad_rows(a, col, H, W, Wp):
    """Replicate-pad a conv output in-kernel (no HBM round trip).

    a:   (Cch, H*Wp) conv output; valid columns are col < W, rest garbage.
    col: (1, H*Wp) int32 column index (q % Wp).
    Returns (Cch, (H+6)*Wp) fully replicate-padded image (width via lane rolls
    + selects, height via row concats).
    """
    wf = jnp.roll(a, 3, axis=1)                        # interior columns
    wf = jnp.where(col == 0, a, wf)                    # left border -> column 0
    wf = jnp.where(col == 1, jnp.roll(a, 1, axis=1), wf)
    wf = jnp.where(col == 2, jnp.roll(a, 2, axis=1), wf)
    wf = jnp.where(col == W + 3, jnp.roll(a, 4, axis=1), wf)   # right border -> col W-1
    wf = jnp.where(col == W + 4, jnp.roll(a, 5, axis=1), wf)
    wf = jnp.where(col == W + 5, jnp.roll(a, 6, axis=1), wf)
    top = wf[:, 0:Wp]
    bot = wf[:, (H - 1) * Wp: H * Wp]
    return jnp.concatenate([top, top, top, wf, bot, bot, bot], axis=1)


def _masked_stats(acc, col, W):
    """Per-channel (sum, sum_sq) over valid pixels only -> (Cch, 2)."""
    valid = (col < W).astype(acc.dtype)
    return jnp.concatenate(
        [jnp.sum(acc * valid, axis=1, keepdims=True),
         jnp.sum(acc * acc * valid, axis=1, keepdims=True)], axis=1)


# ----------------------------- Pallas kernels ------------------------------- #

def _att_conv1_kernel(x_ref, w1_ref, b1_ref, w2_ref, b2_ref, wc1_ref, bc1_ref,
                      col_ref, y_ref, t1_ref, st1_ref, *, H, W, Wp):
    """Channel attention + gate, conv1 (single packed matmul), BN1 partial stats."""
    xp = x_ref[0]                                                   # (C, Hp*Wp)
    # Channel attention is pointwise over pixels, so it commutes with the
    # replicate padding already present in xp.
    h = jnp.maximum(_mm(w1_ref[...], xp) + b1_ref[...], 0.0)        # (Cr, Hp*Wp)
    att = _mm(w2_ref[...], h) + b2_ref[...]                         # (C, Hp*Wp)
    y_all = xp * att                                                # x * channel_att

    # Interior attended pixels, stored in the same flat coordinates as t2 / out.
    y_ref[0] = y_all[:, 3 * Wp + 3: 3 * Wp + 3 + H * Wp]

    # conv1: one (Cr, 49*C) x (49*C, H*Wp) matmul over lane-shifted windows.
    acc = _conv7x7_packed(y_all, wc1_ref[...], bc1_ref[...], H, W, Wp)
    col = col_ref[...]
    st1_ref[0] = _masked_stats(acc, col, W)
    # Write conv1's output already replicate-padded for stage 2's windows.
    t1_ref[0] = _repad_rows(acc, col, H, W, Wp)


def _bn_relu_conv2_kernel(t1_ref, m1_ref, i1_ref, wc2_ref, bc2_ref, col_ref,
                          t2_ref, st2_ref, *, H, W, Wp):
    """BN1 (precombined stats) + ReLU, conv2 (single packed matmul), BN2 partial stats."""
    s = jnp.maximum((t1_ref[0] - m1_ref[...]) * i1_ref[...], 0.0)   # (Cr, Hp*Wp)
    acc = _conv7x7_packed(s, wc2_ref[...], bc2_ref[...], H, W, Wp)  # (C, H*Wp)
    col = col_ref[...]
    st2_ref[0] = _masked_stats(acc, col, W)
    t2_ref[0] = acc


def _bn_sigmoid_gate_kernel(t2_ref, y_ref, m2_ref, i2_ref, o_ref):
    """BN2 (precombined stats) + sigmoid + final gate, lane-dense."""
    z = (t2_ref[0] - m2_ref[...]) * i2_ref[...]
    gate = 1.0 / (1.0 + jnp.exp(-z))
    o_ref[0] = y_ref[0] * gate


# -------------------------------- wrappers ---------------------------------- #

def ga_prepare_params(p):
    """One-time weight repacking / channel padding (off the forward path)."""
    Cr, C = p["W1"].shape
    CP, CrP = _round_up(C, 8), _round_up(Cr, 8)

    def packed_conv(w):                       # OIHW -> (Opad, 49*Ipad), k=(dy*7+dx)*Ipad+ci
        O, I = w.shape[0], w.shape[1]
        Op, Ip = _round_up(O, 8), _round_up(I, 8)
        w = jnp.pad(jnp.asarray(w, jnp.float32),
                    ((0, Op - O), (0, Ip - I), (0, 0), (0, 0)))
        return jnp.transpose(w, (0, 2, 3, 1)).reshape(Op, 49 * Ip)

    def col_vec(b, n):
        b = jnp.asarray(b, jnp.float32)[:, None]
        return jnp.pad(b, ((0, n - b.shape[0]), (0, 0)))

    return {
        "w1": jnp.pad(jnp.asarray(p["W1"], jnp.float32), ((0, CrP - Cr), (0, CP - C))),
        "b1": col_vec(p["b1"], CrP),
        "w2": jnp.pad(jnp.asarray(p["W2"], jnp.float32), ((0, CP - C), (0, CrP - Cr))),
        "b2": col_vec(p["b2"], CP),
        "wc1": packed_conv(p["Wc1"]), "bc1": col_vec(p["bc1"], CrP),
        "wc2": packed_conv(p["Wc2"]), "bc2": col_vec(p["bc2"], CP),
    }


def ga_forward(x, prep):
    """Pallas implementation of GA.forward.  Input/output: NCHW float32."""
    B, C, H, W = x.shape
    CrP, CP = prep["w1"].shape
    Hp, Wp = H + 6, W + 6
    HWp, HpWp = H * Wp, Hp * Wp
    count = float(B * H * W)

    # Channels-major input: zero-pad channels to the sublane tile, replicate-pad
    # the spatial halo once, flatten pixels onto the lane axis.  No transpose.
    xp = jnp.pad(x, ((0, 0), (0, CP - C), (0, 0), (0, 0)))
    xp = jnp.pad(xp, ((0, 0), (0, 0), (3, 3), (3, 3)), mode="edge")
    xp = xp.reshape(B, CP, HpWp)
    col = (jnp.arange(HWp, dtype=jnp.int32) % Wp)[None, :]

    cparams = pltpu.CompilerParams(dimension_semantics=("parallel",),
                                   vmem_limit_bytes=48 * 1024 * 1024)

    # ---- stage 1: channel attention + gate, conv1, partial BN1 stats -------
    y, t1, st1 = pl.pallas_call(
        functools.partial(_att_conv1_kernel, H=H, W=W, Wp=Wp),
        grid=(B,),
        in_specs=[
            pl.BlockSpec((1, CP, HpWp), lambda b: (b, 0, 0)),
            pl.BlockSpec((CrP, CP), lambda b: (0, 0)),
            pl.BlockSpec((CrP, 1), lambda b: (0, 0)),
            pl.BlockSpec((CP, CrP), lambda b: (0, 0)),
            pl.BlockSpec((CP, 1), lambda b: (0, 0)),
            pl.BlockSpec((CrP, 49 * CP), lambda b: (0, 0)),
            pl.BlockSpec((CrP, 1), lambda b: (0, 0)),
            pl.BlockSpec((1, HWp), lambda b: (0, 0)),
        ],
        out_specs=(
            pl.BlockSpec((1, CP, HWp), lambda b: (b, 0, 0)),
            pl.BlockSpec((1, CrP, HpWp), lambda b: (b, 0, 0)),
            pl.BlockSpec((1, CrP, 2), lambda b: (b, 0, 0)),
        ),
        out_shape=(
            jax.ShapeDtypeStruct((B, CP, HWp), jnp.float32),
            jax.ShapeDtypeStruct((B, CrP, HpWp), jnp.float32),
            jax.ShapeDtypeStruct((B, CrP, 2), jnp.float32),
        ),
        compiler_params=cparams,
    )(xp, prep["w1"], prep["b1"], prep["w2"], prep["b2"],
      prep["wc1"], prep["bc1"], col)

    # BN stat combine hoisted out of the grid bodies (tiny, f32).
    def _bn_stats(st):
        s = jnp.sum(st, axis=0)                                   # (Cch, 2)
        mean = s[:, 0:1] * (1.0 / count)
        var = jnp.maximum(s[:, 1:2] * (1.0 / count) - mean * mean, 0.0)
        return mean, jax.lax.rsqrt(var + _BN_EPS)

    m1, i1 = _bn_stats(st1)

    # ---- stage 2: BN1 + ReLU, conv2, partial BN2 stats ----------------------
    t2, st2 = pl.pallas_call(
        functools.partial(_bn_relu_conv2_kernel, H=H, W=W, Wp=Wp),
        grid=(B,),
        in_specs=[
            pl.BlockSpec((1, CrP, HpWp), lambda b: (b, 0, 0)),
            pl.BlockSpec((CrP, 1), lambda b: (0, 0)),
            pl.BlockSpec((CrP, 1), lambda b: (0, 0)),
            pl.BlockSpec((CP, 49 * CrP), lambda b: (0, 0)),
            pl.BlockSpec((CP, 1), lambda b: (0, 0)),
            pl.BlockSpec((1, HWp), lambda b: (0, 0)),
        ],
        out_specs=(
            pl.BlockSpec((1, CP, HWp), lambda b: (b, 0, 0)),
            pl.BlockSpec((1, CP, 2), lambda b: (b, 0, 0)),
        ),
        out_shape=(
            jax.ShapeDtypeStruct((B, CP, HWp), jnp.float32),
            jax.ShapeDtypeStruct((B, CP, 2), jnp.float32),
        ),
        compiler_params=cparams,
    )(t1, m1, i1, prep["wc2"], prep["bc2"], col)

    m2, i2 = _bn_stats(st2)

    # ---- stage 3: BN2 + sigmoid + final gate --------------------------------
    out = pl.pallas_call(
        _bn_sigmoid_gate_kernel,
        grid=(B,),
        in_specs=[
            pl.BlockSpec((1, CP, HWp), lambda b: (b, 0, 0)),
            pl.BlockSpec((1, CP, HWp), lambda b: (b, 0, 0)),
            pl.BlockSpec((CP, 1), lambda b: (0, 0)),
            pl.BlockSpec((CP, 1), lambda b: (0, 0)),
        ],
        out_specs=pl.BlockSpec((1, CP, HWp), lambda b: (b, 0, 0)),
        out_shape=jax.ShapeDtypeStruct((B, CP, HWp), jnp.float32),
        compiler_params=cparams,
    )(t2, y, m2, i2)

    # Drop the channel / width padding (pure slice, NCHW already).
    return out.reshape(B, CP, H, Wp)[:, :C, :, :W]


# --------------------------- pure-JAX reference ------------------------------ #

def ga_reference(x, p):
    B, C, H, W = x.shape
    xp = jnp.transpose(x, (0, 2, 3, 1)).reshape(B, H * W, C)
    h = jnp.maximum(xp @ p["W1"].T + p["b1"], 0.0)
    att = (h @ p["W2"].T + p["b2"]).reshape(B, H, W, C)
    xa = x * jnp.transpose(att, (0, 3, 1, 2))

    def conv(z, w, b):
        zp = jnp.pad(z, ((0, 0), (0, 0), (3, 3), (3, 3)), mode="edge")
        o = jax.lax.conv_general_dilated(
            zp, w, (1, 1), "VALID", dimension_numbers=("NCHW", "OIHW", "NCHW"))
        return o + b[None, :, None, None]

    def bn(z):
        m = jnp.mean(z, axis=(0, 2, 3), keepdims=True)
        v = jnp.mean((z - m) ** 2, axis=(0, 2, 3), keepdims=True)
        return (z - m) * jax.lax.rsqrt(v + _BN_EPS)

    s = jnp.maximum(bn(conv(xa, p["Wc1"], p["bc1"])), 0.0)
    s = jax.nn.sigmoid(bn(conv(s, p["Wc2"], p["bc2"])))
    return xa * s


# ---------------------------------- main ------------------------------------- #

if __name__ == "__main__":
    B, C, H, W = 2, 8, 16, 16
    rate = 4
    Cr = C // rate

    key = jax.random.PRNGKey(0)
    ks = jax.random.split(key, 10)
    x = jax.random.normal(ks[0], (B, C, H, W), jnp.float32)

    # Deterministic parameters, PyTorch layouts (Linear: (out,in); Conv: OIHW).
    params = {
        "W1": 0.20 * jax.random.normal(ks[1], (Cr, C), jnp.float32),
        "b1": 0.10 * jax.random.normal(ks[2], (Cr,), jnp.float32),
        "W2": 0.20 * jax.random.normal(ks[3], (C, Cr), jnp.float32),
        "b2": 0.10 * jax.random.normal(ks[4], (C,), jnp.float32),
        "Wc1": 0.05 * jax.random.normal(ks[5], (Cr, C, 7, 7), jnp.float32),
        "bc1": 0.05 * jax.random.normal(ks[6], (Cr,), jnp.float32),
        "Wc2": 0.05 * jax.random.normal(ks[7], (C, Cr, 7, 7), jnp.float32),
        "bc2": 0.05 * jax.random.normal(ks[8], (C,), jnp.float32),
    }

    prep = ga_prepare_params(params)          # one-time weight repacking
    fwd = jax.jit(ga_forward)

    out = jax.block_until_ready(fwd(x, prep))
    ref = jax.block_until_ready(ga_reference(x, params))

    assert out.shape == (B, C, H, W)
    assert bool(jnp.all(jnp.isfinite(out)))
    max_err = float(jnp.max(jnp.abs(out - ref)))
    assert bool(jnp.allclose(out, ref, rtol=2e-3, atol=2e-3)), (
        "mismatch vs reference, max abs diff = %e" % max_err)

    print("KERNEL_OK")
</pallas_src>

<mosaic_0001>
module attributes {stable_mosaic.version = 11 : i64} {
  func.func @_bn_sigmoid_gate_kernel(%arg0: i32, %arg1: memref<1x8x352xf32, #tpu.memory_space<vmem>>, %arg2: memref<1x8x352xf32, #tpu.memory_space<vmem>>, %arg3: memref<8x1xf32, #tpu.memory_space<vmem>>, %arg4: memref<8x1xf32, #tpu.memory_space<vmem>>, %arg5: memref<1x8x352xf32, #tpu.memory_space<vmem>>) attributes {dimension_semantics = [#tpu.dimension_semantics<parallel>], iteration_bounds = array<i64: 2>, scalar_prefetch = 0 : i64, scratch_operands = 0 : i64, tpu.core_type = #tpu.core_type<tc>, window_params = [{transform_indices = @transform_0, window_bounds = array<i64: 1, 8, 352>}, {transform_indices = @transform_1, window_bounds = array<i64: 1, 8, 352>}, {pipeline_mode = #tpu.pipeline_mode<synchronous>, transform_indices = @transform_2, window_bounds = array<i64: 8, 1>}, {pipeline_mode = #tpu.pipeline_mode<synchronous>, transform_indices = @transform_3, window_bounds = array<i64: 8, 1>}, {transform_indices = @transform_4, window_bounds = array<i64: 1, 8, 352>}]} {
    %c0 = arith.constant 0 : index
    %c0_0 = arith.constant 0 : index
    %c0_1 = arith.constant 0 : index
    %0 = vector.load %arg1[%c0, %c0_0, %c0_1] : memref<1x8x352xf32, #tpu.memory_space<vmem>>, vector<1x8x352xf32>
    %1 = vector.shape_cast %0 : vector<1x8x352xf32> to vector<8x352xf32>
    %c0_2 = arith.constant 0 : index
    %c0_3 = arith.constant 0 : index
    %2 = vector.load %arg3[%c0_2, %c0_3] : memref<8x1xf32, #tpu.memory_space<vmem>>, vector<8x1xf32>
    %3 = vector.broadcast %2 : vector<8x1xf32> to vector<8x352xf32>
    %4 = arith.subf %1, %3 : vector<8x352xf32>
    %c0_4 = arith.constant 0 : index
    %c0_5 = arith.constant 0 : index
    %5 = vector.load %arg4[%c0_4, %c0_5] : memref<8x1xf32, #tpu.memory_space<vmem>>, vector<8x1xf32>
    %6 = vector.broadcast %5 : vector<8x1xf32> to vector<8x352xf32>
    %7 = arith.mulf %4, %6 : vector<8x352xf32>
    %cst = arith.constant 0.000000e+00 : f32
    %8 = vector.broadcast %cst : f32 to vector<8x352xf32>
    %9 = arith.subf %8, %7 : vector<8x352xf32>
    %10 = math.exp %9 : vector<8x352xf32>
    %cst_6 = arith.constant 1.000000e+00 : f32
    %11 = vector.broadcast %cst_6 : f32 to vector<8x352xf32>
    %12 = arith.addf %11, %10 : vector<8x352xf32>
    %cst_7 = arith.constant 1.000000e+00 : f32
    %13 = vector.broadcast %cst_7 : f32 to vector<8x352xf32>
    %14 = arith.divf %13, %12 : vector<8x352xf32>
    %c0_8 = arith.constant 0 : index
    %c0_9 = arith.constant 0 : index
    %c0_10 = arith.constant 0 : index
    %15 = vector.load %arg2[%c0_8, %c0_9, %c0_10] : memref<1x8x352xf32, #tpu.memory_space<vmem>>, vector<1x8x352xf32>
    %16 = vector.shape_cast %15 : vector<1x8x352xf32> to vector<8x352xf32>
    %17 = arith.mulf %16, %14 : vector<8x352xf32>
    %c0_11 = arith.constant 0 : index
    %c0_12 = arith.constant 0 : index
    %c0_13 = arith.constant 0 : index
    %18 = vector.load %arg5[%c0_11, %c0_12, %c0_13] : memref<1x8x352xf32, #tpu.memory_space<vmem>>, vector<1x8x352xf32>
    %19 = vector.shape_cast %18 : vector<1x8x352xf32> to vector<8x352xf32>
    %20 = vector.shape_cast %17 : vector<8x352xf32> to vector<1x8x352xf32>
    tpu.vector_store %arg5[%c0_11, %c0_12, %c0_13], %20 {strides = array<i32>} : memref<1x8x352xf32, #tpu.memory_space<vmem>>, vector<1x8x352xf32>,
    return
  }
  func.func @transform_0(%arg0: i32) -> (i32, i32, i32) {
    %c0_i32 = arith.constant 0 : i32
    %c0_i32_0 = arith.constant 0 : i32
    %c0_i32_1 = arith.constant 0 : i32
    return %arg0, %c0_i32, %c0_i32_0 : i32, i32, i32
  }
  func.func @transform_1(%arg0: i32) -> (i32, i32, i32) {
    %c0_i32 = arith.constant 0 : i32
    %c0_i32_0 = arith.constant 0 : i32
    %c0_i32_1 = arith.constant 0 : i32
    return %arg0, %c0_i32, %c0_i32_0 : i32, i32, i32
  }
  func.func @transform_2(%arg0: i32) -> (i32, i32) {
    %c0_i32 = arith.constant 0 : i32
    %c0_i32_0 = arith.constant 0 : i32
    %c0_i32_1 = arith.constant 0 : i32
    return %c0_i32, %c0_i32_0 : i32, i32
  }
  func.func @transform_3(%arg0: i32) -> (i32, i32) {
    %c0_i32 = arith.constant 0 : i32
    %c0_i32_0 = arith.constant 0 : i32
    %c0_i32_1 = arith.constant 0 : i32
    return %c0_i32, %c0_i32_0 : i32, i32
  }
  func.func @transform_4(%arg0: i32) -> (i32, i32, i32) {
    %c0_i32 = arith.constant 0 : i32
    %c0_i32_0 = arith.constant 0 : i32
    %c0_i32_1 = arith.constant 0 : i32
    return %arg0, %c0_i32, %c0_i32_0 : i32, i32, i32
  }
}

module attributes {stable_mosaic.version = 11 : i64} {
  func.func @_att_conv1_kernel(%arg0: i32, %arg1: memref<1x8x484xf32, #tpu.memory_space<vmem>>, %arg2: memref<8x8xf32, #tpu.memory_space<vmem>>, %arg3: memref<8x1xf32, #tpu.memory_space<vmem>>, %arg4: memref<8x8xf32, #tpu.memory_space<vmem>>, %arg5: memref<8x1xf32, #tpu.memory_space<vmem>>, %arg6: memref<8x392xf32, #tpu.memory_space<vmem>>, %arg7: memref<8x1xf32, #tpu.memory_space<vmem>>, %arg8: memref<1x352xi32, #tpu.memory_space<vmem>>, %arg9: memref<1x8x352xf32, #tpu.memory_space<vmem>>, %arg10: memref<1x8x484xf32, #tpu.memory_space<vmem>>, %arg11: memref<1x8x2xf32, #tpu.memory_space<vmem>>) attributes {dimension_semantics = [#tpu.dimension_semantics<parallel>], iteration_bounds = array<i64: 2>, scalar_prefetch = 0 : i64, scratch_operands = 0 : i64, tpu.core_type = #tpu.core_type<tc>, window_params = [{transform_indices = @transform_0, window_bounds = array<i64: 1, 8, 484>}, {pipeline_mode = #tpu.pipeline_mode<synchronous>, transform_indices = @transform_1, window_bounds = array<i64: 8, 8>}, {pipeline_mode = #tpu.pipeline_mode<synchronous>, transform_indices = @transform_2, window_bounds = array<i64: 8, 1>}, {pipeline_mode = #tpu.pipeline_mode<synchronous>, transform_indices = @transform_3, window_bounds = array<i64: 8, 8>}, {pipeline_mode = #tpu.pipeline_mode<synchronous>, transform_indices = @transform_4, window_bounds = array<i64: 8, 1>}, {pipeline_mode = #tpu.pipeline_mode<synchronous>, transform_indices = @transform_5, window_bounds = array<i64: 8, 392>}, {pipeline_mode = #tpu.pipeline_mode<synchronous>, transform_indices = @transform_6, window_bounds = array<i64: 8, 1>}, {pipeline_mode = #tpu.pipeline_mode<synchronous>, transform_indices = @transform_7, window_bounds = array<i64: 1, 352>}, {transform_indices = @transform_8, window_bounds = array<i64: 1, 8, 352>}, {transform_indices = @transform_9, window_bounds = array<i64: 1, 8, 484>}, {transform_indices = @transform_10, window_bounds = array<i64: 1, 8, 2>}]} {
    %c0 = arith.constant 0 : index
    %c0_0 = arith.constant 0 : index
    %c0_1 = arith.constant 0 : index
    %0 = vector.load %arg1[%c0, %c0_0, %c0_1] : memref<1x8x484xf32, #tpu.memory_space<vmem>>, vector<1x8x484xf32>
    %1 = vector.shape_cast %0 : vector<1x8x484xf32> to vector<8x484xf32>
    %c0_2 = arith.constant 0 : index
    %c0_3 = arith.constant 0 : index
    %2 = vector.load %arg2[%c0_2, %c0_3] : memref<8x8xf32, #tpu.memory_space<vmem>>, vector<8x8xf32>
    %cst = arith.constant dense<0.000000e+00> : vector<8x484xf32>
    %3 = tpu.matmul %2, %1, %cst {dimension_numbers = #tpu.dot_dimension_numbers<[1], [0], [0], [1], [0, 0, 1, 1], [], []>} : vector<8x8xf32>, vector<8x484xf32>, vector<8x484xf32> -> vector<8x484xf32>
    %c0_4 = arith.constant 0 : index
    %c0_5 = arith.constant 0 : index
    %4 = vector.load %arg3[%c0_4, %c0_5] : memref<8x1xf32, #tpu.memory_space<vmem>>, vector<8x1xf32>
    %5 = vector.broadcast %4 : vector<8x1xf32> to vector<8x484xf32>
    %6 = arith.addf %3, %5 : vector<8x484xf32>
    %cst_6 = arith.constant 0.000000e+00 : f32
    %7 = vector.broadcast %cst_6 : f32 to vector<8x484xf32>
    %8 = arith.maximumf %6, %7 : vector<8x484xf32>
    %c0_7 = arith.constant 0 : index
    %c0_8 = arith.constant 0 : index
    %9 = vector.load %arg4[%c0_7, %c0_8] : memref<8x8xf32, #tpu.memory_space<vmem>>, vector<8x8xf32>
    %cst_9 = arith.constant dense<0.000000e+00> : vector<8x484xf32>
    %10 = tpu.matmul %9, %8, %cst_9 {dimension_numbers = #tpu.dot_dimension_numbers<[1], [0], [0], [1], [0, 0, 1, 1], [], []>} : vector<8x8xf32>, vector<8x484xf32>, vector<8x484xf32> -> vector<8x484xf32>
    %c0_10 = arith.constant 0 : index
    %c0_11 = arith.constant 0 : index
    %11 = vector.load %arg5[%c0_10, %c0_11] : memref<8x1xf32, #tpu.memory_space<vmem>>, vector<8x1xf32>
    %12 = vector.broadcast %11 : vector<8x1xf32> to vector<8x484xf32>
    %13 = arith.addf %10, %12 : vector<8x484xf32>
    %14 = arith.mulf %1, %13 : vector<8x484xf32>
    %15 = vector.extract_strided_slice %14 {offsets = [0, 69], sizes = [8, 352], strides = [1, 1]} : vector<8x484xf32> to vector<8x352xf32>
    %c0_12 = arith.constant 0 : index
    %c0_13 = arith.constant 0 : index
    %c0_14 = arith.constant 0 : index
    %16 = vector.load %arg9[%c0_12, %c0_13, %c0_14] : memref<1x8x352xf32, #tpu.memory_space<vmem>>, vector<1x8x352xf32>
    %17 = vector.shape_cast %16 : vector<1x8x352xf32> to vector<8x352xf32>
    %18 = vector.shape_cast %15 : vector<8x352xf32> to vector<1x8x352xf32>
    tpu.vector_store %arg9[%c0_12, %c0_13, %c0_14], %18 {strides = array<i32>} : memref<1x8x352xf32, #tpu.memory_space<vmem>>, vector<1x8x352xf32>,
    %c0_15 = arith.constant 0 : index
    %c0_16 = arith.constant 0 : index
    %19 = vector.load %arg6[%c0_15, %c0_16] : memref<8x392xf32, #tpu.memory_space<vmem>>, vector<8x392xf32>
    %c0_17 = arith.constant 0 : index
    %c0_18 = arith.constant 0 : index
    %20 = vector.load %arg7[%c0_17, %c0_18] : memref<8x1xf32, #tpu.memory_space<vmem>>, vector<8x1xf32>
    %cst_19 = arith.constant 0.000000e+00 : f32
    %21 = vector.broadcast %cst_19 : f32 to vector<8x8xf32>
    %22 = tpu.concatenate %14, %21 in 1 : vector<8x484xf32>, vector<8x8xf32> -> vector<8x492xf32>
    %23 = vector.extract_strided_slice %22 {offsets = [0, 0], sizes = [8, 352], strides = [1, 1]} : vector<8x492xf32> to vector<8x352xf32>
    %24 = vector.extract_strided_slice %22 {offsets = [0, 1], sizes = [8, 352], strides = [1, 1]} : vector<8x492xf32> to vector<8x352xf32>
    %25 = vector.extract_strided_slice %22 {offsets = [0, 2], sizes = [8, 352], strides = [1, 1]} : vector<8x492xf32> to vector<8x352xf32>
    %26 = vector.extract_strided_slice %22 {offsets = [0, 3], sizes = [8, 352], strides = [1, 1]} : vector<8x492xf32> to vector<8x352xf32>
    %27 = vector.extract_strided_slice %22 {offsets = [0, 4], sizes = [8, 352], strides = [1, 1]} : vector<8x492xf32> to vector<8x352xf32>
    %28 = vector.extract_strided_slice %22 {offsets = [0, 5], sizes = [8, 352], strides = [1, 1]} : vector<8x492xf32> to vector<8x352xf32>
    %29 = vector.extract_strided_slice %22 {offsets = [0, 6], sizes = [8, 352], strides = [1, 1]} : vector<8x492xf32> to vector<8x352xf32>
    %30 = vector.extract_strided_slice %22 {offsets = [0, 22], sizes = [8, 352], strides = [1, 1]} : vector<8x492xf32> to vector<8x352xf32>
    %31 = vector.extract_strided_slice %22 {offsets = [0, 23], sizes = [8, 352], strides = [1, 1]} : vector<8x492xf32> to vector<8x352xf32>
    %32 = vector.extract_strided_slice %22 {offsets = [0, 24], sizes = [8, 352], strides = [1, 1]} : vector<8x492xf32> to vector<8x352xf32>
    %33 = vector.extract_strided_slice %22 {offsets = [0, 25], sizes = [8, 352], strides = [1, 1]} : vector<8x492xf32> to vector<8x352xf32>
    %34 = vector.extract_strided_slice %22 {offsets = [0, 26], sizes = [8, 352], strides = [1, 1]} : vector<8x492xf32> to vector<8x352xf32>
    %35 = vector.extract_strided_slice %22 {offsets = [0, 27], sizes = [8, 352], strides = [1, 1]} : vector<8x492xf32> to vector<8x352xf32>
    %36 = vector.extract_strided_slice %22 {offsets = [0, 28], sizes = [8, 352], strides = [1, 1]} : vector<8x492xf32> to vector<8x352xf32>
    %37 = vector.extract_strided_slice %22 {offsets = [0, 44], sizes = [8, 352], strides = [1, 1]} : vector<8x492xf32> to vector<8x352xf32>
    %38 = vector.extract_strided_slice %22 {offsets = [0, 45], sizes = [8, 352], strides = [1, 1]} : vector<8x492xf32> to vector<8x352xf32>
    %39 = vector.extract_strided_slice %22 {offsets = [0, 46], sizes = [8, 352], strides = [1, 1]} : vector<8x492xf32> to vector<8x352xf32>
    %40 = vector.extract_strided_slice %22 {offsets = [0, 47], sizes = [8, 352], strides = [1, 1]} : vector<8x492xf32> to vector<8x352xf32>
    %41 = vector.extract_strided_slice %22 {offsets = [0, 48], sizes = [8, 352], strides = [1, 1]} : vector<8x492xf32> to vector<8x352xf32>
    %42 = vector.extract_strided_slice %22 {offsets = [0, 49], sizes = [8, 352], strides = [1, 1]} : vector<8x492xf32> to vector<8x352xf32>
    %43 = vector.extract_strided_slice %22 {offsets = [0, 50], sizes = [8, 352], strides = [1, 1]} : vector<8x492xf32> to vector<8x352xf32>
    %44 = vector.extract_strided_slice %22 {offsets = [0, 66], sizes = [8, 352], strides = [1, 1]} : vector<8x492xf32> to vector<8x352xf32>
    %45 = vector.extract_strided_slice %22 {offsets = [0, 67], sizes = [8, 352], strides = [1, 1]} : vector<8x492xf32> to vector<8x352xf32>
    %46 = vector.extract_strided_slice %22 {offsets = [0, 68], sizes = [8, 352], strides = [1, 1]} : vector<8x492xf32> to vector<8x352xf32>
    %47 = vector.extract_strided_slice %22 {offsets = [0, 69], sizes = [8, 352], strides = [1, 1]} : vector<8x492xf32> to vector<8x352xf32>
    %48 = vector.extract_strided_slice %22 {offsets = [0, 70], sizes = [8, 352], strides = [1, 1]} : vector<8x492xf32> to vector<8x352xf32>
    %49 = vector.extract_strided_slice %22 {offsets = [0, 71], sizes = [8, 352], strides = [1, 1]} : vector<8x492xf32> to vector<8x352xf32>
    %50 = vector.extract_strided_slice %22 {offsets = [0, 72], sizes = [8, 352], strides = [1, 1]} : vector<8x492xf32> to vector<8x352xf32>
    %51 = vector.extract_strided_slice %22 {offsets = [0, 88], sizes = [8, 352], strides = [1, 1]} : vector<8x492xf32> to vector<8x352xf32>
    %52 = vector.extract_strided_slice %22 {offsets = [0, 89], sizes = [8, 352], strides = [1, 1]} : vector<8x492xf32> to vector<8x352xf32>
    %53 = vector.extract_strided_slice %22 {offsets = [0, 90], sizes = [8, 352], strides = [1, 1]} : vector<8x492xf32> to vector<8x352xf32>
    %54 = vector.extract_strided_slice %22 {offsets = [0, 91], sizes = [8, 352], strides = [1, 1]} : vector<8x492xf32> to vector<8x352xf32>
    %55 = vector.extract_strided_slice %22 {offsets = [0, 92], sizes = [8, 352], strides = [1, 1]} : vector<8x492xf32> to vector<8x352xf32>
    %56 = vector.extract_strided_slice %22 {offsets = [0, 93], sizes = [8, 352], strides = [1, 1]} : vector<8x492xf32> to vector<8x352xf32>
    %57 = vector.extract_strided_slice %22 {offsets = [0, 94], sizes = [8, 352], strides = [1, 1]} : vector<8x492xf32> to vector<8x352xf32>
    %58 = vector.extract_strided_slice %22 {offsets = [0, 110], sizes = [8, 352], strides = [1, 1]} : vector<8x492xf32> to vector<8x352xf32>
    %59 = vector.extract_strided_slice %22 {offsets = [0, 111], sizes = [8, 352], strides = [1, 1]} : vector<8x492xf32> to vector<8x352xf32>
    %60 = vector.extract_strided_slice %22 {offsets = [0, 112], sizes = [8, 352], strides = [1, 1]} : vector<8x492xf32> to vector<8x352xf32>
    %61 = vector.extract_strided_slice %22 {offsets = [0, 113], sizes = [8, 352], strides = [1, 1]} : vector<8x492xf32> to vector<8x352xf32>
    %62 = vector.extract_strided_slice %22 {offsets = [0, 114], sizes = [8, 352], strides = [1, 1]} : vector<8x492xf32> to vector<8x352xf32>
    %63 = vector.extract_strided_slice %22 {offsets = [0, 115], sizes = [8, 352], strides = [1, 1]} : vector<8x492xf32> to vector<8x352xf32>
    %64 = vector.extract_strided_slice %22 {offsets = [0, 116], sizes = [8, 352], strides = [1, 1]} : vector<8x492xf32> to vector<8x352xf32>
    %65 = vector.extract_strided_slice %22 {offsets = [0, 132], sizes = [8, 352], strides = [1, 1]} : vector<8x492xf32> to vector<8x352xf32>
    %66 = vector.extract_strided_slice %22 {offsets = [0, 133], sizes = [8, 352], strides = [1, 1]} : vector<8x492xf32> to vector<8x352xf32>
    %67 = vector.extract_strided_slice %22 {offsets = [0, 134], sizes = [8, 352], strides = [1, 1]} : vector<8x492xf32> to vector<8x352xf32>
    %68 = vector.extract_strided_slice %22 {offsets = [0, 135], sizes = [8, 352], strides = [1, 1]} : vector<8x492xf32> to vector<8x352xf32>
    %69 = vector.extract_strided_slice %22 {offsets = [0, 136], sizes = [8, 352], strides = [1, 1]} : vector<8x492xf32> to vector<8x352xf32>
    %70 = vector.extract_strided_slice %22 {offsets = [0, 137], sizes = [8, 352], strides = [1, 1]} : vector<8x492xf32> to vector<8x352xf32>
    %71 = vector.extract_strided_slice %22 {offsets = [0, 138], sizes = [8, 352], strides = [1, 1]} : vector<8x492xf32> to vector<8x352xf32>
    %72 = tpu.concatenate %23, %24, %25, %26, %27, %28, %29, %30, %31, %32, %33, %34, %35, %36, %37, %38 in 0 : vector<8x352xf32>, vector<8x352xf32>, vector<8x352xf32>, vector<8x352xf32>, vector<8x352xf32>, vector<8x352xf32>, vector<8x352xf32>, vector<8x352xf32>, vector<8x352xf32>, vector<8x352xf32>, vector<8x352xf32>, vector<8x352xf32>, vector<8x352xf32>, vector<8x352xf32>, vector<8x352xf32>, vector<8x352xf32> -> vector<128x352xf32>
    %73 = tpu.concatenate %39, %40, %41, %42, %43, %44, %45, %46, %47, %48, %49, %50, %51, %52, %53, %54 in 0 : vector<8x352xf32>, vector<8x352xf32>, vector<8x352xf32>, vector<8x352xf32>, vector<8x352xf32>, vector<8x352xf32>, vector<8x352xf32>, vector<8x352xf32>, vector<8x352xf32>, vector<8x352xf32>, vector<8x352xf32>, vector<8x352xf32>, vector<8x352xf32>, vector<8x352xf32>, vector<8x352xf32>, vector<8x352xf32> -> vector<128x352xf32>
    %74 = tpu.concatenate %55, %56, %57, %58, %59, %60, %61, %62, %63, %64, %65, %66, %67, %68, %69, %70 in 0 : vector<8x352xf32>, vector<8x352xf32>, vector<8x352xf32>, vector<8x352xf32>, vector<8x352xf32>, vector<8x352xf32>, vector<8x352xf32>, vector<8x352xf32>, vector<8x352xf32>, vector<8x352xf32>, vector<8x352xf32>, vector<8x352xf32>, vector<8x352xf32>, vector<8x352xf32>, vector<8x352xf32>, vector<8x352xf32> -> vector<128x352xf32>
    %75 = tpu.concatenate %72, %73, %74, %71 in 0 : vector<128x352xf32>, vector<128x352xf32>, vector<128x352xf32>, vector<8x352xf32> -> vector<392x352xf32>
    %cst_20 = arith.constant dense<0.000000e+00> : vector<8x352xf32>
    %76 = tpu.matmul %19, %75, %cst_20 {dimension_numbers = #tpu.dot_dimension_numbers<[1], [0], [0], [1], [0, 0, 1, 1], [], []>} : vector<8x392xf32>, vector<392x352xf32>, vector<8x352xf32> -> vector<8x352xf32>
    %77 = vector.broadcast %20 : vector<8x1xf32> to vector<8x352xf32>
    %78 = arith.addf %76, %77 : vector<8x352xf32>
    %c0_21 = arith.constant 0 : index
    %c0_22 = arith.constant 0 : index
    %79 = vector.load %arg8[%c0_21, %c0_22] : memref<1x352xi32, #tpu.memory_space<vmem>>, vector<1x352xi32>
    %c16_i32 = arith.constant 16 : i32
    %80 = vector.broadcast %c16_i32 : i32 to vector<1x352xi32>
    %81 = arith.cmpi slt, %79, %80 : vector<1x352xi32>
    %82 = arith.extui %81 : vector<1x352xi1> to vector<1x352xi32>
    %83 = arith.sitofp %82 : vector<1x352xi32> to vector<1x352xf32>
    %84 = vector.broadcast %83 : vector<1x352xf32> to vector<8x352xf32>
    %85 = arith.mulf %78, %84 : vector<8x352xf32>
    %cst_23 = arith.constant dense<0.000000e+00> : vector<8xf32>
    %86 = vector.multi_reduction <add>, %85, %cst_23 [1] : vector<8x352xf32> to vector<8xf32>
    %87 = vector.shape_cast %86 : vector<8xf32> to vector<8x1xf32>
    %88 = arith.mulf %78, %78 : vector<8x352xf32>
    %89 = vector.broadcast %83 : vector<1x352xf32> to vector<8x352xf32>
    %90 = arith.mulf %88, %89 : vector<8x352xf32>
    %cst_24 = arith.constant dense<0.000000e+00> : vector<8xf32>
    %91 = vector.multi_reduction <add>, %90, %cst_24 [1] : vector<8x352xf32> to vector<8xf32>
    %92 = vector.shape_cast %91 : vector<8xf32> to vector<8x1xf32>
    %93 = tpu.concatenate %87, %92 in 1 : vector<8x1xf32>, vector<8x1xf32> -> vector<8x2xf32>
    %c0_25 = arith.constant 0 : index
    %c0_26 = arith.constant 0 : index
    %c0_27 = arith.constant 0 : index
    %94 = vector.load %arg11[%c0_25, %c0_26, %c0_27] : memref<1x8x2xf32, #tpu.memory_space<vmem>>, vector<1x8x2xf32>
    %95 = vector.shape_cast %94 : vector<1x8x2xf32> to vector<8x2xf32>
    %96 = vector.shape_cast %93 : vector<8x2xf32> to vector<1x8x2xf32>
    tpu.vector_store %arg11[%c0_25, %c0_26, %c0_27], %96 {strides = array<i32>} : memref<1x8x2xf32, #tpu.memory_space<vmem>>, vector<1x8x2xf32>,
    %97 = vector.extract_strided_slice %78 {offsets = [0, 349], sizes = [8, 3], strides = [1, 1]} : vector<8x352xf32> to vector<8x3xf32>
    %98 = vector.extract_strided_slice %78 {offsets = [0, 0], sizes = [8, 349], strides = [1, 1]} : vector<8x352xf32> to vector<8x349xf32>
    %99 = tpu.concatenate %97, %98 in 1 : vector<8x3xf32>, vector<8x349xf32> -> vector<8x352xf32>
    %c0_i32 = arith.constant 0 : i32
    %100 = vector.broadcast %c0_i32 : i32 to vector<1x352xi32>
    %101 = arith.cmpi eq, %79, %100 : vector<1x352xi32>
    %102 = vector.shape_cast %101 : vector<1x352xi1> to vector<1x352xi1>
    %103 = vector.broadcast %102 : vector<1x352xi1> to vector<8x352xi1>
    %104 = arith.select %103, %78, %99 : vector<8x352xi1>, vector<8x352xf32>
    %c1_i32 = arith.constant 1 : i32
    %105 = vector.broadcast %c1_i32 : i32 to vector<1x352xi32>
    %106 = arith.cmpi eq, %79, %105 : vector<1x352xi32>
    %107 = vector.extract_strided_slice %78 {offsets = [0, 351], sizes = [8, 1], strides = [1, 1]} : vector<8x352xf32> to vector<8x1xf32>
    %108 = vector.extract_strided_slice %78 {offsets = [0, 0], sizes = [8, 351], strides = [1, 1]} : vector<8x352xf32> to vector<8x351xf32>
    %109 = tpu.concatenate %107, %108 in 1 : vector<8x1xf32>, vector<8x351xf32> -> vector<8x352xf32>
    %110 = vector.shape_cast %106 : vector<1x352xi1> to vector<1x352xi1>
    %111 = vector.broadcast %110 : vector<1x352xi1> to vector<8x352xi1>
    %112 = arith.select %111, %109, %104 : vector<8x352xi1>, vector<8x352xf32>
    %c2_i32 = arith.constant 2 : i32
    %113 = vector.broadcast %c2_i32 : i32 to vector<1x352xi32>
    %114 = arith.cmpi eq, %79, %113 : vector<1x352xi32>
    %115 = vector.extract_strided_slice %78 {offsets = [0, 350], sizes = [8, 2], strides = [1, 1]} : vector<8x352xf32> to vector<8x2xf32>
    %116 = vector.extract_strided_slice %78 {offsets = [0, 0], sizes = [8, 350], strides = [1, 1]} : vector<8x352xf32> to vector<8x350xf32>
    %117 = tpu.concatenate %115, %116 in 1 : vector<8x2xf32>, vector<8x350xf32> -> vector<8x352xf32>
    %118 = vector.shape_cast %114 : vector<1x352xi1> to vector<1x352xi1>
    %119 = vector.broadcast %118 : vector<1x352xi1> to vector<8x352xi1>
    %120 = arith.select %119, %117, %112 : vector<8x352xi1>, vector<8x352xf32>
    %c19_i32 = arith.constant 19 : i32
    %121 = vector.broadcast %c19_i32 : i32 to vector<1x352xi32>
    %122 = arith.cmpi eq, %79, %121 : vector<1x352xi32>
    %123 = vector.extract_strided_slice %78 {offsets = [0, 348], sizes = [8, 4], strides = [1, 1]} : vector<8x352xf32> to vector<8x4xf32>
    %124 = vector.extract_strided_slice %78 {offsets = [0, 0], sizes = [8, 348], strides = [1, 1]} : vector<8x352xf32> to vector<8x348xf32>
    %125 = tpu.concatenate %123, %124 in 1 : vector<8x4xf32>, vector<8x348xf32> -> vector<8x352xf32>
    %126 = vector.shape_cast %122 : vector<1x352xi1> to vector<1x352xi1>
    %127 = vector.broadcast %126 : vector<1x352xi1> to vector<8x352xi1>
    %128 = arith.select %127, %125, %120 : vector<8x352xi1>, vector<8x352xf32>
    %c20_i32 = arith.constant 20 : i32
    %129 = vector.broadcast %c20_i32 : i32 to vector<1x352xi32>
    %130 = arith.cmpi eq, %79, %129 : vector<1x352xi32>
    %131 = vector.extract_strided_slice %78 {offsets = [0, 347], sizes = [8, 5], strides = [1, 1]} : vector<8x352xf32> to vector<8x5xf32>
    %132 = vector.extract_strided_slice %78 {offsets = [0, 0], sizes = [8, 347], strides = [1, 1]} : vector<8x352xf32> to vector<8x347xf32>
    %133 = tpu.concatenate %131, %132 in 1 : vector<8x5xf32>, vector<8x347xf32> -> vector<8x352xf32>
    %134 = vector.shape_cast %130 : vector<1x352xi1> to vector<1x352xi1>
    %135 = vector.broadcast %134 : vector<1x352xi1> to vector<8x352xi1>
    %136 = arith.select %135, %133, %128 : vector<8x352xi1>, vector<8x352xf32>
    %c21_i32 = arith.constant 21 : i32
    %137 = vector.broadcast %c21_i32 : i32 to vector<1x352xi32>
    %138 = arith.cmpi eq, %79, %137 : vector<1x352xi32>
    %139 = vector.extract_strided_slice %78 {offsets = [0, 346], sizes = [8, 6], strides = [1, 1]} : vector<8x352xf32> to vector<8x6xf32>
    %140 = vector.extract_strided_slice %78 {offsets = [0, 0], sizes = [8, 346], strides = [1, 1]} : vector<8x352xf32> to vector<8x346xf32>
    %141 = tpu.concatenate %139, %140 in 1 : vector<8x6xf32>, vector<8x346xf32> -> vector<8x352xf32>
    %142 = vector.shape_cast %138 : vector<1x352xi1> to vector<1x352xi1>
    %143 = vector.broadcast %142 : vector<1x352xi1> to vector<8x352xi1>
    %144 = arith.select %143, %141, %136 : vector<8x352xi1>, vector<8x352xf32>
    %145 = vector.extract_strided_slice %144 {offsets = [0, 0], sizes = [8, 22], strides = [1, 1]} : vector<8x352xf32> to vector<8x22xf32>
    %146 = vector.extract_strided_slice %144 {offsets = [0, 330], sizes = [8, 22], strides = [1, 1]} : vector<8x352xf32> to vector<8x22xf32>
    %147 = tpu.concatenate %145, %145, %145, %144, %146, %146, %146 in 1 : vector<8x22xf32>, vector<8x22xf32>, vector<8x22xf32>, vector<8x352xf32>, vector<8x22xf32>, vector<8x22xf32>, vector<8x22xf32> -> vector<8x484xf32>
    %c0_28 = arith.constant 0 : index
    %c0_29 = arith.constant 0 : index
    %c0_30 = arith.constant 0 : index
    %148 = vector.load %arg10[%c0_28, %c0_29, %c0_30] : memref<1x8x484xf32, #tpu.memory_space<vmem>>, vector<1x8x484xf32>
    %149 = vector.shape_cast %148 : vector<1x8x484xf32> to vector<8x484xf32>
    %150 = vector.shape_cast %147 : vector<8x484xf32> to vector<1x8x484xf32>
    tpu.vector_store %arg10[%c0_28, %c0_29, %c0_30], %150 {strides = array<i32>} : memref<1x8x484xf32, #tpu.memory_space<vmem>>, vector<1x8x484xf32>,
    return
  }
  func.func @transform_0(%arg0: i32) -> (i32, i32, i32) {
    %c0_i32 = arith.constant 0 : i32
    %c0_i32_0 = arith.constant 0 : i32
    %c0_i32_1 = arith.constant 0 : i32
    return %arg0, %c0_i32, %c0_i32_0 : i32, i32, i32
  }
  func.func @transform_1(%arg0: i32) -> (i32, i32) {
    %c0_i32 = arith.constant 0 : i32
    %c0_i32_0 = arith.constant 0 : i32
    %c0_i32_1 = arith.constant 0 : i32
    return %c0_i32, %c0_i32_0 : i32, i32
  }
  func.func @transform_2(%arg0: i32) -> (i32, i32) {
    %c0_i32 = arith.constant 0 : i32
    %c0_i32_0 = arith.constant 0 : i32
    %c0_i32_1 = arith.constant 0 : i32
    return %c0_i32, %c0_i32_0 : i32, i32
  }
  func.func @transform_3(%arg0: i32) -> (i32, i32) {
    %c0_i32 = arith.constant 0 : i32
    %c0_i32_0 = arith.constant 0 : i32
    %c0_i32_1 = arith.constant 0 : i32
    return %c0_i32, %c0_i32_0 : i32, i32
  }
  func.func @transform_4(%arg0: i32) -> (i32, i32) {
    %c0_i32 = arith.constant 0 : i32
    %c0_i32_0 = arith.constant 0 : i32
    %c0_i32_1 = arith.constant 0 : i32
    return %c0_i32, %c0_i32_0 : i32, i32
  }
  func.func @transform_5(%arg0: i32) -> (i32, i32) {
    %c0_i32 = arith.constant 0 : i32
    %c0_i32_0 = arith.constant 0 : i32
    %c0_i32_1 = arith.constant 0 : i32
    return %c0_i32, %c0_i32_0 : i32, i32
  }
  func.func @transform_6(%arg0: i32) -> (i32, i32) {
    %c0_i32 = arith.constant 0 : i32
    %c0_i32_0 = arith.constant 0 : i32
    %c0_i32_1 = arith.constant 0 : i32
    return %c0_i32, %c0_i32_0 : i32, i32
  }
  func.func @transform_7(%arg0: i32) -> (i32, i32) {
    %c0_i32 = arith.constant 0 : i32
    %c0_i32_0 = arith.constant 0 : i32
    %c0_i32_1 = arith.constant 0 : i32
    return %c0_i32, %c0_i32_0 : i32, i32
  }
  func.func @transform_8(%arg0: i32) -> (i32, i32, i32) {
    %c0_i32 = arith.constant 0 : i32
    %c0_i32_0 = arith.constant 0 : i32
    %c0_i32_1 = arith.constant 0 : i32
    return %arg0, %c0_i32, %c0_i32_0 : i32, i32, i32
  }
  func.func @transform_9(%arg0: i32) -> (i32, i32, i32) {
    %c0_i32 = arith.constant 0 : i32
    %c0_i32_0 = arith.constant 0 : i32
    %c0_i32_1 = arith.constant 0 : i32
    return %arg0, %c0_i32, %c0_i32_0 : i32, i32, i32
  }
  func.func @transform_10(%arg0: i32) -> (i32, i32, i32) {
    %c0_i32 = arith.constant 0 : i32
    %c0_i32_0 = arith.constant 0 : i32
    %c0_i32_1 = arith.constant 0 : i32
    return %arg0, %c0_i32, %c0_i32_0 : i32, i32, i32
  }
}

module attributes {stable_mosaic.version = 11 : i64} {
  func.func @_bn_relu_conv2_kernel(%arg0: i32, %arg1: memref<1x8x484xf32, #tpu.memory_space<vmem>>, %arg2: memref<8x1xf32, #tpu.memory_space<vmem>>, %arg3: memref<8x1xf32, #tpu.memory_space<vmem>>, %arg4: memref<8x392xf32, #tpu.memory_space<vmem>>, %arg5: memref<8x1xf32, #tpu.memory_space<vmem>>, %arg6: memref<1x352xi32, #tpu.memory_space<vmem>>, %arg7: memref<1x8x352xf32, #tpu.memory_space<vmem>>, %arg8: memref<1x8x2xf32, #tpu.memory_space<vmem>>) attributes {dimension_semantics = [#tpu.dimension_semantics<parallel>], iteration_bounds = array<i64: 2>, scalar_prefetch = 0 : i64, scratch_operands = 0 : i64, tpu.core_type = #tpu.core_type<tc>, window_params = [{transform_indices = @transform_0, window_bounds = array<i64: 1, 8, 484>}, {pipeline_mode = #tpu.pipeline_mode<synchronous>, transform_indices = @transform_1, window_bounds = array<i64: 8, 1>}, {pipeline_mode = #tpu.pipeline_mode<synchronous>, transform_indices = @transform_2, window_bounds = array<i64: 8, 1>}, {pipeline_mode = #tpu.pipeline_mode<synchronous>, transform_indices = @transform_3, window_bounds = array<i64: 8, 392>}, {pipeline_mode = #tpu.pipeline_mode<synchronous>, transform_indices = @transform_4, window_bounds = array<i64: 8, 1>}, {pipeline_mode = #tpu.pipeline_mode<synchronous>, transform_indices = @transform_5, window_bounds = array<i64: 1, 352>}, {transform_indices = @transform_6, window_bounds = array<i64: 1, 8, 352>}, {transform_indices = @transform_7, window_bounds = array<i64: 1, 8, 2>}]} {
    %c0 = arith.constant 0 : index
    %c0_0 = arith.constant 0 : index
    %c0_1 = arith.constant 0 : index
    %0 = vector.load %arg1[%c0, %c0_0, %c0_1] : memref<1x8x484xf32, #tpu.memory_space<vmem>>, vector<1x8x484xf32>
    %1 = vector.shape_cast %0 : vector<1x8x484xf32> to vector<8x484xf32>
    %c0_2 = arith.constant 0 : index
    %c0_3 = arith.constant 0 : index
    %2 = vector.load %arg2[%c0_2, %c0_3] : memref<8x1xf32, #tpu.memory_space<vmem>>, vector<8x1xf32>
    %3 = vector.broadcast %2 : vector<8x1xf32> to vector<8x484xf32>
    %4 = arith.subf %1, %3 : vector<8x484xf32>
    %c0_4 = arith.constant 0 : index
    %c0_5 = arith.constant 0 : index
    %5 = vector.load %arg3[%c0_4, %c0_5] : memref<8x1xf32, #tpu.memory_space<vmem>>, vector<8x1xf32>
    %6 = vector.broadcast %5 : vector<8x1xf32> to vector<8x484xf32>
    %7 = arith.mulf %4, %6 : vector<8x484xf32>
    %cst = arith.constant 0.000000e+00 : f32
    %8 = vector.broadcast %cst : f32 to vector<8x484xf32>
    %9 = arith.maximumf %7, %8 : vector<8x484xf32>
    %c0_6 = arith.constant 0 : index
    %c0_7 = arith.constant 0 : index
    %10 = vector.load %arg4[%c0_6, %c0_7] : memref<8x392xf32, #tpu.memory_space<vmem>>, vector<8x392xf32>
    %c0_8 = arith.constant 0 : index
    %c0_9 = arith.constant 0 : index
    %11 = vector.load %arg5[%c0_8, %c0_9] : memref<8x1xf32, #tpu.memory_space<vmem>>, vector<8x1xf32>
    %cst_10 = arith.constant 0.000000e+00 : f32
    %12 = vector.broadcast %cst_10 : f32 to vector<8x8xf32>
    %13 = tpu.concatenate %9, %12 in 1 : vector<8x484xf32>, vector<8x8xf32> -> vector<8x492xf32>
    %14 = vector.extract_strided_slice %13 {offsets = [0, 0], sizes = [8, 352], strides = [1, 1]} : vector<8x492xf32> to vector<8x352xf32>
    %15 = vector.extract_strided_slice %13 {offsets = [0, 1], sizes = [8, 352], strides = [1, 1]} : vector<8x492xf32> to vector<8x352xf32>
    %16 = vector.extract_strided_slice %13 {offsets = [0, 2], sizes = [8, 352], strides = [1, 1]} : vector<8x492xf32> to vector<8x352xf32>
    %17 = vector.extract_strided_slice %13 {offsets = [0, 3], sizes = [8, 352], strides = [1, 1]} : vector<8x492xf32> to vector<8x352xf32>
    %18 = vector.extract_strided_slice %13 {offsets = [0, 4], sizes = [8, 352], strides = [1, 1]} : vector<8x492xf32> to vector<8x352xf32>
    %19 = vector.extract_strided_slice %13 {offsets = [0, 5], sizes = [8, 352], strides = [1, 1]} : vector<8x492xf32> to vector<8x352xf32>
    %20 = vector.extract_strided_slice %13 {offsets = [0, 6], sizes = [8, 352], strides = [1, 1]} : vector<8x492xf32> to vector<8x352xf32>
    %21 = vector.extract_strided_slice %13 {offsets = [0, 22], sizes = [8, 352], strides = [1, 1]} : vector<8x492xf32> to vector<8x352xf32>
    %22 = vector.extract_strided_slice %13 {offsets = [0, 23], sizes = [8, 352], strides = [1, 1]} : vector<8x492xf32> to vector<8x352xf32>
    %23 = vector.extract_strided_slice %13 {offsets = [0, 24], sizes = [8, 352], strides = [1, 1]} : vector<8x492xf32> to vector<8x352xf32>
    %24 = vector.extract_strided_slice %13 {offsets = [0, 25], sizes = [8, 352], strides = [1, 1]} : vector<8x492xf32> to vector<8x352xf32>
    %25 = vector.extract_strided_slice %13 {offsets = [0, 26], sizes = [8, 352], strides = [1, 1]} : vector<8x492xf32> to vector<8x352xf32>
    %26 = vector.extract_strided_slice %13 {offsets = [0, 27], sizes = [8, 352], strides = [1, 1]} : vector<8x492xf32> to vector<8x352xf32>
    %27 = vector.extract_strided_slice %13 {offsets = [0, 28], sizes = [8, 352], strides = [1, 1]} : vector<8x492xf32> to vector<8x352xf32>
    %28 = vector.extract_strided_slice %13 {offsets = [0, 44], sizes = [8, 352], strides = [1, 1]} : vector<8x492xf32> to vector<8x352xf32>
    %29 = vector.extract_strided_slice %13 {offsets = [0, 45], sizes = [8, 352], strides = [1, 1]} : vector<8x492xf32> to vector<8x352xf32>
    %30 = vector.extract_strided_slice %13 {offsets = [0, 46], sizes = [8, 352], strides = [1, 1]} : vector<8x492xf32> to vector<8x352xf32>
    %31 = vector.extract_strided_slice %13 {offsets = [0, 47], sizes = [8, 352], strides = [1, 1]} : vector<8x492xf32> to vector<8x352xf32>
    %32 = vector.extract_strided_slice %13 {offsets = [0, 48], sizes = [8, 352], strides = [1, 1]} : vector<8x492xf32> to vector<8x352xf32>
    %33 = vector.extract_strided_slice %13 {offsets = [0, 49], sizes = [8, 352], strides = [1, 1]} : vector<8x492xf32> to vector<8x352xf32>
    %34 = vector.extract_strided_slice %13 {offsets = [0, 50], sizes = [8, 352], strides = [1, 1]} : vector<8x492xf32> to vector<8x352xf32>
    %35 = vector.extract_strided_slice %13 {offsets = [0, 66], sizes = [8, 352], strides = [1, 1]} : vector<8x492xf32> to vector<8x352xf32>
    %36 = vector.extract_strided_slice %13 {offsets = [0, 67], sizes = [8, 352], strides = [1, 1]} : vector<8x492xf32> to vector<8x352xf32>
    %37 = vector.extract_strided_slice %13 {offsets = [0, 68], sizes = [8, 352], strides = [1, 1]} : vector<8x492xf32> to vector<8x352xf32>
    %38 = vector.extract_strided_slice %13 {offsets = [0, 69], sizes = [8, 352], strides = [1, 1]} : vector<8x492xf32> to vector<8x352xf32>
    %39 = vector.extract_strided_slice %13 {offsets = [0, 70], sizes = [8, 352], strides = [1, 1]} : vector<8x492xf32> to vector<8x352xf32>
    %40 = vector.extract_strided_slice %13 {offsets = [0, 71], sizes = [8, 352], strides = [1, 1]} : vector<8x492xf32> to vector<8x352xf32>
    %41 = vector.extract_strided_slice %13 {offsets = [0, 72], sizes = [8, 352], strides = [1, 1]} : vector<8x492xf32> to vector<8x352xf32>
    %42 = vector.extract_strided_slice %13 {offsets = [0, 88], sizes = [8, 352], strides = [1, 1]} : vector<8x492xf32> to vector<8x352xf32>
    %43 = vector.extract_strided_slice %13 {offsets = [0, 89], sizes = [8, 352], strides = [1, 1]} : vector<8x492xf32> to vector<8x352xf32>
    %44 = vector.extract_strided_slice %13 {offsets = [0, 90], sizes = [8, 352], strides = [1, 1]} : vector<8x492xf32> to vector<8x352xf32>
    %45 = vector.extract_strided_slice %13 {offsets = [0, 91], sizes = [8, 352], strides = [1, 1]} : vector<8x492xf32> to vector<8x352xf32>
    %46 = vector.extract_strided_slice %13 {offsets = [0, 92], sizes = [8, 352], strides = [1, 1]} : vector<8x492xf32> to vector<8x352xf32>
    %47 = vector.extract_strided_slice %13 {offsets = [0, 93], sizes = [8, 352], strides = [1, 1]} : vector<8x492xf32> to vector<8x352xf32>
    %48 = vector.extract_strided_slice %13 {offsets = [0, 94], sizes = [8, 352], strides = [1, 1]} : vector<8x492xf32> to vector<8x352xf32>
    %49 = vector.extract_strided_slice %13 {offsets = [0, 110], sizes = [8, 352], strides = [1, 1]} : vector<8x492xf32> to vector<8x352xf32>
    %50 = vector.extract_strided_slice %13 {offsets = [0, 111], sizes = [8, 352], strides = [1, 1]} : vector<8x492xf32> to vector<8x352xf32>
    %51 = vector.extract_strided_slice %13 {offsets = [0, 112], sizes = [8, 352], strides = [1, 1]} : vector<8x492xf32> to vector<8x352xf32>
    %52 = vector.extract_strided_slice %13 {offsets = [0, 113], sizes = [8, 352], strides = [1, 1]} : vector<8x492xf32> to vector<8x352xf32>
    %53 = vector.extract_strided_slice %13 {offsets = [0, 114], sizes = [8, 352], strides = [1, 1]} : vector<8x492xf32> to vector<8x352xf32>
    %54 = vector.extract_strided_slice %13 {offsets = [0, 115], sizes = [8, 352], strides = [1, 1]} : vector<8x492xf32> to vector<8x352xf32>
    %55 = vector.extract_strided_slice %13 {offsets = [0, 116], sizes = [8, 352], strides = [1, 1]} : vector<8x492xf32> to vector<8x352xf32>
    %56 = vector.extract_strided_slice %13 {offsets = [0, 132], sizes = [8, 352], strides = [1, 1]} : vector<8x492xf32> to vector<8x352xf32>
    %57 = vector.extract_strided_slice %13 {offsets = [0, 133], sizes = [8, 352], strides = [1, 1]} : vector<8x492xf32> to vector<8x352xf32>
    %58 = vector.extract_strided_slice %13 {offsets = [0, 134], sizes = [8, 352], strides = [1, 1]} : vector<8x492xf32> to vector<8x352xf32>
    %59 = vector.extract_strided_slice %13 {offsets = [0, 135], sizes = [8, 352], strides = [1, 1]} : vector<8x492xf32> to vector<8x352xf32>
    %60 = vector.extract_strided_slice %13 {offsets = [0, 136], sizes = [8, 352], strides = [1, 1]} : vector<8x492xf32> to vector<8x352xf32>
    %61 = vector.extract_strided_slice %13 {offsets = [0, 137], sizes = [8, 352], strides = [1, 1]} : vector<8x492xf32> to vector<8x352xf32>
    %62 = vector.extract_strided_slice %13 {offsets = [0, 138], sizes = [8, 352], strides = [1, 1]} : vector<8x492xf32> to vector<8x352xf32>
    %63 = tpu.concatenate %14, %15, %16, %17, %18, %19, %20, %21, %22, %23, %24, %25, %26, %27, %28, %29 in 0 : vector<8x352xf32>, vector<8x352xf32>, vector<8x352xf32>, vector<8x352xf32>, vector<8x352xf32>, vector<8x352xf32>, vector<8x352xf32>, vector<8x352xf32>, vector<8x352xf32>, vector<8x352xf32>, vector<8x352xf32>, vector<8x352xf32>, vector<8x352xf32>, vector<8x352xf32>, vector<8x352xf32>, vector<8x352xf32> -> vector<128x352xf32>
    %64 = tpu.concatenate %30, %31, %32, %33, %34, %35, %36, %37, %38, %39, %40, %41, %42, %43, %44, %45 in 0 : vector<8x352xf32>, vector<8x352xf32>, vector<8x352xf32>, vector<8x352xf32>, vector<8x352xf32>, vector<8x352xf32>, vector<8x352xf32>, vector<8x352xf32>, vector<8x352xf32>, vector<8x352xf32>, vector<8x352xf32>, vector<8x352xf32>, vector<8x352xf32>, vector<8x352xf32>, vector<8x352xf32>, vector<8x352xf32> -> vector<128x352xf32>
    %65 = tpu.concatenate %46, %47, %48, %49, %50, %51, %52, %53, %54, %55, %56, %57, %58, %59, %60, %61 in 0 : vector<8x352xf32>, vector<8x352xf32>, vector<8x352xf32>, vector<8x352xf32>, vector<8x352xf32>, vector<8x352xf32>, vector<8x352xf32>, vector<8x352xf32>, vector<8x352xf32>, vector<8x352xf32>, vector<8x352xf32>, vector<8x352xf32>, vector<8x352xf32>, vector<8x352xf32>, vector<8x352xf32>, vector<8x352xf32> -> vector<128x352xf32>
    %66 = tpu.concatenate %63, %64, %65, %62 in 0 : vector<128x352xf32>, vector<128x352xf32>, vector<128x352xf32>, vector<8x352xf32> -> vector<392x352xf32>
    %cst_11 = arith.constant dense<0.000000e+00> : vector<8x352xf32>
    %67 = tpu.matmul %10, %66, %cst_11 {dimension_numbers = #tpu.dot_dimension_numbers<[1], [0], [0], [1], [0, 0, 1, 1], [], []>} : vector<8x392xf32>, vector<392x352xf32>, vector<8x352xf32> -> vector<8x352xf32>
    %68 = vector.broadcast %11 : vector<8x1xf32> to vector<8x352xf32>
    %69 = arith.addf %67, %68 : vector<8x352xf32>
    %c0_12 = arith.constant 0 : index
    %c0_13 = arith.constant 0 : index
    %70 = vector.load %arg6[%c0_12, %c0_13] : memref<1x352xi32, #tpu.memory_space<vmem>>, vector<1x352xi32>
    %c16_i32 = arith.constant 16 : i32
    %71 = vector.broadcast %c16_i32 : i32 to vector<1x352xi32>
    %72 = arith.cmpi slt, %70, %71 : vector<1x352xi32>
    %73 = arith.extui %72 : vector<1x352xi1> to vector<1x352xi32>
    %74 = arith.sitofp %73 : vector<1x352xi32> to vector<1x352xf32>
    %75 = vector.broadcast %74 : vector<1x352xf32> to vector<8x352xf32>
    %76 = arith.mulf %69, %75 : vector<8x352xf32>
    %cst_14 = arith.constant dense<0.000000e+00> : vector<8xf32>
    %77 = vector.multi_reduction <add>, %76, %cst_14 [1] : vector<8x352xf32> to vector<8xf32>
    %78 = vector.shape_cast %77 : vector<8xf32> to vector<8x1xf32>
    %79 = arith.mulf %69, %69 : vector<8x352xf32>
    %80 = vector.broadcast %74 : vector<1x352xf32> to vector<8x352xf32>
    %81 = arith.mulf %79, %80 : vector<8x352xf32>
    %cst_15 = arith.constant dense<0.000000e+00> : vector<8xf32>
    %82 = vector.multi_reduction <add>, %81, %cst_15 [1] : vector<8x352xf32> to vector<8xf32>
    %83 = vector.shape_cast %82 : vector<8xf32> to vector<8x1xf32>
    %84 = tpu.concatenate %78, %83 in 1 : vector<8x1xf32>, vector<8x1xf32> -> vector<8x2xf32>
    %c0_16 = arith.constant 0 : index
    %c0_17 = arith.constant 0 : index
    %c0_18 = arith.constant 0 : index
    %85 = vector.load %arg8[%c0_16, %c0_17, %c0_18] : memref<1x8x2xf32, #tpu.memory_space<vmem>>, vector<1x8x2xf32>
    %86 = vector.shape_cast %85 : vector<1x8x2xf32> to vector<8x2xf32>
    %87 = vector.shape_cast %84 : vector<8x2xf32> to vector<1x8x2xf32>
    tpu.vector_store %arg8[%c0_16, %c0_17, %c0_18], %87 {strides = array<i32>} : memref<1x8x2xf32, #tpu.memory_space<vmem>>, vector<1x8x2xf32>,
    %c0_19 = arith.constant 0 : index
    %c0_20 = arith.constant 0 : index
    %c0_21 = arith.constant 0 : index
    %88 = vector.load %arg7[%c0_19, %c0_20, %c0_21] : memref<1x8x352xf32, #tpu.memory_space<vmem>>, vector<1x8x352xf32>
    %89 = vector.shape_cast %88 : vector<1x8x352xf32> to vector<8x352xf32>
    %90 = vector.shape_cast %69 : vector<8x352xf32> to vector<1x8x352xf32>
    tpu.vector_store %arg7[%c0_19, %c0_20, %c0_21], %90 {strides = array<i32>} : memref<1x8x352xf32, #tpu.memory_space<vmem>>, vector<1x8x352xf32>,
    return
  }
  func.func @transform_0(%arg0: i32) -> (i32, i32, i32) {
    %c0_i32 = arith.constant 0 : i32
    %c0_i32_0 = arith.constant 0 : i32
    %c0_i32_1 = arith.constant 0 : i32
    return %arg0, %c0_i32, %c0_i32_0 : i32, i32, i32
  }
  func.func @transform_1(%arg0: i32) -> (i32, i32) {
    %c0_i32 = arith.constant 0 : i32
    %c0_i32_0 = arith.constant 0 : i32
    %c0_i32_1 = arith.constant 0 : i32
    return %c0_i32, %c0_i32_0 : i32, i32
  }
  func.func @transform_2(%arg0: i32) -> (i32, i32) {
    %c0_i32 = arith.constant 0 : i32
    %c0_i32_0 = arith.constant 0 : i32
    %c0_i32_1 = arith.constant 0 : i32
    return %c0_i32, %c0_i32_0 : i32, i32
  }
  func.func @transform_3(%arg0: i32) -> (i32, i32) {
    %c0_i32 = arith.constant 0 : i32
    %c0_i32_0 = arith.constant 0 : i32
    %c0_i32_1 = arith.constant 0 : i32
    return %c0_i32, %c0_i32_0 : i32, i32
  }
  func.func @transform_4(%arg0: i32) -> (i32, i32) {
    %c0_i32 = arith.constant 0 : i32
    %c0_i32_0 = arith.constant 0 : i32
    %c0_i32_1 = arith.constant 0 : i32
    return %c0_i32, %c0_i32_0 : i32, i32
  }
  func.func @transform_5(%arg0: i32) -> (i32, i32) {
    %c0_i32 = arith.constant 0 : i32
    %c0_i32_0 = arith.constant 0 : i32
    %c0_i32_1 = arith.constant 0 : i32
    return %c0_i32, %c0_i32_0 : i32, i32
  }
  func.func @transform_6(%arg0: i32) -> (i32, i32, i32) {
    %c0_i32 = arith.constant 0 : i32
    %c0_i32_0 = arith.constant 0 : i32
    %c0_i32_1 = arith.constant 0 : i32
    return %arg0, %c0_i32, %c0_i32_0 : i32, i32, i32
  }
  func.func @transform_7(%arg0: i32) -> (i32, i32, i32) {
    %c0_i32 = arith.constant 0 : i32
    %c0_i32_0 = arith.constant 0 : i32
    %c0_i32_1 = arith.constant 0 : i32
    return %arg0, %c0_i32, %c0_i32_0 : i32, i32, i32
  }
}

</mosaic_0001>

<llo_original>
// kernel: ga_forward.5
$region0: #{ga_forward.5}
  #allocation0 [shape = 'u32[]', space=smem, size = 0x4, offset = 0x4, fixed_abs, tag = 'smem constant byte address 0x4 - core index']
  #allocation1 [shape = 'u32[72,128]{1,0:T(1,128)}', space=vmem, size = 0x9000, scoped, tag = 'internal scratch']
  %s0 = inlined_call_operand.vmem [shape: f32[2,8,352], index: 0, kind: input, shape index: {}]
  %s1 = inlined_call_operand.vmem [shape: f32[2,8,352], index: 1, kind: input, shape index: {}]
  %s2 = inlined_call_operand.vmem [shape: f32[8,1], index: 2, kind: input, shape index: {}]
  %s3 = inlined_call_operand.vmem [shape: f32[8,1], index: 3, kind: input, shape index: {}]
  %s4 = inlined_call_operand.vmem [shape: f32[2,8,352], index: 4, kind: output, shape index: {}]
  %s5 = sld [smem:[#allocation0]]
  $region49: #{ga_forward.5} parent=0
    _
  %s7 = ssub.s32 1, %s5
  %s8 = scalar_select 0, %s7, %s5
  loop: start=0, step=1, limit=4
  $region2: #{ga_forward.5} parent=0 // loop_pre_header
    _
  $region3: #{ga_forward.5} parent=0 // loop_header
    %s10 = sphi 0, %s14
    %p11 = scmp.ge.s32.totalorder %s10, 4
    %s20 = sphi 0, %s22
    %s23 = sphi 0, %s20
    %s24 = sphi 0, %s23
    %s40 = sphi 0, %s24
    %s46 = sphi 0, %s48
    %s49 = sphi 0, %s46
    %s50 = sphi 0, %s49
    %s66 = sphi 0, %s50
    %s70 = sphi 0, %s70
    %s72 = sphi 0, %s70
    %s73 = sphi 0, %s72
    %s87 = sphi 0, %s73
    %s91 = sphi 0, %s91
    %s93 = sphi 0, %s91
    %s94 = sphi 0, %s93
    %s108 = sphi 0, %s94
    %s114 = sphi 0, %s116
    %s117 = sphi 0, %s114
    %s118 = sphi 0, %s117
    %s134 = sphi 0, %s118
  $region4: #{ga_forward.5} parent=0 // loop_header_branch
    %13 = sbr.rel (%p11) target = $region8
  $region5: #{ga_forward.5} parent=0 // loop_body
    %s15 = ssub.s32 %s10, 1
    %s16 = ssub.s32 %s10, 2
    %s17 = sadd.s32 %s10, 1
    %s18 = ssub.s32 %s10, %s17
    %p19 = scmp.eq.s32.totalorder %s18, 0
    %s21 = sadd.s32 %s20, 1
    %s22 = scalar_select %p19, %s20, %s21
    %p25 = pneg %p19
    %p26 = scmp.eq.s32.totalorder %s10, 1
    %p27 = por %p25, %p26
    %p28 = scmp.ne.s32.totalorder %s20, %s23
    %p29 = scmp.eq.s32.totalorder %s10, 0
    %p30 = por %p28, %p29
    %p31 = scmp.ne.s32.totalorder %s20, %s23
    %p32 = scmp.eq.s32.totalorder %s15, 1
    %p33 = por %p31, %p32
    %p34 = scmp.ne.s32.totalorder %s23, %s24
    %p35 = scmp.eq.s32.totalorder %s15, 0
    %p36 = por %p34, %p35
    %p37 = scmp.ne.s32.totalorder %s23, %s24
    %p38 = scmp.eq.s32.totalorder %s16, 1
    %p39 = por %p37, %p38
    %p41 = scmp.ne.s32.totalorder %s24, %s40
    %p42 = scmp.eq.s32.totalorder %s16, 0
    %p43 = por %p41, %p42
    %s44 = ssub.s32 %s10, %s17
    %p45 = scmp.eq.s32.totalorder %s44, 0
    %s47 = sadd.s32 %s46, 1
    %s48 = scalar_select %p45, %s46, %s47
    %p51 = pneg %p45
    %p52 = scmp.eq.s32.totalorder %s10, 1
    %p53 = por %p51, %p52
    %p54 = scmp.ne.s32.totalorder %s46, %s49
    %p55 = scmp.eq.s32.totalorder %s10, 0
    %p56 = por %p54, %p55
    %p57 = scmp.ne.s32.totalorder %s46, %s49
    %p58 = scmp.eq.s32.totalorder %s15, 1
    %p59 = por %p57, %p58
    %p60 = scmp.ne.s32.totalorder %s49, %s50
    %p61 = scmp.eq.s32.totalorder %s15, 0
    %p62 = por %p60, %p61
    %p63 = scmp.ne.s32.totalorder %s49, %s50
    %p64 = scmp.eq.s32.totalorder %s16, 1
    %p65 = por %p63, %p64
    %p67 = scmp.ne.s32.totalorder %s50, %s66
    %p68 = scmp.eq.s32.totalorder %s16, 0
    %p69 = por %p67, %p68
    %s71 = sadd.s32 %s70, 1
    %p74 = scmp.eq.s32.totalorder %s10, 1
    %p75 = scmp.ne.s32.totalorder %s70, %s72
    %p76 = scmp.eq.s32.totalorder %s10, 0
    %p77 = por %p75, %p76
    %p78 = scmp.ne.s32.totalorder %s70, %s72
    %p79 = scmp.eq.s32.totalorder %s15, 1
    %p80 = por %p78, %p79
    %p81 = scmp.ne.s32.totalorder %s72, %s73
    %p82 = scmp.eq.s32.totalorder %s15, 0
    %p83 = por %p81, %p82
    %p84 = scmp.ne.s32.totalorder %s72, %s73
    %p85 = scmp.eq.s32.totalorder %s16, 1
    %p86 = por %p84, %p85
    %p88 = scmp.ne.s32.totalorder %s73, %s87
    %p89 = scmp.eq.s32.totalorder %s16, 0
    %p90 = por %p88, %p89
    %s92 = sadd.s32 %s91, 1
    %p95 = scmp.eq.s32.totalorder %s10, 1
    %p96 = scmp.ne.s32.totalorder %s91, %s93
    %p97 = scmp.eq.s32.totalorder %s10, 0
    %p98 = por %p96, %p97
    %p99 = scmp.ne.s32.totalorder %s91, %s93
    %p100 = scmp.eq.s32.totalorder %s15, 1
    %p101 = por %p99, %p100
    %p102 = scmp.ne.s32.totalorder %s93, %s94
    %p103 = scmp.eq.s32.totalorder %s15, 0
    %p104 = por %p102, %p103
    %p105 = scmp.ne.s32.totalorder %s93, %s94
    %p106 = scmp.eq.s32.totalorder %s16, 1
    %p107 = por %p105, %p106
    %p109 = scmp.ne.s32.totalorder %s94, %s108
    %p110 = scmp.eq.s32.totalorder %s16, 0
    %p111 = por %p109, %p110
    %s112 = ssub.s32 %s10, %s17
    %p113 = scmp.eq.s32.totalorder %s112, 0
    %s115 = sadd.s32 %s114, 1
    %s116 = scalar_select %p113, %s114, %s115
    %p119 = pneg %p113
    %p120 = scmp.eq.s32.totalorder %s10, 1
    %p121 = por %p119, %p120
    %p122 = scmp.ne.s32.totalorder %s114, %s117
    %p123 = scmp.eq.s32.totalorder %s10, 0
    %p124 = por %p122, %p123
    %p125 = scmp.ne.s32.totalorder %s114, %s117
    %p126 = scmp.eq.s32.totalorder %s15, 1
    %p127 = por %p125, %p126
    %p128 = scmp.ne.s32.totalorder %s117, %s118
    %p129 = scmp.eq.s32.totalorder %s15, 0
    %p130 = por %p128, %p129
    %p131 = scmp.ne.s32.totalorder %s117, %s118
    %p132 = scmp.eq.s32.totalorder %s16, 1
    %p133 = por %p131, %p132
    %p135 = scmp.ne.s32.totalorder %s118, %s134
    %p136 = scmp.eq.s32.totalorder %s16, 0
    %p137 = por %p135, %p136
    %p138 = scmp.le.s32.totalorder 1, %s10
    %p139 = scmp.lt.s32.totalorder %s10, 3
    %p140 = pnand %p138, %p139
    %p141 = pneg %p140
    // Predicated region
    $region9: #{ga_forward.5} parent=5 // pred_check
      _
    $region10: #{ga_forward.5} parent=5 // pred_check_branch
      %143 = sbr.rel (%p140) target = $region12
    $region11: #{ga_forward.5} parent=5 // pred_region
      %s144 = ssub.s32 %s10, 1
      // Predicated region
      $region13: #{ga_forward.5} parent=11 // pred_check
        %p145 = pneg %p83
      $region14: #{ga_forward.5} parent=11 // pred_check_branch
        %147 = sbr.rel (%p145) target = $region16
      $region15: #{ga_forward.5} parent=11 // pred_region
        _
      $region16: #{ga_forward.5} parent=11 // pred_fallthru
        _
      // Predicated region
      $region17: #{ga_forward.5} parent=11 // pred_check
        %p148 = pneg %p104
      $region18: #{ga_forward.5} parent=11 // pred_check_branch
        %150 = sbr.rel (%p148) target = $region20
      $region19: #{ga_forward.5} parent=11 // pred_region
        _
      $region20: #{ga_forward.5} parent=11 // pred_fallthru
        _
    $region12: #{ga_forward.5} parent=5 // pred_fallthru
      _
    %p151 = scmp.lt.s32.totalorder %s10, 2
    // Predicated region
    $region21: #{ga_forward.5} parent=5 // pred_check
      %p152 = pneg %p151
    $region22: #{ga_forward.5} parent=5 // pred_check_branch
      %154 = sbr.rel (%p152) target = $region24
    $region23: #{ga_forward.5} parent=5 // pred_region
      // Predicated region
      $region25: #{ga_forward.5} parent=23 // pred_check
        %p155 = pneg %p30
      $region26: #{ga_forward.5} parent=23 // pred_check_branch
        %157 = sbr.rel (%p155) target = $region28
      $region27: #{ga_forward.5} parent=23 // pred_region
        %p158 = scmp.lt.s32.totalorder %s10, 1
        %s159 = scalar_select %p158, %s10, 1
        %s160 = smul.addr %s159, 3
        %s161 = smul.addr %s160, 8
        %s162 = scalar_lea.vmem %s0, %s161
      $region28: #{ga_forward.5} parent=23 // pred_fallthru
        _
      // Predicated region
      $region29: #{ga_forward.5} parent=23 // pred_check
        %p163 = pneg %p56
      $region30: #{ga_forward.5} parent=23 // pred_check_branch
        %165 = sbr.rel (%p163) target = $region32
      $region31: #{ga_forward.5} parent=23 // pred_region
        %p166 = scmp.lt.s32.totalorder %s10, 1
        %s167 = scalar_select %p166, %s10, 1
        %s168 = smul.addr %s167, 3
        %s169 = smul.addr %s168, 8
        %s170 = scalar_lea.vmem %s1, %s169
      $region32: #{ga_forward.5} parent=23 // pred_fallthru
        _
    $region24: #{ga_forward.5} parent=5 // pred_fallthru
      _
    %p171 = scmp.le.s32.totalorder 1, %s10
    %p172 = scmp.lt.s32.totalorder %s10, 3
    %p173 = pnand %p171, %p172
    %p174 = pneg %p173
    // Predicated region
    $region33: #{ga_forward.5} parent=5 // pred_check
      _
    $region34: #{ga_forward.5} parent=5 // pred_check_branch
      %176 = sbr.rel (%p173) target = $region36
    $region35: #{ga_forward.5} parent=5 // pred_region
      %s177 = ssub.s32 %s10, 1
      %p178 = scmp.lt.s32.totalorder %s15, 1
      %s179 = scalar_select %p178, %s15, 1
      %s180 = smul.addr %s179, 3
      %s181 = smul.addr %s180, 8
      %s182 = scalar_lea.vmem %s0, %s181
      %p183 = pneg %p36
      %p184 = pneg %p33
      %p185 = scmp.lt.s32.totalorder %s15, 1
      %s186 = scalar_select %p185, %s15, 1
      %s187 = smul.addr %s186, 3
      %s188 = smul.addr %s187, 8
      %s189 = scalar_lea.vmem %s1, %s188
      %p190 = pneg %p62
      %p191 = pneg %p59
      %p192 = pneg %p83
      %p193 = pneg %p80
      %p194 = pneg %p104
      %p195 = pneg %p101
      %p196 = pneg %p130
      %p197 = pneg %p127
      %p198 = scmp.lt.s32.totalorder %s15, 1
      %s199 = scalar_select %p198, %s15, 1
      %s200 = smul.addr %s199, 3
      %s201 = smul.addr %s200, 8
      %s202 = scalar_lea.vmem %s4, %s201
      %p203 = scmp.lt.s32.totalorder %s15, 1
      %s204 = scalar_select %p203, %s15, 1
      %s205 = smul.addr %s204, 3
      %s206 = smul.addr %s205, 8
      %s207 = scalar_lea.vmem %s0, %s206
      %p208 = scmp.lt.s32.totalorder %s15, 1
      %s209 = scalar_select %p208, %s15, 1
      %s210 = smul.addr %s209, 3
      %s211 = smul.addr %s210, 8
      %s212 = scalar_lea.vmem %s1, %s211
      %p213 = scmp.lt.s32.totalorder %s15, 1
      %s214 = scalar_select %p213, %s15, 1
      %s215 = smul.addr %s214, 3
      %s216 = smul.addr %s215, 8
      %s217 = scalar_lea.vmem %s4, %s216
      %v218 = vld [vmem:[%s207] sm:$0xff]
      %v219 = vld [vmem:[%s207 + $0x8] sm:$0xff]
      %v220 = vld [vmem:[%s207 + $0x10] sm:$0xff]
      %v221 = vld [vmem:[%s2] sm:$0xff]
      %223 = vset.pattern.permute.xlu0 0
      %224 = vperm.xlu0 %223, %v221
      %v225 = vpop.permute.xlu0 %224
      %v227 = vsub.f32 %v218, %v225
      %v228 = vsub.f32 %v219, %v225
      %v229 = vsub.f32 %v220, %v225
      %v230 = vld [vmem:[%s3] sm:$0xff]
      %232 = vset.pattern.permute.xlu0 0
      %233 = vperm.xlu0 %232, %v230
      %v234 = vpop.permute.xlu0 %233
      %v236 = vmul.f32 %v227, %v234
      %v237 = vmul.f32 %v228, %v234
      %v238 = vmul.f32 %v229, %v234
      %v239 = vsub.f32 0.0, %v236
      %v240 = vsub.f32 0.0, %v237
      %v241 = vsub.f32 0.0, %v238
      %v242 = vmul.f32 %v239, 1.442695
      %v243 = vpow.pop %v242
      %v244 = vmul.f32 %v240, 1.442695
      %v245 = vpow.pop %v244
      %v246 = vmul.f32 %v241, 1.442695
      %v247 = vpow.pop %v246
      %v248 = vadd.f32 %v243, 1.0
      %v249 = vadd.f32 %v245, 1.0
      %v250 = vadd.f32 %v247, 1.0
      %v251 = vrcp.pop %v248
      %v252 = vmul.f32 %v248, %v251
      %v253 = vsub.f32 1.0, %v252
      %v254 = vmul.f32 %v251, %v253
      %v255 = vadd.f32 %v251, %v254
      %vm256 = vweird.f32 %v248
      %vm257 = vweird.f32 %v251
      %vm258 = vmor %vm256, %vm257
      %v259 = vsel %vm258, %v251, %v255
      %v260 = vand.u32 2147483647, %v248
      %vm261 = vcmp.eq.f32.partialorder %v260, 8.507059e+37
      %v262 = vand.u32 %v248, 2147483648
      %v263 = vor.u32 1.1754944e-38, %v262
      %v264 = vsel %vm261, %v263, %v259
      %v265 = vmul.f32 1.0, %v264
      %v266 = vrcp.pop %v249
      %v267 = vmul.f32 %v249, %v266
      %v268 = vsub.f32 1.0, %v267
      %v269 = vmul.f32 %v266, %v268
      %v270 = vadd.f32 %v266, %v269
      %vm271 = vweird.f32 %v249
      %vm272 = vweird.f32 %v266
      %vm273 = vmor %vm271, %vm272
      %v274 = vsel %vm273, %v266, %v270
      %v275 = vand.u32 2147483647, %v249
      %vm276 = vcmp.eq.f32.partialorder %v275, 8.507059e+37
      %v277 = vand.u32 %v249, 2147483648
      %v278 = vor.u32 1.1754944e-38, %v277
      %v279 = vsel %vm276, %v278, %v274
      %v280 = vmul.f32 1.0, %v279
      %v281 = vrcp.pop %v250
      %v282 = vmul.f32 %v250, %v281
      %v283 = vsub.f32 1.0, %v282
      %v284 = vmul.f32 %v281, %v283
      %v285 = vadd.f32 %v281, %v284
      %vm286 = vweird.f32 %v250
      %vm287 = vweird.f32 %v281
      %vm288 = vmor %vm286, %vm287
      %v289 = vsel %vm288, %v281, %v285
      %v290 = vand.u32 2147483647, %v250
      %vm291 = vcmp.eq.f32.partialorder %v290, 8.507059e+37
      %v292 = vand.u32 %v250, 2147483648
      %v293 = vor.u32 1.1754944e-38, %v292
      %v294 = vsel %vm291, %v293, %v289
      %v295 = vmul.f32 1.0, %v294
      %v296 = vld [vmem:[%s212] sm:$0xff]
      %v297 = vld [vmem:[%s212 + $0x8] sm:$0xff]
      %v298 = vld [vmem:[%s212 + $0x10] sm:$0xff]
      %v299 = vmul.f32 %v296, %v265
      %v300 = vmul.f32 %v297, %v280
      %v301 = vmul.f32 %v298, %v295
      %302 = vst [vmem:[%s217] sm:$0xff] %v299
      %303 = vst [vmem:[%s217 + $0x8] sm:$0xff] %v300
      %vm304 = vcmask 785408
      %305 = vst.msk [vmem:[%s217 + $0x10] sm:$0xff] %vm304, %v301
      %p306 = scmp.lt.s32.totalorder %s15, 1
      %s307 = scalar_select %p306, %s15, 1
      %s308 = smul.addr %s307, 3
      %s309 = smul.addr %s308, 8
      %s310 = scalar_lea.vmem %s4, %s309
      // Predicated region
      $region37: #{ga_forward.5} parent=35 // pred_check
        %p311 = pneg %p127
      $region38: #{ga_forward.5} parent=35 // pred_check_branch
        %313 = sbr.rel (%p311) target = $region40
      $region39: #{ga_forward.5} parent=35 // pred_region
        _
      $region40: #{ga_forward.5} parent=35 // pred_fallthru
        _
    $region36: #{ga_forward.5} parent=5 // pred_fallthru
      _
    %p314 = scmp.le.s32.totalorder 2, %s10
    // Predicated region
    $region41: #{ga_forward.5} parent=5 // pred_check
      %p315 = pneg %p314
    $region42: #{ga_forward.5} parent=5 // pred_check_branch
      %317 = sbr.rel (%p315) target = $region44
    $region43: #{ga_forward.5} parent=5 // pred_region
      %s318 = ssub.s32 %s10, 2
      // Predicated region
      $region45: #{ga_forward.5} parent=43 // pred_check
        %p319 = pneg %p133
      $region46: #{ga_forward.5} parent=43 // pred_check_branch
        %321 = sbr.rel (%p319) target = $region48
      $region47: #{ga_forward.5} parent=43 // pred_region
        %p322 = scmp.lt.s32.totalorder %s16, 1
        %s323 = scalar_select %p322, %s16, 1
        %s324 = smul.addr %s323, 3
        %s325 = smul.addr %s324, 8
        %s326 = scalar_lea.vmem %s4, %s325
      $region48: #{ga_forward.5} parent=43 // pred_fallthru
        _
    $region44: #{ga_forward.5} parent=5 // pred_fallthru
      _
  $region6: #{ga_forward.5} parent=0 // loop_footer
    %s14 = sadd.s32 1, %s10
  $region7: #{ga_forward.5} parent=0 // loop_footer_branch
    %9 = sbr.rel target = $region3
  $region8: #{ga_forward.5} parent=0 // loop_exit
    _

// kernel: ga_forward.4
$region0: #{ga_forward.4}
  #allocation0 [shape = 'u32[]', space=smem, size = 0x4, offset = 0x4, fixed_abs, tag = 'smem constant byte address 0x4 - core index']
  #allocation1 [shape = 'u32[72,128]{1,0:T(1,128)}', space=vmem, size = 0x9000, scoped, tag = 'internal scratch']
  %s0 = inlined_call_operand.vmem [shape: f32[2,8,484], index: 0, kind: input, shape index: {}]
  %s1 = inlined_call_operand.vmem [shape: f32[8,1], index: 1, kind: input, shape index: {}]
  %s2 = inlined_call_operand.vmem [shape: f32[8,1], index: 2, kind: input, shape index: {}]
  %s3 = inlined_call_operand.vmem [shape: f32[8,392], index: 3, kind: input, shape index: {}]
  %s4 = inlined_call_operand.vmem [shape: f32[8,1], index: 4, kind: input, shape index: {}]
  %s5 = inlined_call_operand.vmem [shape: s32[1,352], index: 5, kind: input, shape index: {}]
  %s6 = inlined_call_operand.vmem [shape: f32[2,8,352], index: 6, kind: output, shape index: {0}]
  %s7 = inlined_call_operand.vmem [shape: f32[2,8,2], index: 7, kind: output, shape index: {1}]
  %8 = xla_tuple %s6, %s7
  %s9 = sld [smem:[#allocation0]]
  $region65: #{ga_forward.4} parent=0
    _
  %s11 = ssub.s32 1, %s9
  %s12 = scalar_select 0, %s11, %s9
  loop: start=0, step=1, limit=4
  $region2: #{ga_forward.4} parent=0 // loop_pre_header
    _
  $region3: #{ga_forward.4} parent=0 // loop_header
    %s14 = sphi 0, %s18
    %p15 = scmp.ge.s32.totalorder %s14, 4
    %s24 = sphi 0, %s26
    %s27 = sphi 0, %s24
    %s28 = sphi 0, %s27
    %s44 = sphi 0, %s28
    %s48 = sphi 0, %s48
    %s50 = sphi 0, %s48
    %s51 = sphi 0, %s50
    %s65 = sphi 0, %s51
    %s69 = sphi 0, %s69
    %s71 = sphi 0, %s69
    %s72 = sphi 0, %s71
    %s86 = sphi 0, %s72
    %s90 = sphi 0, %s90
    %s92 = sphi 0, %s90
    %s93 = sphi 0, %s92
    %s107 = sphi 0, %s93
    %s111 = sphi 0, %s111
    %s113 = sphi 0, %s111
    %s114 = sphi 0, %s113
    %s128 = sphi 0, %s114
    %s132 = sphi 0, %s132
    %s134 = sphi 0, %s132
    %s135 = sphi 0, %s134
    %s149 = sphi 0, %s135
    %s155 = sphi 0, %s157
    %s158 = sphi 0, %s155
    %s159 = sphi 0, %s158
    %s175 = sphi 0, %s159
    %s181 = sphi 0, %s183
    %s184 = sphi 0, %s181
    %s185 = sphi 0, %s184
    %s201 = sphi 0, %s185
  $region4: #{ga_forward.4} parent=0 // loop_header_branch
    %17 = sbr.rel (%p15) target = $region8
  $region5: #{ga_forward.4} parent=0 // loop_body
    %s19 = ssub.s32 %s14, 1
    %s20 = ssub.s32 %s14, 2
    %s21 = sadd.s32 %s14, 1
    %s22 = ssub.s32 %s14, %s21
    %p23 = scmp.eq.s32.totalorder %s22, 0
    %s25 = sadd.s32 %s24, 1
    %s26 = scalar_select %p23, %s24, %s25
    %p29 = pneg %p23
    %p30 = scmp.eq.s32.totalorder %s14, 1
    %p31 = por %p29, %p30
    %p32 = scmp.ne.s32.totalorder %s24, %s27
    %p33 = scmp.eq.s32.totalorder %s14, 0
    %p34 = por %p32, %p33
    %p35 = scmp.ne.s32.totalorder %s24, %s27
    %p36 = scmp.eq.s32.totalorder %s19, 1
    %p37 = por %p35, %p36
    %p38 = scmp.ne.s32.totalorder %s27, %s28
    %p39 = scmp.eq.s32.totalorder %s19, 0
    %p40 = por %p38, %p39
    %p41 = scmp.ne.s32.totalorder %s27, %s28
    %p42 = scmp.eq.s32.totalorder %s20, 1
    %p43 = por %p41, %p42
    %p45 = scmp.ne.s32.totalorder %s28, %s44
    %p46 = scmp.eq.s32.totalorder %s20, 0
    %p47 = por %p45, %p46
    %s49 = sadd.s32 %s48, 1
    %p52 = scmp.eq.s32.totalorder %s14, 1
    %p53 = scmp.ne.s32.totalorder %s48, %s50
    %p54 = scmp.eq.s32.totalorder %s14, 0
    %p55 = por %p53, %p54
    %p56 = scmp.ne.s32.totalorder %s48, %s50
    %p57 = scmp.eq.s32.totalorder %s19, 1
    %p58 = por %p56, %p57
    %p59 = scmp.ne.s32.totalorder %s50, %s51
    %p60 = scmp.eq.s32.totalorder %s19, 0
    %p61 = por %p59, %p60
    %p62 = scmp.ne.s32.totalorder %s50, %s51
    %p63 = scmp.eq.s32.totalorder %s20, 1
    %p64 = por %p62, %p63
    %p66 = scmp.ne.s32.totalorder %s51, %s65
    %p67 = scmp.eq.s32.totalorder %s20, 0
    %p68 = por %p66, %p67
    %s70 = sadd.s32 %s69, 1
    %p73 = scmp.eq.s32.totalorder %s14, 1
    %p74 = scmp.ne.s32.totalorder %s69, %s71
    %p75 = scmp.eq.s32.totalorder %s14, 0
    %p76 = por %p74, %p75
    %p77 = scmp.ne.s32.totalorder %s69, %s71
    %p78 = scmp.eq.s32.totalorder %s19, 1
    %p79 = por %p77, %p78
    %p80 = scmp.ne.s32.totalorder %s71, %s72
    %p81 = scmp.eq.s32.totalorder %s19, 0
    %p82 = por %p80, %p81
    %p83 = scmp.ne.s32.totalorder %s71, %s72
    %p84 = scmp.eq.s32.totalorder %s20, 1
    %p85 = por %p83, %p84
    %p87 = scmp.ne.s32.totalorder %s72, %s86
    %p88 = scmp.eq.s32.totalorder %s20, 0
    %p89 = por %p87, %p88
    %s91 = sadd.s32 %s90, 1
    %p94 = scmp.eq.s32.totalorder %s14, 1
    %p95 = scmp.ne.s32.totalorder %s90, %s92
    %p96 = scmp.eq.s32.totalorder %s14, 0
    %p97 = por %p95, %p96
    %p98 = scmp.ne.s32.totalorder %s90, %s92
    %p99 = scmp.eq.s32.totalorder %s19, 1
    %p100 = por %p98, %p99
    %p101 = scmp.ne.s32.totalorder %s92, %s93
    %p102 = scmp.eq.s32.totalorder %s19, 0
    %p103 = por %p101, %p102
    %p104 = scmp.ne.s32.totalorder %s92, %s93
    %p105 = scmp.eq.s32.totalorder %s20, 1
    %p106 = por %p104, %p105
    %p108 = scmp.ne.s32.totalorder %s93, %s107
    %p109 = scmp.eq.s32.totalorder %s20, 0
    %p110 = por %p108, %p109
    %s112 = sadd.s32 %s111, 1
    %p115 = scmp.eq.s32.totalorder %s14, 1
    %p116 = scmp.ne.s32.totalorder %s111, %s113
    %p117 = scmp.eq.s32.totalorder %s14, 0
    %p118 = por %p116, %p117
    %p119 = scmp.ne.s32.totalorder %s111, %s113
    %p120 = scmp.eq.s32.totalorder %s19, 1
    %p121 = por %p119, %p120
    %p122 = scmp.ne.s32.totalorder %s113, %s114
    %p123 = scmp.eq.s32.totalorder %s19, 0
    %p124 = por %p122, %p123
    %p125 = scmp.ne.s32.totalorder %s113, %s114
    %p126 = scmp.eq.s32.totalorder %s20, 1
    %p127 = por %p125, %p126
    %p129 = scmp.ne.s32.totalorder %s114, %s128
    %p130 = scmp.eq.s32.totalorder %s20, 0
    %p131 = por %p129, %p130
    %s133 = sadd.s32 %s132, 1
    %p136 = scmp.eq.s32.totalorder %s14, 1
    %p137 = scmp.ne.s32.totalorder %s132, %s134
    %p138 = scmp.eq.s32.totalorder %s14, 0
    %p139 = por %p137, %p138
    %p140 = scmp.ne.s32.totalorder %s132, %s134
    %p141 = scmp.eq.s32.totalorder %s19, 1
    %p142 = por %p140, %p141
    %p143 = scmp.ne.s32.totalorder %s134, %s135
    %p144 = scmp.eq.s32.totalorder %s19, 0
    %p145 = por %p143, %p144
    %p146 = scmp.ne.s32.totalorder %s134, %s135
    %p147 = scmp.eq.s32.totalorder %s20, 1
    %p148 = por %p146, %p147
    %p150 = scmp.ne.s32.totalorder %s135, %s149
    %p151 = scmp.eq.s32.totalorder %s20, 0
    %p152 = por %p150, %p151
    %s153 = ssub.s32 %s14, %s21
    %p154 = scmp.eq.s32.totalorder %s153, 0
    %s156 = sadd.s32 %s155, 1
    %s157 = scalar_select %p154, %s155, %s156
    %p160 = pneg %p154
    %p161 = scmp.eq.s32.totalorder %s14, 1
    %p162 = por %p160, %p161
    %p163 = scmp.ne.s32.totalorder %s155, %s158
    %p164 = scmp.eq.s32.totalorder %s14, 0
    %p165 = por %p163, %p164
    %p166 = scmp.ne.s32.totalorder %s155, %s158
    %p167 = scmp.eq.s32.totalorder %s19, 1
    %p168 = por %p166, %p167
    %p169 = scmp.ne.s32.totalorder %s158, %s159
    %p170 = scmp.eq.s32.totalorder %s19, 0
    %p171 = por %p169, %p170
    %p172 = scmp.ne.s32.totalorder %s158, %s159
    %p173 = scmp.eq.s32.totalorder %s20, 1
    %p174 = por %p172, %p173
    %p176 = scmp.ne.s32.totalorder %s159, %s175
    %p177 = scmp.eq.s32.totalorder %s20, 0
    %p178 = por %p176, %p177
    %s179 = ssub.s32 %s14, %s21
    %p180 = scmp.eq.s32.totalorder %s179, 0
    %s182 = sadd.s32 %s181, 1
    %s183 = scalar_select %p180, %s181, %s182
    %p186 = pneg %p180
    %p187 = scmp.eq.s32.totalorder %s14, 1
    %p188 = por %p186, %p187
    %p189 = scmp.ne.s32.totalorder %s181, %s184
    %p190 = scmp.eq.s32.totalorder %s14, 0
    %p191 = por %p189, %p190
    %p192 = scmp.ne.s32.totalorder %s181, %s184
    %p193 = scmp.eq.s32.totalorder %s19, 1
    %p194 = por %p192, %p193
    %p195 = scmp.ne.s32.totalorder %s184, %s185
    %p196 = scmp.eq.s32.totalorder %s19, 0
    %p197 = por %p195, %p196
    %p198 = scmp.ne.s32.totalorder %s184, %s185
    %p199 = scmp.eq.s32.totalorder %s20, 1
    %p200 = por %p198, %p199
    %p202 = scmp.ne.s32.totalorder %s185, %s201
    %p203 = scmp.eq.s32.totalorder %s20, 0
    %p204 = por %p202, %p203
    %p205 = scmp.le.s32.totalorder 1, %s14
    %p206 = scmp.lt.s32.totalorder %s14, 3
    %p207 = pnand %p205, %p206
    %p208 = pneg %p207
    // Predicated region
    $region9: #{ga_forward.4} parent=5 // pred_check
      _
    $region10: #{ga_forward.4} parent=5 // pred_check_branch
      %210 = sbr.rel (%p207) target = $region12
    $region11: #{ga_forward.4} parent=5 // pred_region
      %s211 = ssub.s32 %s14, 1
      // Predicated region
      $region13: #{ga_forward.4} parent=11 // pred_check
        %p212 = pneg %p61
      $region14: #{ga_forward.4} parent=11 // pred_check_branch
        %214 = sbr.rel (%p212) target = $region16
      $region15: #{ga_forward.4} parent=11 // pred_region
        _
      $region16: #{ga_forward.4} parent=11 // pred_fallthru
        _
      // Predicated region
      $region17: #{ga_forward.4} parent=11 // pred_check
        %p215 = pneg %p82
      $region18: #{ga_forward.4} parent=11 // pred_check_branch
        %217 = sbr.rel (%p215) target = $region20
      $region19: #{ga_forward.4} parent=11 // pred_region
        _
      $region20: #{ga_forward.4} parent=11 // pred_fallthru
        _
      // Predicated region
      $region21: #{ga_forward.4} parent=11 // pred_check
        %p218 = pneg %p103
      $region22: #{ga_forward.4} parent=11 // pred_check_branch
        %220 = sbr.rel (%p218) target = $region24
      $region23: #{ga_forward.4} parent=11 // pred_region
        _
      $region24: #{ga_forward.4} parent=11 // pred_fallthru
        _
      // Predicated region
      $region25: #{ga_forward.4} parent=11 // pred_check
        %p221 = pneg %p124
      $region26: #{ga_forward.4} parent=11 // pred_check_branch
        %223 = sbr.rel (%p221) target = $region28
      $region27: #{ga_forward.4} parent=11 // pred_region
        _
      $region28: #{ga_forward.4} parent=11 // pred_fallthru
        _
      // Predicated region
      $region29: #{ga_forward.4} parent=11 // pred_check
        %p224 = pneg %p145
      $region30: #{ga_forward.4} parent=11 // pred_check_branch
        %226 = sbr.rel (%p224) target = $region32
      $region31: #{ga_forward.4} parent=11 // pred_region
        _
      $region32: #{ga_forward.4} parent=11 // pred_fallthru
        _
    $region12: #{ga_forward.4} parent=5 // pred_fallthru
      _
    %p227 = scmp.lt.s32.totalorder %s14, 2
    // Predicated region
    $region33: #{ga_forward.4} parent=5 // pred_check
      %p228 = pneg %p227
    $region34: #{ga_forward.4} parent=5 // pred_check_branch
      %230 = sbr.rel (%p228) target = $region36
    $region35: #{ga_forward.4} parent=5 // pred_region
      // Predicated region
      $region37: #{ga_forward.4} parent=35 // pred_check
        %p231 = pneg %p34
      $region38: #{ga_forward.4} parent=35 // pred_check_branch
        %233 = sbr.rel (%p231) target = $region40
      $region39: #{ga_forward.4} parent=35 // pred_region
        %p234 = scmp.lt.s32.totalorder %s14, 1
        %s235 = scalar_select %p234, %s14, 1
        %s236 = smul.addr %s235, 4
        %s237 = smul.addr %s236, 8
        %s238 = scalar_lea.vmem %s0, %s237
      $region40: #{ga_forward.4} parent=35 // pred_fallthru
        _
    $region36: #{ga_forward.4} parent=5 // pred_fallthru
      _
    %p239 = scmp.le.s32.totalorder 1, %s14
    %p240 = scmp.lt.s32.totalorder %s14, 3
    %p241 = pnand %p239, %p240
    %p242 = pneg %p241
    // Predicated region
    $region41: #{ga_forward.4} parent=5 // pred_check
      _
    $region42: #{ga_forward.4} parent=5 // pred_check_branch
      %244 = sbr.rel (%p241) target = $region44
    $region43: #{ga_forward.4} parent=5 // pred_region
      %s245 = ssub.s32 %s14, 1
      %p246 = scmp.lt.s32.totalorder %s19, 1
      %s247 = scalar_select %p246, %s19, 1
      %s248 = smul.addr %s247, 4
      %s249 = smul.addr %s248, 8
      %s250 = scalar_lea.vmem %s0, %s249
      %p251 = pneg %p40
      %p252 = pneg %p37
      %p253 = pneg %p61
      %p254 = pneg %p58
      %p255 = pneg %p82
      %p256 = pneg %p79
      %p257 = pneg %p103
      %p258 = pneg %p100
      %p259 = pneg %p124
      %p260 = pneg %p121
      %p261 = pneg %p145
      %p262 = pneg %p142
      %p263 = pneg %p171
      %p264 = pneg %p168
      %p265 = scmp.lt.s32.totalorder %s19, 1
      %s266 = scalar_select %p265, %s19, 1
      %s267 = smul.addr %s266, 3
      %s268 = smul.addr %s267, 8
      %s269 = scalar_lea.vmem %s6, %s268
      %p270 = pneg %p197
      %p271 = pneg %p194
      %p272 = scmp.lt.s32.totalorder %s19, 1
      %s273 = scalar_select %p272, %s19, 1
      %s274 = smul.addr %s273, 8
      %s275 = scalar_lea.vmem %s7, %s274
      %p276 = scmp.lt.s32.totalorder %s19, 1
      %s277 = scalar_select %p276, %s19, 1
      %s278 = smul.addr %s277, 4
      %s279 = smul.addr %s278, 8
      %s280 = scalar_lea.vmem %s0, %s279
      %p281 = scmp.lt.s32.totalorder %s19, 1
      %s282 = scalar_select %p281, %s19, 1
      %s283 = smul.addr %s282, 3
      %s284 = smul.addr %s283, 8
      %s285 = scalar_lea.vmem %s6, %s284
      %p286 = scmp.lt.s32.totalorder %s19, 1
      %s287 = scalar_select %p286, %s19, 1
      %s288 = smul.addr %s287, 8
      %s289 = scalar_lea.vmem %s7, %s288
      %v290 = vld [vmem:[%s280] sm:$0xff]
      %v291 = vld [vmem:[%s280 + $0x8] sm:$0xff]
      %v292 = vld [vmem:[%s280 + $0x10] sm:$0xff]
      %v293 = vld [vmem:[%s280 + $0x18] sm:$0xff]
      %v294 = vld [vmem:[%s1] sm:$0xff]
      %296 = vset.pattern.permute.xlu0 0
      %297 = vperm.xlu0 %296, %v294
      %v298 = vpop.permute.xlu0 %297
      %v300 = vsub.f32 %v290, %v298
      %v301 = vsub.f32 %v291, %v298
      %v302 = vsub.f32 %v292, %v298
      %v303 = vsub.f32 %v293, %v298
      %v304 = vld [vmem:[%s2] sm:$0xff]
      %306 = vset.pattern.permute.xlu0 0
      %307 = vperm.xlu0 %306, %v304
      %v308 = vpop.permute.xlu0 %307
      %v310 = vmul.f32 %v300, %v308
      %v311 = vmul.f32 %v301, %v308
      %v312 = vmul.f32 %v302, %v308
      %v313 = vmul.f32 %v303, %v308
      %v314 = vmax.f32 %v310, 0.0
      %v315 = vmax.f32 %v311, 0.0
      %v316 = vmax.f32 %v312, 0.0
      %v317 = vmax.f32 %v313, 0.0
      %v318 = vld [vmem:[%s3] sm:$0xff]
      %v319 = vld [vmem:[%s3 + $0x8] sm:$0xff]
      %v320 = vld [vmem:[%s3 + $0x10] sm:$0xff]
      %v321 = vld [vmem:[%s3 + $0x18] sm:$0xff]
      %v322 = vld [vmem:[%s4] sm:$0xff]
      %vm323 = vcmask 818176
      %v324 = vsel %vm323, %v317, 0.0
      %328 = vrot.lane.b32.xlu0 %v314, 127
      %v329 = vpop.permute.xlu0 %328
      %330 = vrot.lane.b32.xlu0 %v315, 127
      %v331 = vpop.permute.xlu0 %330
      %332 = vrot.lane.b32.xlu0 %v316, 127
      %v333 = vpop.permute.xlu0 %332
      %vm334 = vcmask 1039360
      %v335 = vsel %vm334, %v329, %v331
      %v336 = vsel %vm334, %v331, %v333
      %340 = vrot.lane.b32.xlu0 %v314, 126
      %v341 = vpop.permute.xlu0 %340
      %342 = vrot.lane.b32.xlu0 %v315, 126
      %v343 = vpop.permute.xlu0 %342
      %344 = vrot.lane.b32.xlu0 %v316, 126
      %v345 = vpop.permute.xlu0 %344
      %vm346 = vcmask 1031168
      %v347 = vsel %vm346, %v341, %v343
      %v348 = vsel %vm346, %v343, %v345
      %352 = vrot.lane.b32.xlu0 %v314, 125
      %v353 = vpop.permute.xlu0 %352
      %354 = vrot.lane.b32.xlu0 %v315, 125
      %v355 = vpop.permute.xlu0 %354
      %356 = vrot.lane.b32.xlu0 %v316, 125
      %v357 = vpop.permute.xlu0 %356
      %vm358 = vcmask 1022976
      %v359 = vsel %vm358, %v353, %v355
      %v360 = vsel %vm358, %v355, %v357
      %364 = vrot.lane.b32.xlu0 %v314, 124
      %v365 = vpop.permute.xlu0 %364
      %366 = vrot.lane.b32.xlu0 %v315, 124
      %v367 = vpop.permute.xlu0 %366
      %368 = vrot.lane.b32.xlu0 %v316, 124
      %v369 = vpop.permute.xlu0 %368
      %vm370 = vcmask 1014784
      %v371 = vsel %vm370, %v365, %v367
      %v372 = vsel %vm370, %v367, %v369
      %376 = vrot.lane.b32.xlu0 %v314, 123
      %v377 = vpop.permute.xlu0 %376
      %378 = vrot.lane.b32.xlu0 %v315, 123
      %v379 = vpop.permute.xlu0 %378
      %380 = vrot.lane.b32.xlu0 %v316, 123
      %v381 = vpop.permute.xlu0 %380
      %vm382 = vcmask 1006592
      %v383 = vsel %vm382, %v377, %v379
      %v384 = vsel %vm382, %v379, %v381
      %388 = vrot.lane.b32.xlu0 %v314, 122
      %v389 = vpop.permute.xlu0 %388
      %390 = vrot.lane.b32.xlu0 %v315, 122
      %v391 = vpop.permute.xlu0 %390
      %392 = vrot.lane.b32.xlu0 %v316, 122
      %v393 = vpop.permute.xlu0 %392
      %vm394 = vcmask 998400
      %v395 = vsel %vm394, %v389, %v391
      %v396 = vsel %vm394, %v391, %v393
      %400 = vrot.lane.b32.xlu0 %v314, 106
      %v401 = vpop.permute.xlu0 %400
      %402 = vrot.lane.b32.xlu0 %v315, 106
      %v403 = vpop.permute.xlu0 %402
      %404 = vrot.lane.b32.xlu0 %v316, 106
      %v405 = vpop.permute.xlu0 %404
      %vm406 = vcmask 867328
      %v407 = vsel %vm406, %v401, %v403
      %v408 = vsel %vm406, %v403, %v405
      %412 = vrot.lane.b32.xlu0 %v314, 105
      %v413 = vpop.permute.xlu0 %412
      %414 = vrot.lane.b32.xlu0 %v315, 105
      %v415 = vpop.permute.xlu0 %414
      %416 = vrot.lane.b32.xlu0 %v316, 105
      %v417 = vpop.permute.xlu0 %416
      %vm418 = vcmask 859136
      %v419 = vsel %vm418, %v413, %v415
      %v420 = vsel %vm418, %v415, %v417
      %424 = vrot.lane.b32.xlu0 %v314, 104
      %v425 = vpop.permute.xlu0 %424
      %426 = vrot.lane.b32.xlu0 %v315, 104
      %v427 = vpop.permute.xlu0 %426
      %428 = vrot.lane.b32.xlu0 %v316, 104
      %v429 = vpop.permute.xlu0 %428
      %vm430 = vcmask 850944
      %v431 = vsel %vm430, %v425, %v427
      %v432 = vsel %vm430, %v427, %v429
      %436 = vrot.lane.b32.xlu0 %v314, 103
      %v437 = vpop.permute.xlu0 %436
      %438 = vrot.lane.b32.xlu0 %v315, 103
      %v439 = vpop.permute.xlu0 %438
      %440 = vrot.lane.b32.xlu0 %v316, 103
      %v441 = vpop.permute.xlu0 %440
      %vm442 = vcmask 842752
      %v443 = vsel %vm442, %v437, %v439
      %v444 = vsel %vm442, %v439, %v441
      %448 = vrot.lane.b32.xlu0 %v314, 102
      %v449 = vpop.permute.xlu0 %448
      %450 = vrot.lane.b32.xlu0 %v315, 102
      %v451 = vpop.permute.xlu0 %450
      %452 = vrot.lane.b32.xlu0 %v316, 102
      %v453 = vpop.permute.xlu0 %452
      %vm454 = vcmask 834560
      %v455 = vsel %vm454, %v449, %v451
      %v456 = vsel %vm454, %v451, %v453
      %460 = vrot.lane.b32.xlu0 %v314, 101
      %v461 = vpop.permute.xlu0 %460
      %462 = vrot.lane.b32.xlu0 %v315, 101
      %v463 = vpop.permute.xlu0 %462
      %464 = vrot.lane.b32.xlu0 %v316, 101
      %v465 = vpop.permute.xlu0 %464
      %vm466 = vcmask 826368
      %v467 = vsel %vm466, %v461, %v463
      %v468 = vsel %vm466, %v463, %v465
      %472 = vrot.lane.b32.xlu0 %v314, 100
      %v473 = vpop.permute.xlu0 %472
      %474 = vrot.lane.b32.xlu0 %v315, 100
      %v475 = vpop.permute.xlu0 %474
      %476 = vrot.lane.b32.xlu0 %v316, 100
      %v477 = vpop.permute.xlu0 %476
      %v478 = vsel %vm323, %v473, %v475
      %v479 = vsel %vm323, %v475, %v477
      %484 = vrot.lane.b32.xlu0 %v314, 84
      %v485 = vpop.permute.xlu0 %484
      %486 = vrot.lane.b32.xlu0 %v315, 84
      %v487 = vpop.permute.xlu0 %486
      %488 = vrot.lane.b32.xlu0 %v316, 84
      %v489 = vpop.permute.xlu0 %488
      %490 = vrot.lane.b32.xlu0 %v324, 84
      %v491 = vpop.permute.xlu0 %490
      %vm492 = vcmask 687104
      %v493 = vsel %vm492, %v485, %v487
      %v494 = vsel %vm492, %v487, %v489
      %v495 = vsel %vm492, %v489, %v491
      %499 = vrot.lane.b32.xlu0 %v314, 83
      %v500 = vpop.permute.xlu0 %499
      %501 = vrot.lane.b32.xlu0 %v315, 83
      %v502 = vpop.permute.xlu0 %501
      %503 = vrot.lane.b32.xlu0 %v316, 83
      %v504 = vpop.permute.xlu0 %503
      %505 = vrot.lane.b32.xlu0 %v324, 83
      %v506 = vpop.permute.xlu0 %505
      %vm507 = vcmask 678912
      %v508 = vsel %vm507, %v500, %v502
      %v509 = vsel %vm507, %v502, %v504
      %v510 = vsel %vm507, %v504, %v506
      %514 = vrot.lane.b32.xlu0 %v324, 127
      %v515 = vpop.permute.xlu0 %514
      %v516 = vsel %vm334, %v333, %v515
      %517 = vrot.lane.b32.xlu0 %v324, 126
      %v518 = vpop.permute.xlu0 %517
      %v519 = vsel %vm346, %v345, %v518
      %520 = vrot.lane.b32.xlu0 %v324, 125
      %v521 = vpop.permute.xlu0 %520
      %v522 = vsel %vm358, %v357, %v521
      %523 = vrot.lane.b32.xlu0 %v324, 124
      %v524 = vpop.permute.xlu0 %523
      %v525 = vsel %vm370, %v369, %v524
      %526 = vrot.lane.b32.xlu0 %v314, 108
      %v527 = vpop.permute.xlu0 %526
      %528 = vrot.lane.b32.xlu0 %v315, 108
      %v529 = vpop.permute.xlu0 %528
      %530 = vrot.lane.b32.xlu0 %v316, 108
      %v531 = vpop.permute.xlu0 %530
      %532 = vrot.lane.b32.xlu0 %v324, 108
      %v533 = vpop.permute.xlu0 %532
      %vm534 = vcmask 883712
      %v535 = vsel %vm534, %v527, %v529
      %v536 = vsel %vm534, %v529, %v531
      %v537 = vsel %vm534, %v531, %v533
      %538 = vrot.lane.b32.xlu0 %v314, 107
      %v539 = vpop.permute.xlu0 %538
      %540 = vrot.lane.b32.xlu0 %v315, 107
      %v541 = vpop.permute.xlu0 %540
      %542 = vrot.lane.b32.xlu0 %v316, 107
      %v543 = vpop.permute.xlu0 %542
      %544 = vrot.lane.b32.xlu0 %v324, 107
      %v545 = vpop.permute.xlu0 %544
      %vm546 = vcmask 875520
      %v547 = vsel %vm546, %v539, %v541
      %v548 = vsel %vm546, %v541, %v543
      %v549 = vsel %vm546, %v543, %v545
      %550 = vrot.lane.b32.xlu0 %v324, 106
      %v551 = vpop.permute.xlu0 %550
      %v552 = vsel %vm406, %v405, %v551
      %553 = vrot.lane.b32.xlu0 %v324, 105
      %v554 = vpop.permute.xlu0 %553
      %v555 = vsel %vm418, %v417, %v554
      %556 = vrot.lane.b32.xlu0 %v324, 104
      %v557 = vpop.permute.xlu0 %556
      %v558 = vsel %vm430, %v429, %v557
      %559 = vrot.lane.b32.xlu0 %v324, 103
      %v560 = vpop.permute.xlu0 %559
      %v561 = vsel %vm442, %v441, %v560
      %562 = vrot.lane.b32.xlu0 %v324, 102
      %v563 = vpop.permute.xlu0 %562
      %v564 = vsel %vm454, %v453, %v563
      %565 = vrot.lane.b32.xlu0 %v314, 86
      %v566 = vpop.permute.xlu0 %565
      %567 = vrot.lane.b32.xlu0 %v315, 86
      %v568 = vpop.permute.xlu0 %567
      %569 = vrot.lane.b32.xlu0 %v316, 86
      %v570 = vpop.permute.xlu0 %569
      %571 = vrot.lane.b32.xlu0 %v324, 86
      %v572 = vpop.permute.xlu0 %571
      %vm573 = vcmask 703488
      %v574 = vsel %vm573, %v566, %v568
      %v575 = vsel %vm573, %v568, %v570
      %v576 = vsel %vm573, %v570, %v572
      %577 = vrot.lane.b32.xlu0 %v314, 85
      %v578 = vpop.permute.xlu0 %577
      %579 = vrot.lane.b32.xlu0 %v315, 85
      %v580 = vpop.permute.xlu0 %579
      %581 = vrot.lane.b32.xlu0 %v316, 85
      %v582 = vpop.permute.xlu0 %581
      %583 = vrot.lane.b32.xlu0 %v324, 85
      %v584 = vpop.permute.xlu0 %583
      %vm585 = vcmask 695296
      %v586 = vsel %vm585, %v578, %v580
      %v587 = vsel %vm585, %v580, %v582
      %v588 = vsel %vm585, %v582, %v584
      %589 = vrot.lane.b32.xlu0 %v314, 110
      %v590 = vpop.permute.xlu0 %589
      %591 = vrot.lane.b32.xlu0 %v315, 110
      %v592 = vpop.permute.xlu0 %591
      %593 = vrot.lane.b32.xlu0 %v316, 110
      %v594 = vpop.permute.xlu0 %593
      %595 = vrot.lane.b32.xlu0 %v324, 110
      %v596 = vpop.permute.xlu0 %595
      %vm597 = vcmask 900096
      %v598 = vsel %vm597, %v590, %v592
      %v599 = vsel %vm597, %v592, %v594
      %v600 = vsel %vm597, %v594, %v596
      %601 = vrot.lane.b32.xlu0 %v314, 109
      %v602 = vpop.permute.xlu0 %601
      %603 = vrot.lane.b32.xlu0 %v315, 109
      %v604 = vpop.permute.xlu0 %603
      %605 = vrot.lane.b32.xlu0 %v316, 109
      %v606 = vpop.permute.xlu0 %605
      %607 = vrot.lane.b32.xlu0 %v324, 109
      %v608 = vpop.permute.xlu0 %607
      %vm609 = vcmask 891904
      %v610 = vsel %vm609, %v602, %v604
      %v611 = vsel %vm609, %v604, %v606
      %v612 = vsel %vm609, %v606, %v608
      %613 = vrot.lane.b32.xlu0 %v315, 88
      %v614 = vpop.permute.xlu0 %613
      %615 = vrot.lane.b32.xlu0 %v316, 88
      %v616 = vpop.permute.xlu0 %615
      %617 = vrot.lane.b32.xlu0 %v324, 88
      %v618 = vpop.permute.xlu0 %617
      %vm619 = vcmask 719872
      %v620 = vsel %vm619, %v614, %v616
      %v621 = vsel %vm619, %v616, %v618
      %622 = vrot.lane.b32.xlu0 %v315, 87
      %v623 = vpop.permute.xlu0 %622
      %624 = vrot.lane.b32.xlu0 %v316, 87
      %v625 = vpop.permute.xlu0 %624
      %626 = vrot.lane.b32.xlu0 %v324, 87
      %v627 = vpop.permute.xlu0 %626
      %vm628 = vcmask 711680
      %v629 = vsel %vm628, %v623, %v625
      %v630 = vsel %vm628, %v625, %v627
      %631 = vrot.lane.b32.xlu0 %v314, 82
      %v632 = vpop.permute.xlu0 %631
      %633 = vrot.lane.b32.xlu0 %v315, 82
      %v634 = vpop.permute.xlu0 %633
      %635 = vrot.lane.b32.xlu0 %v316, 82
      %v636 = vpop.permute.xlu0 %635
      %637 = vrot.lane.b32.xlu0 %v324, 82
      %v638 = vpop.permute.xlu0 %637
      %639 = vrot.lane.b32.xlu0 %v335, 82
      %v640 = vpop.permute.xlu0 %639
      %641 = vrot.lane.b32.xlu0 %v336, 82
      %v642 = vpop.permute.xlu0 %641
      %643 = vrot.lane.b32.xlu0 %v516, 82
      %v644 = vpop.permute.xlu0 %643
      %645 = vrot.lane.b32.xlu0 %v515, 82
      %v646 = vpop.permute.xlu0 %645
      %647 = vrot.lane.b32.xlu0 %v347, 82
      %v648 = vpop.permute.xlu0 %647
      %649 = vrot.lane.b32.xlu0 %v348, 82
      %v650 = vpop.permute.xlu0 %649
      %651 = vrot.lane.b32.xlu0 %v519, 82
      %v652 = vpop.permute.xlu0 %651
      %653 = vrot.lane.b32.xlu0 %v518, 82
      %v654 = vpop.permute.xlu0 %653
      %655 = vrot.lane.b32.xlu0 %v359, 82
      %v656 = vpop.permute.xlu0 %655
      %657 = vrot.lane.b32.xlu0 %v360, 82
      %v658 = vpop.permute.xlu0 %657
      %659 = vrot.lane.b32.xlu0 %v522, 82
      %v660 = vpop.permute.xlu0 %659
      %661 = vrot.lane.b32.xlu0 %v521, 82
      %v662 = vpop.permute.xlu0 %661
      %663 = vrot.lane.b32.xlu0 %v371, 82
      %v664 = vpop.permute.xlu0 %663
      %665 = vrot.lane.b32.xlu0 %v372, 82
      %v666 = vpop.permute.xlu0 %665
      %667 = vrot.lane.b32.xlu0 %v525, 82
      %v668 = vpop.permute.xlu0 %667
      %669 = vrot.lane.b32.xlu0 %v524, 82
      %v670 = vpop.permute.xlu0 %669
      %671 = vrot.lane.b32.xlu0 %v535, 82
      %v672 = vpop.permute.xlu0 %671
      %673 = vrot.lane.b32.xlu0 %v536, 82
      %v674 = vpop.permute.xlu0 %673
      %675 = vrot.lane.b32.xlu0 %v537, 82
      %v676 = vpop.permute.xlu0 %675
      %677 = vrot.lane.b32.xlu0 %v533, 82
      %v678 = vpop.permute.xlu0 %677
      %679 = vrot.lane.b32.xlu0 %v547, 82
      %v680 = vpop.permute.xlu0 %679
      %681 = vrot.lane.b32.xlu0 %v548, 82
      %v682 = vpop.permute.xlu0 %681
      %683 = vrot.lane.b32.xlu0 %v549, 82
      %v684 = vpop.permute.xlu0 %683
      %685 = vrot.lane.b32.xlu0 %v545, 82
      %v686 = vpop.permute.xlu0 %685
      %687 = vrot.lane.b32.xlu0 %v407, 82
      %v688 = vpop.permute.xlu0 %687
      %689 = vrot.lane.b32.xlu0 %v408, 82
      %v690 = vpop.permute.xlu0 %689
      %691 = vrot.lane.b32.xlu0 %v552, 82
      %v692 = vpop.permute.xlu0 %691
      %693 = vrot.lane.b32.xlu0 %v551, 82
      %v694 = vpop.permute.xlu0 %693
      %695 = vrot.lane.b32.xlu0 %v419, 82
      %v696 = vpop.permute.xlu0 %695
      %697 = vrot.lane.b32.xlu0 %v420, 82
      %v698 = vpop.permute.xlu0 %697
      %699 = vrot.lane.b32.xlu0 %v555, 82
      %v700 = vpop.permute.xlu0 %699
      %701 = vrot.lane.b32.xlu0 %v554, 82
      %v702 = vpop.permute.xlu0 %701
      %703 = vrot.lane.b32.xlu0 %v431, 82
      %v704 = vpop.permute.xlu0 %703
      %705 = vrot.lane.b32.xlu0 %v432, 82
      %v706 = vpop.permute.xlu0 %705
      %707 = vrot.lane.b32.xlu0 %v558, 82
      %v708 = vpop.permute.xlu0 %707
      %709 = vrot.lane.b32.xlu0 %v557, 82
      %v710 = vpop.permute.xlu0 %709
      %711 = vrot.lane.b32.xlu0 %v443, 82
      %v712 = vpop.permute.xlu0 %711
      %713 = vrot.lane.b32.xlu0 %v444, 82
      %v714 = vpop.permute.xlu0 %713
      %715 = vrot.lane.b32.xlu0 %v561, 82
      %v716 = vpop.permute.xlu0 %715
      %717 = vrot.lane.b32.xlu0 %v560, 82
      %v718 = vpop.permute.xlu0 %717
      %719 = vrot.lane.b32.xlu0 %v455, 82
      %v720 = vpop.permute.xlu0 %719
      %721 = vrot.lane.b32.xlu0 %v456, 82
      %v722 = vpop.permute.xlu0 %721
      %723 = vrot.lane.b32.xlu0 %v564, 82
      %v724 = vpop.permute.xlu0 %723
      %725 = vrot.lane.b32.xlu0 %v563, 82
      %v726 = vpop.permute.xlu0 %725
      %727 = vrot.lane.b32.xlu0 %v574, 82
      %v728 = vpop.permute.xlu0 %727
      %729 = vrot.lane.b32.xlu0 %v575, 82
      %v730 = vpop.permute.xlu0 %729
      %731 = vrot.lane.b32.xlu0 %v576, 82
      %v732 = vpop.permute.xlu0 %731
      %733 = vrot.lane.b32.xlu0 %v572, 82
      %v734 = vpop.permute.xlu0 %733
      %735 = vrot.lane.b32.xlu0 %v586, 82
      %v736 = vpop.permute.xlu0 %735
      %737 = vrot.lane.b32.xlu0 %v587, 82
      %v738 = vpop.permute.xlu0 %737
      %739 = vrot.lane.b32.xlu0 %v588, 82
      %v740 = vpop.permute.xlu0 %739
      %741 = vrot.lane.b32.xlu0 %v584, 82
      %v742 = vpop.permute.xlu0 %741
      %743 = vrot.lane.b32.xlu0 %v493, 82
      %v744 = vpop.permute.xlu0 %743
      %745 = vrot.lane.b32.xlu0 %v494, 82
      %v746 = vpop.permute.xlu0 %745
      %747 = vrot.lane.b32.xlu0 %v495, 82
      %v748 = vpop.permute.xlu0 %747
      %749 = vrot.lane.b32.xlu0 %v491, 82
      %v750 = vpop.permute.xlu0 %749
      %751 = vrot.lane.b32.xlu0 %v508, 82
      %v752 = vpop.permute.xlu0 %751
      %753 = vrot.lane.b32.xlu0 %v509, 82
      %v754 = vpop.permute.xlu0 %753
      %755 = vrot.lane.b32.xlu0 %v510, 82
      %v756 = vpop.permute.xlu0 %755
      %757 = vrot.lane.b32.xlu0 %v506, 82
      %v758 = vpop.permute.xlu0 %757
      %vm759 = vcmask 670720
      %v760 = vsel %vm759, %v632, %v634
      %v761 = vsel %vm759, %v634, %v636
      %v762 = vsel %vm759, %v636, %v638
      %v763 = vsel %vm759, %v640, %v642
      %v764 = vsel %vm759, %v642, %v644
      %v765 = vsel %vm759, %v644, %v646
      %v766 = vsel %vm759, %v648, %v650
      %v767 = vsel %vm759, %v650, %v652
      %v768 = vsel %vm759, %v652, %v654
      %v769 = vsel %vm759, %v656, %v658
      %v770 = vsel %vm759, %v658, %v660
      %v771 = vsel %vm759, %v660, %v662
      %v772 = vsel %vm759, %v664, %v666
      %v773 = vsel %vm759, %v666, %v668
      %v774 = vsel %vm759, %v668, %v670
      %v775 = vsel %vm759, %v672, %v674
      %v776 = vsel %vm759, %v674, %v676
      %v777 = vsel %vm759, %v676, %v678
      %v778 = vsel %vm759, %v680, %v682
      %v779 = vsel %vm759, %v682, %v684
      %v780 = vsel %vm759, %v684, %v686
      %v781 = vsel %vm759, %v688, %v690
      %v782 = vsel %vm759, %v690, %v692
      %v783 = vsel %vm759, %v692, %v694
      %v784 = vsel %vm759, %v696, %v698
      %v785 = vsel %vm759, %v698, %v700
      %v786 = vsel %vm759, %v700, %v702
      %v787 = vsel %vm759, %v704, %v706
      %v788 = vsel %vm759, %v706, %v708
      %v789 = vsel %vm759, %v708, %v710
      %v790 = vsel %vm759, %v712, %v714
      %v791 = vsel %vm759, %v714, %v716
      %v792 = vsel %vm759, %v716, %v718
      %v793 = vsel %vm759, %v720, %v722
      %v794 = vsel %vm759, %v722, %v724
      %v795 = vsel %vm759, %v724, %v726
      %v796 = vsel %vm759, %v728, %v730
      %v797 = vsel %vm759, %v730, %v732
      %v798 = vsel %vm759, %v732, %v734
      %v799 = vsel %vm759, %v736, %v738
      %v800 = vsel %vm759, %v738, %v740
      %v801 = vsel %vm759, %v740, %v742
      %v802 = vsel %vm759, %v744, %v746
      %v803 = vsel %vm759, %v746, %v748
      %v804 = vsel %vm759, %v748, %v750
      %v805 = vsel %vm759, %v752, %v754
      %v806 = vsel %vm759, %v754, %v756
      %v807 = vsel %vm759, %v756, %v758
      %856 = vrot.lane.b32.xlu0 %v314, 36
      %v857 = vpop.permute.xlu0 %856
      %858 = vrot.lane.b32.xlu0 %v315, 36
      %v859 = vpop.permute.xlu0 %858
      %860 = vrot.lane.b32.xlu0 %v316, 36
      %v861 = vpop.permute.xlu0 %860
      %862 = vrot.lane.b32.xlu0 %v324, 36
      %v863 = vpop.permute.xlu0 %862
      %864 = vrot.lane.b32.xlu0 %v335, 36
      %v865 = vpop.permute.xlu0 %864
      %866 = vrot.lane.b32.xlu0 %v336, 36
      %v867 = vpop.permute.xlu0 %866
      %868 = vrot.lane.b32.xlu0 %v516, 36
      %v869 = vpop.permute.xlu0 %868
      %870 = vrot.lane.b32.xlu0 %v515, 36
      %v871 = vpop.permute.xlu0 %870
      %872 = vrot.lane.b32.xlu0 %v347, 36
      %v873 = vpop.permute.xlu0 %872
      %874 = vrot.lane.b32.xlu0 %v348, 36
      %v875 = vpop.permute.xlu0 %874
      %876 = vrot.lane.b32.xlu0 %v519, 36
      %v877 = vpop.permute.xlu0 %876
      %878 = vrot.lane.b32.xlu0 %v518, 36
      %v879 = vpop.permute.xlu0 %878
      %880 = vrot.lane.b32.xlu0 %v598, 36
      %v881 = vpop.permute.xlu0 %880
      %882 = vrot.lane.b32.xlu0 %v599, 36
      %v883 = vpop.permute.xlu0 %882
      %884 = vrot.lane.b32.xlu0 %v600, 36
      %v885 = vpop.permute.xlu0 %884
      %886 = vrot.lane.b32.xlu0 %v596, 36
      %v887 = vpop.permute.xlu0 %886
      %888 = vrot.lane.b32.xlu0 %v610, 36
      %v889 = vpop.permute.xlu0 %888
      %890 = vrot.lane.b32.xlu0 %v611, 36
      %v891 = vpop.permute.xlu0 %890
      %892 = vrot.lane.b32.xlu0 %v612, 36
      %v893 = vpop.permute.xlu0 %892
      %894 = vrot.lane.b32.xlu0 %v608, 36
      %v895 = vpop.permute.xlu0 %894
      %896 = vrot.lane.b32.xlu0 %v535, 36
      %v897 = vpop.permute.xlu0 %896
      %898 = vrot.lane.b32.xlu0 %v536, 36
      %v899 = vpop.permute.xlu0 %898
      %900 = vrot.lane.b32.xlu0 %v537, 36
      %v901 = vpop.permute.xlu0 %900
      %902 = vrot.lane.b32.xlu0 %v533, 36
      %v903 = vpop.permute.xlu0 %902
      %904 = vrot.lane.b32.xlu0 %v547, 36
      %v905 = vpop.permute.xlu0 %904
      %906 = vrot.lane.b32.xlu0 %v548, 36
      %v907 = vpop.permute.xlu0 %906
      %908 = vrot.lane.b32.xlu0 %v549, 36
      %v909 = vpop.permute.xlu0 %908
      %910 = vrot.lane.b32.xlu0 %v545, 36
      %v911 = vpop.permute.xlu0 %910
      %912 = vrot.lane.b32.xlu0 %v407, 36
      %v913 = vpop.permute.xlu0 %912
      %914 = vrot.lane.b32.xlu0 %v408, 36
      %v915 = vpop.permute.xlu0 %914
      %916 = vrot.lane.b32.xlu0 %v552, 36
      %v917 = vpop.permute.xlu0 %916
      %918 = vrot.lane.b32.xlu0 %v551, 36
      %v919 = vpop.permute.xlu0 %918
      %920 = vrot.lane.b32.xlu0 %v419, 36
      %v921 = vpop.permute.xlu0 %920
      %922 = vrot.lane.b32.xlu0 %v420, 36
      %v923 = vpop.permute.xlu0 %922
      %924 = vrot.lane.b32.xlu0 %v555, 36
      %v925 = vpop.permute.xlu0 %924
      %926 = vrot.lane.b32.xlu0 %v554, 36
      %v927 = vpop.permute.xlu0 %926
      %928 = vrot.lane.b32.xlu0 %v431, 36
      %v929 = vpop.permute.xlu0 %928
      %930 = vrot.lane.b32.xlu0 %v432, 36
      %v931 = vpop.permute.xlu0 %930
      %932 = vrot.lane.b32.xlu0 %v558, 36
      %v933 = vpop.permute.xlu0 %932
      %934 = vrot.lane.b32.xlu0 %v557, 36
      %v935 = vpop.permute.xlu0 %934
      %936 = vrot.lane.b32.xlu0 %v614, 36
      %v937 = vpop.permute.xlu0 %936
      %938 = vrot.lane.b32.xlu0 %v620, 36
      %v939 = vpop.permute.xlu0 %938
      %940 = vrot.lane.b32.xlu0 %v621, 36
      %v941 = vpop.permute.xlu0 %940
      %942 = vrot.lane.b32.xlu0 %v618, 36
      %v943 = vpop.permute.xlu0 %942
      %944 = vrot.lane.b32.xlu0 %v623, 36
      %v945 = vpop.permute.xlu0 %944
      %946 = vrot.lane.b32.xlu0 %v629, 36
      %v947 = vpop.permute.xlu0 %946
      %948 = vrot.lane.b32.xlu0 %v630, 36
      %v949 = vpop.permute.xlu0 %948
      %950 = vrot.lane.b32.xlu0 %v627, 36
      %v951 = vpop.permute.xlu0 %950
      %952 = vrot.lane.b32.xlu0 %v568, 36
      %v953 = vpop.permute.xlu0 %952
      %954 = vrot.lane.b32.xlu0 %v575, 36
      %v955 = vpop.permute.xlu0 %954
      %956 = vrot.lane.b32.xlu0 %v576, 36
      %v957 = vpop.permute.xlu0 %956
      %958 = vrot.lane.b32.xlu0 %v572, 36
      %v959 = vpop.permute.xlu0 %958
      %960 = vrot.lane.b32.xlu0 %v580, 36
      %v961 = vpop.permute.xlu0 %960
      %962 = vrot.lane.b32.xlu0 %v587, 36
      %v963 = vpop.permute.xlu0 %962
      %964 = vrot.lane.b32.xlu0 %v588, 36
      %v965 = vpop.permute.xlu0 %964
      %966 = vrot.lane.b32.xlu0 %v584, 36
      %v967 = vpop.permute.xlu0 %966
      %968 = vrot.lane.b32.xlu0 %v487, 36
      %v969 = vpop.permute.xlu0 %968
      %970 = vrot.lane.b32.xlu0 %v494, 36
      %v971 = vpop.permute.xlu0 %970
      %972 = vrot.lane.b32.xlu0 %v495, 36
      %v973 = vpop.permute.xlu0 %972
      %974 = vrot.lane.b32.xlu0 %v491, 36
      %v975 = vpop.permute.xlu0 %974
      %976 = vrot.lane.b32.xlu0 %v502, 36
      %v977 = vpop.permute.xlu0 %976
      %978 = vrot.lane.b32.xlu0 %v509, 36
      %v979 = vpop.permute.xlu0 %978
      %980 = vrot.lane.b32.xlu0 %v510, 36
      %v981 = vpop.permute.xlu0 %980
      %982 = vrot.lane.b32.xlu0 %v506, 36
      %v983 = vpop.permute.xlu0 %982
      %vm984 = vcmask 293888
      %v985 = vsel %vm984, %v857, %v859
      %v986 = vsel %vm984, %v859, %v861
      %v987 = vsel %vm984, %v861, %v863
      %v988 = vsel %vm984, %v865, %v867
      %v989 = vsel %vm984, %v867, %v869
      %v990 = vsel %vm984, %v869, %v871
      %v991 = vsel %vm984, %v873, %v875
      %v992 = vsel %vm984, %v875, %v877
      %v993 = vsel %vm984, %v877, %v879
      %v994 = vsel %vm984, %v881, %v883
      %v995 = vsel %vm984, %v883, %v885
      %v996 = vsel %vm984, %v885, %v887
      %v997 = vsel %vm984, %v889, %v891
      %v998 = vsel %vm984, %v891, %v893
      %v999 = vsel %vm984, %v893, %v895
      %v1000 = vsel %vm984, %v897, %v899
      %v1001 = vsel %vm984, %v899, %v901
      %v1002 = vsel %vm984, %v901, %v903
      %v1003 = vsel %vm984, %v905, %v907
      %v1004 = vsel %vm984, %v907, %v909
      %v1005 = vsel %vm984, %v909, %v911
      %v1006 = vsel %vm984, %v913, %v915
      %v1007 = vsel %vm984, %v915, %v917
      %v1008 = vsel %vm984, %v917, %v919
      %v1009 = vsel %vm984, %v921, %v923
      %v1010 = vsel %vm984, %v923, %v925
      %v1011 = vsel %vm984, %v925, %v927
      %v1012 = vsel %vm984, %v929, %v931
      %v1013 = vsel %vm984, %v931, %v933
      %v1014 = vsel %vm984, %v933, %v935
      %v1015 = vsel %vm984, %v937, %v939
      %v1016 = vsel %vm984, %v939, %v941
      %v1017 = vsel %vm984, %v941, %v943
      %v1018 = vsel %vm984, %v945, %v947
      %v1019 = vsel %vm984, %v947, %v949
      %v1020 = vsel %vm984, %v949, %v951
      %v1021 = vsel %vm984, %v953, %v955
      %v1022 = vsel %vm984, %v955, %v957
      %v1023 = vsel %vm984, %v957, %v959
      %v1024 = vsel %vm984, %v961, %v963
      %v1025 = vsel %vm984, %v963, %v965
      %v1026 = vsel %vm984, %v965, %v967
      %v1027 = vsel %vm984, %v969, %v971
      %v1028 = vsel %vm984, %v971, %v973
      %v1029 = vsel %vm984, %v973, %v975
      %v1030 = vsel %vm984, %v977, %v979
      %v1031 = vsel %vm984, %v979, %v981
      %v1032 = vsel %vm984, %v981, %v983
      %1081 = vrot.lane.b32.xlu0 %v315, 118
      %v1082 = vpop.permute.xlu0 %1081
      %1083 = vrot.lane.b32.xlu0 %v316, 118
      %v1084 = vpop.permute.xlu0 %1083
      %1085 = vrot.lane.b32.xlu0 %v324, 118
      %v1086 = vpop.permute.xlu0 %1085
      %vm1087 = vcmask 965632
      %v1088 = vsel %vm1087, %v1082, %v1084
      %v1089 = vsel %vm1087, %v1084, %v1086
      %1094 = vset.pattern.permute.xlu0 0
      %1095 = vperm.xlu0 %1094, %v322
      %v1096 = vpop.permute.xlu0 %1095
      %vm1098 = vcmask 64512
      %v1100 = vsel %vm1098, %v321, 0
      %1102 = vmatpush.msra.mxu0 %v508
      %1103 = vmatpush.msra.mxu0 %v493
      %1104 = vmatpush.msra.mxu0 %v478
      %1105 = vmatpush.msra.mxu0 %v467
      %1106 = vmatpush.msra.mxu0 %v455
      %1107 = vmatpush.msra.mxu0 %v443
      %1108 = vmatpush.msra.mxu0 %v431
      %1109 = vmatpush.msra.mxu0 %v419
      %1110 = vmatpush.msra.mxu0 %v407
      %1111 = vmatpush.msra.mxu0 %v395
      %1112 = vmatpush.msra.mxu0 %v383
      %1113 = vmatpush.msra.mxu0 %v371
      %1114 = vmatpush.msra.mxu0 %v359
      %1115 = vmatpush.msra.mxu0 %v347
      %1116 = vmatpush.msra.mxu0 %v335
      %1117 = vmatpush.msra.mxu0 %v314
      %1118 = vmatmul.f32.gmra.mxu0 %v318
      %v1119 = vpop.f32.mrf.mxu0
      %v1120 = vadd.f32 %v1096, %v1119
      %1121 = vdwg.mxu0
      %1122 = vmatpush.msra.mxu0 %v805
      %1123 = vmatpush.msra.mxu0 %v802
      %1124 = vmatpush.msra.mxu0 %v799
      %1125 = vmatpush.msra.mxu0 %v796
      %1126 = vmatpush.msra.mxu0 %v793
      %1127 = vmatpush.msra.mxu0 %v790
      %1128 = vmatpush.msra.mxu0 %v787
      %1129 = vmatpush.msra.mxu0 %v784
      %1130 = vmatpush.msra.mxu0 %v781
      %1131 = vmatpush.msra.mxu0 %v778
      %1132 = vmatpush.msra.mxu0 %v775
      %1133 = vmatpush.msra.mxu0 %v772
      %1134 = vmatpush.msra.mxu0 %v769
      %1135 = vmatpush.msra.mxu0 %v766
      %1136 = vmatpush.msra.mxu0 %v763
      %1137 = vmatpush.msra.mxu0 %v760
      %1138 = vmatmul.f32.gmra.mxu0 %v319
      %v1139 = vpop.f32.mrf.mxu0
      %v1140 = vadd.f32 %v1120, %v1139
      %1141 = vdwg.mxu0
      %1142 = vmatpush.msra.mxu0 %v1030
      %1143 = vmatpush.msra.mxu0 %v1027
      %1144 = vmatpush.msra.mxu0 %v1024
      %1145 = vmatpush.msra.mxu0 %v1021
      %1146 = vmatpush.msra.mxu0 %v1018
      %1147 = vmatpush.msra.mxu0 %v1015
      %1148 = vmatpush.msra.mxu0 %v1012
      %1149 = vmatpush.msra.mxu0 %v1009
      %1150 = vmatpush.msra.mxu0 %v1006
      %1151 = vmatpush.msra.mxu0 %v1003
      %1152 = vmatpush.msra.mxu0 %v1000
      %1153 = vmatpush.msra.mxu0 %v997
      %1154 = vmatpush.msra.mxu0 %v994
      %1155 = vmatpush.msra.mxu0 %v991
      %1156 = vmatpush.msra.mxu0 %v988
      %1157 = vmatpush.msra.mxu0 %v985
      %1158 = vmatmul.f32.gmra.mxu0 %v320
      %v1159 = vpop.f32.mrf.mxu0
      %v1160 = vadd.f32 %v1140, %v1159
      %1161 = vdwg.mxu0
      %1162 = vmatpush.msra.mxu0 0.0
      %1163 = vmatpush.msra.mxu0 0.0
      %1164 = vmatpush.msra.mxu0 0.0
      %1165 = vmatpush.msra.mxu0 0.0
      %1166 = vmatpush.msra.mxu0 0.0
      %1167 = vmatpush.msra.mxu0 0.0
      %1168 = vmatpush.msra.mxu0 0.0
      %1169 = vmatpush.msra.mxu0 0.0
      %1170 = vmatpush.msra.mxu0 0.0
      %1171 = vmatpush.msra.mxu0 0.0
      %1172 = vmatpush.msra.mxu0 0.0
      %1173 = vmatpush.msra.mxu0 0.0
      %1174 = vmatpush.msra.mxu0 0.0
      %1175 = vmatpush.msra.mxu0 0.0
      %1176 = vmatpush.msra.mxu0 0.0
      %1177 = vmatpush.msra.mxu0 %v1088
      %1178 = vmatmul.f32.gmra.mxu0 %v1100
      %v1179 = vpop.f32.mrf.mxu0
      %v1180 = vadd.f32 %v1160, %v1179
      %1181 = vdwg.mxu0
      %1182 = vmatpush.msra.mxu0 %v509
      %1183 = vmatpush.msra.mxu0 %v494
      %1184 = vmatpush.msra.mxu0 %v479
      %1185 = vmatpush.msra.mxu0 %v468
      %1186 = vmatpush.msra.mxu0 %v456
      %1187 = vmatpush.msra.mxu0 %v444
      %1188 = vmatpush.msra.mxu0 %v432
      %1189 = vmatpush.msra.mxu0 %v420
      %1190 = vmatpush.msra.mxu0 %v408
      %1191 = vmatpush.msra.mxu0 %v396
      %1192 = vmatpush.msra.mxu0 %v384
      %1193 = vmatpush.msra.mxu0 %v372
      %1194 = vmatpush.msra.mxu0 %v360
      %1195 = vmatpush.msra.mxu0 %v348
      %1196 = vmatpush.msra.mxu0 %v336
      %1197 = vmatpush.msra.mxu0 %v315
      %1198 = vmatmul.f32.gmra.mxu0 %v318
      %v1199 = vpop.f32.mrf.mxu0
      %v1200 = vadd.f32 %v1096, %v1199
      %1201 = vdwg.mxu0
      %1202 = vmatpush.msra.mxu0 %v806
      %1203 = vmatpush.msra.mxu0 %v803
      %1204 = vmatpush.msra.mxu0 %v800
      %1205 = vmatpush.msra.mxu0 %v797
      %1206 = vmatpush.msra.mxu0 %v794
      %1207 = vmatpush.msra.mxu0 %v791
      %1208 = vmatpush.msra.mxu0 %v788
      %1209 = vmatpush.msra.mxu0 %v785
      %1210 = vmatpush.msra.mxu0 %v782
      %1211 = vmatpush.msra.mxu0 %v779
      %1212 = vmatpush.msra.mxu0 %v776
      %1213 = vmatpush.msra.mxu0 %v773
      %1214 = vmatpush.msra.mxu0 %v770
      %1215 = vmatpush.msra.mxu0 %v767
      %1216 = vmatpush.msra.mxu0 %v764
      %1217 = vmatpush.msra.mxu0 %v761
      %1218 = vmatmul.f32.gmra.mxu0 %v319
      %v1219 = vpop.f32.mrf.mxu0
      %v1220 = vadd.f32 %v1200, %v1219
      %1221 = vdwg.mxu0
      %1222 = vmatpush.msra.mxu0 %v1031
      %1223 = vmatpush.msra.mxu0 %v1028
      %1224 = vmatpush.msra.mxu0 %v1025
      %1225 = vmatpush.msra.mxu0 %v1022
      %1226 = vmatpush.msra.mxu0 %v1019
      %1227 = vmatpush.msra.mxu0 %v1016
      %1228 = vmatpush.msra.mxu0 %v1013
      %1229 = vmatpush.msra.mxu0 %v1010
      %1230 = vmatpush.msra.mxu0 %v1007
      %1231 = vmatpush.msra.mxu0 %v1004
      %1232 = vmatpush.msra.mxu0 %v1001
      %1233 = vmatpush.msra.mxu0 %v998
      %1234 = vmatpush.msra.mxu0 %v995
      %1235 = vmatpush.msra.mxu0 %v992
      %1236 = vmatpush.msra.mxu0 %v989
      %1237 = vmatpush.msra.mxu0 %v986
      %1238 = vmatmul.f32.gmra.mxu0 %v320
      %v1239 = vpop.f32.mrf.mxu0
      %v1240 = vadd.f32 %v1220, %v1239
      %1241 = vdwg.mxu0
      %1242 = vmatpush.msra.mxu0 0.0
      %1243 = vmatpush.msra.mxu0 0.0
      %1244 = vmatpush.msra.mxu0 0.0
      %1245 = vmatpush.msra.mxu0 0.0
      %1246 = vmatpush.msra.mxu0 0.0
      %1247 = vmatpush.msra.mxu0 0.0
      %1248 = vmatpush.msra.mxu0 0.0
      %1249 = vmatpush.msra.mxu0 0.0
      %1250 = vmatpush.msra.mxu0 0.0
      %1251 = vmatpush.msra.mxu0 0.0
      %1252 = vmatpush.msra.mxu0 0.0
      %1253 = vmatpush.msra.mxu0 0.0
      %1254 = vmatpush.msra.mxu0 0.0
      %1255 = vmatpush.msra.mxu0 0.0
      %1256 = vmatpush.msra.mxu0 0.0
      %1257 = vmatpush.msra.mxu0 %v1089
      %1258 = vmatmul.f32.gmra.mxu0 %v1100
      %v1259 = vpop.f32.mrf.mxu0
      %v1260 = vadd.f32 %v1240, %v1259
      %1261 = vdwg.mxu0
      %1262 = vmatpush.msra.mxu0 %v510
      %1263 = vmatpush.msra.mxu0 %v495
      %1264 = vmatpush.msra.mxu0 %v477
      %1265 = vmatpush.msra.mxu0 %v465
      %1266 = vmatpush.msra.mxu0 %v453
      %1267 = vmatpush.msra.mxu0 %v441
      %1268 = vmatpush.msra.mxu0 %v429
      %1269 = vmatpush.msra.mxu0 %v417
      %1270 = vmatpush.msra.mxu0 %v405
      %1271 = vmatpush.msra.mxu0 %v393
      %1272 = vmatpush.msra.mxu0 %v381
      %1273 = vmatpush.msra.mxu0 %v369
      %1274 = vmatpush.msra.mxu0 %v357
      %1275 = vmatpush.msra.mxu0 %v345
      %1276 = vmatpush.msra.mxu0 %v333
      %1277 = vmatpush.msra.mxu0 %v316
      %1278 = vmatmul.f32.gmra.mxu0 %v318
      %v1279 = vpop.f32.mrf.mxu0
      %v1280 = vadd.f32 %v1096, %v1279
      %1281 = vdwg.mxu0
      %1282 = vmatpush.msra.mxu0 %v807
      %1283 = vmatpush.msra.mxu0 %v804
      %1284 = vmatpush.msra.mxu0 %v801
      %1285 = vmatpush.msra.mxu0 %v798
      %1286 = vmatpush.msra.mxu0 %v795
      %1287 = vmatpush.msra.mxu0 %v792
      %1288 = vmatpush.msra.mxu0 %v789
      %1289 = vmatpush.msra.mxu0 %v786
      %1290 = vmatpush.msra.mxu0 %v783
      %1291 = vmatpush.msra.mxu0 %v780
      %1292 = vmatpush.msra.mxu0 %v777
      %1293 = vmatpush.msra.mxu0 %v774
      %1294 = vmatpush.msra.mxu0 %v771
      %1295 = vmatpush.msra.mxu0 %v768
      %1296 = vmatpush.msra.mxu0 %v765
      %1297 = vmatpush.msra.mxu0 %v762
      %1298 = vmatmul.f32.gmra.mxu0 %v319
      %v1299 = vpop.f32.mrf.mxu0
      %v1300 = vadd.f32 %v1280, %v1299
      %1301 = vdwg.mxu0
      %1302 = vmatpush.msra.mxu0 %v1032
      %1303 = vmatpush.msra.mxu0 %v1029
      %1304 = vmatpush.msra.mxu0 %v1026
      %1305 = vmatpush.msra.mxu0 %v1023
      %1306 = vmatpush.msra.mxu0 %v1020
      %1307 = vmatpush.msra.mxu0 %v1017
      %1308 = vmatpush.msra.mxu0 %v1014
      %1309 = vmatpush.msra.mxu0 %v1011
      %1310 = vmatpush.msra.mxu0 %v1008
      %1311 = vmatpush.msra.mxu0 %v1005
      %1312 = vmatpush.msra.mxu0 %v1002
      %1313 = vmatpush.msra.mxu0 %v999
      %1314 = vmatpush.msra.mxu0 %v996
      %1315 = vmatpush.msra.mxu0 %v993
      %1316 = vmatpush.msra.mxu0 %v990
      %1317 = vmatpush.msra.mxu0 %v987
      %1318 = vmatmul.f32.gmra.mxu0 %v320
      %v1319 = vpop.f32.mrf.mxu0
      %v1320 = vadd.f32 %v1300, %v1319
      %1321 = vdwg.mxu0
      %1322 = vmatpush.msra.mxu0 0.0
      %1323 = vmatpush.msra.mxu0 0.0
      %1324 = vmatpush.msra.mxu0 0.0
      %1325 = vmatpush.msra.mxu0 0.0
      %1326 = vmatpush.msra.mxu0 0.0
      %1327 = vmatpush.msra.mxu0 0.0
      %1328 = vmatpush.msra.mxu0 0.0
      %1329 = vmatpush.msra.mxu0 0.0
      %1330 = vmatpush.msra.mxu0 0.0
      %1331 = vmatpush.msra.mxu0 0.0
      %1332 = vmatpush.msra.mxu0 0.0
      %1333 = vmatpush.msra.mxu0 0.0
      %1334 = vmatpush.msra.mxu0 0.0
      %1335 = vmatpush.msra.mxu0 0.0
      %1336 = vmatpush.msra.mxu0 0.0
      %1337 = vmatpush.msra.mxu0 %v1086
      %1338 = vmatmul.f32.gmra.mxu0 %v1100
      %v1339 = vpop.f32.mrf.mxu0
      %v1340 = vadd.f32 %v1320, %v1339
      %1341 = vdwg.mxu0
      %v1342 = vld [vmem:[%s5] sm:$0x7]
      %vm1343 = vcmp.lt.s32.totalorder %v1342, 16
      %v1344 = vsel %vm1343, 1, 0
      %v1345 = vcvt.s32.f32 %v1344
      %v1347 = vperm.slane %v1345, 0
      %v1348 = vperm.slane %v1345, 1
      %v1349 = vperm.slane %v1345, 2
      %v1353 = vmul.f32 %v1180, %v1347
      %v1354 = vmul.f32 %v1260, %v1348
      %v1355 = vmul.f32 %v1340, %v1349
      %v1356 = vadd.f32 %v1353, %v1354
      %vm1357 = vcmask 785408
      %v1358 = vsel %vm1357, %v1355, 0.0
      %v1359 = vadd.f32 %v1356, %v1358
      %1360 = vadd.xlane.f32.xlu0 %v1359
      %v1361 = vpop.xlane.xlu0 %1360
      %v1362 = vmul.f32 %v1180, %v1180
      %v1363 = vmul.f32 %v1260, %v1260
      %v1364 = vmul.f32 %v1340, %v1340
      %v1365 = vmul.f32 %v1362, %v1347
      %v1366 = vmul.f32 %v1363, %v1348
      %v1367 = vmul.f32 %v1364, %v1349
      %v1368 = vadd.f32 %v1365, %v1366
      %v1369 = vsel %vm1357, %v1367, 0.0
      %v1370 = vadd.f32 %v1368, %v1369
      %1371 = vadd.xlane.f32.xlu0 %v1370
      %v1372 = vpop.xlane.xlu0 %1371
      %vm1373 = vcmask 7168
      %v1374 = vsel %vm1373, %v1361, %v1372
      %vm1375 = vcmask 15360
      %1376 = vst.msk [vmem:[%s289] sm:$0xff] %vm1375, %v1374
      %1377 = vst [vmem:[%s285] sm:$0xff] %v1180
      %1378 = vst [vmem:[%s285 + $0x8] sm:$0xff] %v1260
      %1379 = vst.msk [vmem:[%s285 + $0x10] sm:$0xff] %vm1357, %v1340
      %p1380 = scmp.lt.s32.totalorder %s19, 1
      %s1381 = scalar_select %p1380, %s19, 1
      %s1382 = smul.addr %s1381, 3
      %s1383 = smul.addr %s1382, 8
      %s1384 = scalar_lea.vmem %s6, %s1383
      %p1385 = scmp.lt.s32.totalorder %s19, 1
      %s1386 = scalar_select %p1385, %s19, 1
      %s1387 = smul.addr %s1386, 8
      %s1388 = scalar_lea.vmem %s7, %s1387
      // Predicated region
      $region45: #{ga_forward.4} parent=43 // pred_check
        %p1389 = pneg %p168
      $region46: #{ga_forward.4} parent=43 // pred_check_branch
        %1391 = sbr.rel (%p1389) target = $region48
      $region47: #{ga_forward.4} parent=43 // pred_region
        _
      $region48: #{ga_forward.4} parent=43 // pred_fallthru
        _
      // Predicated region
      $region49: #{ga_forward.4} parent=43 // pred_check
        %p1392 = pneg %p194
      $region50: #{ga_forward.4} parent=43 // pred_check_branch
        %1394 = sbr.rel (%p1392) target = $region52
      $region51: #{ga_forward.4} parent=43 // pred_region
        _
      $region52: #{ga_forward.4} parent=43 // pred_fallthru
        _
    $region44: #{ga_forward.4} parent=5 // pred_fallthru
      _
    %p1395 = scmp.le.s32.totalorder 2, %s14
    // Predicated region
    $region53: #{ga_forward.4} parent=5 // pred_check
      %p1396 = pneg %p1395
    $region54: #{ga_forward.4} parent=5 // pred_check_branch
      %1398 = sbr.rel (%p1396) target = $region56
    $region55: #{ga_forward.4} parent=5 // pred_region
      %s1399 = ssub.s32 %s14, 2
      // Predicated region
      $region57: #{ga_forward.4} parent=55 // pred_check
        %p1400 = pneg %p174
      $region58: #{ga_forward.4} parent=55 // pred_check_branch
        %1402 = sbr.rel (%p1400) target = $region60
      $region59: #{ga_forward.4} parent=55 // pred_region
        %p1403 = scmp.lt.s32.totalorder %s20, 1
        %s1404 = scalar_select %p1403, %s20, 1
        %s1405 = smul.addr %s1404, 3
        %s1406 = smul.addr %s1405, 8
        %s1407 = scalar_lea.vmem %s6, %s1406
      $region60: #{ga_forward.4} parent=55 // pred_fallthru
        _
      // Predicated region
      $region61: #{ga_forward.4} parent=55 // pred_check
        %p1408 = pneg %p200
      $region62: #{ga_forward.4} parent=55 // pred_check_branch
        %1410 = sbr.rel (%p1408) target = $region64
      $region63: #{ga_forward.4} parent=55 // pred_region
        %p1411 = scmp.lt.s32.totalorder %s20, 1
        %s1412 = scalar_select %p1411, %s20, 1
        %s1413 = smul.addr %s1412, 8
        %s1414 = scalar_lea.vmem %s7, %s1413
      $region64: #{ga_forward.4} parent=55 // pred_fallthru
        _
    $region56: #{ga_forward.4} parent=5 // pred_fallthru
      _
  $region6: #{ga_forward.4} parent=0 // loop_footer
    %s18 = sadd.s32 1, %s14
  $region7: #{ga_forward.4} parent=0 // loop_footer_branch
    %13 = sbr.rel target = $region3
  $region8: #{ga_forward.4} parent=0 // loop_exit
    _

// kernel: ga_forward.3
$region0: #{ga_forward.3}
  #allocation0 [shape = 'u32[]', space=smem, size = 0x4, offset = 0x4, fixed_abs, tag = 'smem constant byte address 0x4 - core index']
  #allocation1 [shape = 'u32[72,128]{1,0:T(1,128)}', space=vmem, size = 0x9000, scoped, tag = 'internal scratch']
  %s0 = inlined_call_operand.vmem [shape: f32[2,8,484], index: 0, kind: input, shape index: {}]
  %s1 = inlined_call_operand.vmem [shape: f32[8,8], index: 1, kind: input, shape index: {}]
  %s2 = inlined_call_operand.vmem [shape: f32[8,1], index: 2, kind: input, shape index: {}]
  %s3 = inlined_call_operand.vmem [shape: f32[8,8], index: 3, kind: input, shape index: {}]
  %s4 = inlined_call_operand.vmem [shape: f32[8,1], index: 4, kind: input, shape index: {}]
  %s5 = inlined_call_operand.vmem [shape: f32[8,392], index: 5, kind: input, shape index: {}]
  %s6 = inlined_call_operand.vmem [shape: f32[8,1], index: 6, kind: input, shape index: {}]
  %s7 = inlined_call_operand.vmem [shape: s32[1,352], index: 7, kind: input, shape index: {}]
  %s8 = inlined_call_operand.vmem [shape: f32[2,8,352], index: 8, kind: output, shape index: {0}]
  %s9 = inlined_call_operand.vmem [shape: f32[2,8,484], index: 9, kind: output, shape index: {1}]
  %s10 = inlined_call_operand.vmem [shape: f32[2,8,2], index: 10, kind: output, shape index: {2}]
  %11 = xla_tuple %s8, %s9, %s10
  %s12 = sld [smem:[#allocation0]]
  $region81: #{ga_forward.3} parent=0
    _
  %s14 = ssub.s32 1, %s12
  %s15 = scalar_select 0, %s14, %s12
  loop: start=0, step=1, limit=4
  $region2: #{ga_forward.3} parent=0 // loop_pre_header
    _
  $region3: #{ga_forward.3} parent=0 // loop_header
    %s17 = sphi 0, %s21
    %p18 = scmp.ge.s32.totalorder %s17, 4
    %s27 = sphi 0, %s29
    %s30 = sphi 0, %s27
    %s31 = sphi 0, %s30
    %s47 = sphi 0, %s31
    %s51 = sphi 0, %s51
    %s53 = sphi 0, %s51
    %s54 = sphi 0, %s53
    %s68 = sphi 0, %s54
    %s72 = sphi 0, %s72
    %s74 = sphi 0, %s72
    %s75 = sphi 0, %s74
    %s89 = sphi 0, %s75
    %s93 = sphi 0, %s93
    %s95 = sphi 0, %s93
    %s96 = sphi 0, %s95
    %s110 = sphi 0, %s96
    %s114 = sphi 0, %s114
    %s116 = sphi 0, %s114
    %s117 = sphi 0, %s116
    %s131 = sphi 0, %s117
    %s135 = sphi 0, %s135
    %s137 = sphi 0, %s135
    %s138 = sphi 0, %s137
    %s152 = sphi 0, %s138
    %s156 = sphi 0, %s156
    %s158 = sphi 0, %s156
    %s159 = sphi 0, %s158
    %s173 = sphi 0, %s159
    %s177 = sphi 0, %s177
    %s179 = sphi 0, %s177
    %s180 = sphi 0, %s179
    %s194 = sphi 0, %s180
    %s200 = sphi 0, %s202
    %s203 = sphi 0, %s200
    %s204 = sphi 0, %s203
    %s220 = sphi 0, %s204
    %s226 = sphi 0, %s228
    %s229 = sphi 0, %s226
    %s230 = sphi 0, %s229
    %s246 = sphi 0, %s230
    %s252 = sphi 0, %s254
    %s255 = sphi 0, %s252
    %s256 = sphi 0, %s255
    %s272 = sphi 0, %s256
  $region4: #{ga_forward.3} parent=0 // loop_header_branch
    %20 = sbr.rel (%p18) target = $region8
  $region5: #{ga_forward.3} parent=0 // loop_body
    %s22 = ssub.s32 %s17, 1
    %s23 = ssub.s32 %s17, 2
    %s24 = sadd.s32 %s17, 1
    %s25 = ssub.s32 %s17, %s24
    %p26 = scmp.eq.s32.totalorder %s25, 0
    %s28 = sadd.s32 %s27, 1
    %s29 = scalar_select %p26, %s27, %s28
    %p32 = pneg %p26
    %p33 = scmp.eq.s32.totalorder %s17, 1
    %p34 = por %p32, %p33
    %p35 = scmp.ne.s32.totalorder %s27, %s30
    %p36 = scmp.eq.s32.totalorder %s17, 0
    %p37 = por %p35, %p36
    %p38 = scmp.ne.s32.totalorder %s27, %s30
    %p39 = scmp.eq.s32.totalorder %s22, 1
    %p40 = por %p38, %p39
    %p41 = scmp.ne.s32.totalorder %s30, %s31
    %p42 = scmp.eq.s32.totalorder %s22, 0
    %p43 = por %p41, %p42
    %p44 = scmp.ne.s32.totalorder %s30, %s31
    %p45 = scmp.eq.s32.totalorder %s23, 1
    %p46 = por %p44, %p45
    %p48 = scmp.ne.s32.totalorder %s31, %s47
    %p49 = scmp.eq.s32.totalorder %s23, 0
    %p50 = por %p48, %p49
    %s52 = sadd.s32 %s51, 1
    %p55 = scmp.eq.s32.totalorder %s17, 1
    %p56 = scmp.ne.s32.totalorder %s51, %s53
    %p57 = scmp.eq.s32.totalorder %s17, 0
    %p58 = por %p56, %p57
    %p59 = scmp.ne.s32.totalorder %s51, %s53
    %p60 = scmp.eq.s32.totalorder %s22, 1
    %p61 = por %p59, %p60
    %p62 = scmp.ne.s32.totalorder %s53, %s54
    %p63 = scmp.eq.s32.totalorder %s22, 0
    %p64 = por %p62, %p63
    %p65 = scmp.ne.s32.totalorder %s53, %s54
    %p66 = scmp.eq.s32.totalorder %s23, 1
    %p67 = por %p65, %p66
    %p69 = scmp.ne.s32.totalorder %s54, %s68
    %p70 = scmp.eq.s32.totalorder %s23, 0
    %p71 = por %p69, %p70
    %s73 = sadd.s32 %s72, 1
    %p76 = scmp.eq.s32.totalorder %s17, 1
    %p77 = scmp.ne.s32.totalorder %s72, %s74
    %p78 = scmp.eq.s32.totalorder %s17, 0
    %p79 = por %p77, %p78
    %p80 = scmp.ne.s32.totalorder %s72, %s74
    %p81 = scmp.eq.s32.totalorder %s22, 1
    %p82 = por %p80, %p81
    %p83 = scmp.ne.s32.totalorder %s74, %s75
    %p84 = scmp.eq.s32.totalorder %s22, 0
    %p85 = por %p83, %p84
    %p86 = scmp.ne.s32.totalorder %s74, %s75
    %p87 = scmp.eq.s32.totalorder %s23, 1
    %p88 = por %p86, %p87
    %p90 = scmp.ne.s32.totalorder %s75, %s89
    %p91 = scmp.eq.s32.totalorder %s23, 0
    %p92 = por %p90, %p91
    %s94 = sadd.s32 %s93, 1
    %p97 = scmp.eq.s32.totalorder %s17, 1
    %p98 = scmp.ne.s32.totalorder %s93, %s95
    %p99 = scmp.eq.s32.totalorder %s17, 0
    %p100 = por %p98, %p99
    %p101 = scmp.ne.s32.totalorder %s93, %s95
    %p102 = scmp.eq.s32.totalorder %s22, 1
    %p103 = por %p101, %p102
    %p104 = scmp.ne.s32.totalorder %s95, %s96
    %p105 = scmp.eq.s32.totalorder %s22, 0
    %p106 = por %p104, %p105
    %p107 = scmp.ne.s32.totalorder %s95, %s96
    %p108 = scmp.eq.s32.totalorder %s23, 1
    %p109 = por %p107, %p108
    %p111 = scmp.ne.s32.totalorder %s96, %s110
    %p112 = scmp.eq.s32.totalorder %s23, 0
    %p113 = por %p111, %p112
    %s115 = sadd.s32 %s114, 1
    %p118 = scmp.eq.s32.totalorder %s17, 1
    %p119 = scmp.ne.s32.totalorder %s114, %s116
    %p120 = scmp.eq.s32.totalorder %s17, 0
    %p121 = por %p119, %p120
    %p122 = scmp.ne.s32.totalorder %s114, %s116
    %p123 = scmp.eq.s32.totalorder %s22, 1
    %p124 = por %p122, %p123
    %p125 = scmp.ne.s32.totalorder %s116, %s117
    %p126 = scmp.eq.s32.totalorder %s22, 0
    %p127 = por %p125, %p126
    %p128 = scmp.ne.s32.totalorder %s116, %s117
    %p129 = scmp.eq.s32.totalorder %s23, 1
    %p130 = por %p128, %p129
    %p132 = scmp.ne.s32.totalorder %s117, %s131
    %p133 = scmp.eq.s32.totalorder %s23, 0
    %p134 = por %p132, %p133
    %s136 = sadd.s32 %s135, 1
    %p139 = scmp.eq.s32.totalorder %s17, 1
    %p140 = scmp.ne.s32.totalorder %s135, %s137
    %p141 = scmp.eq.s32.totalorder %s17, 0
    %p142 = por %p140, %p141
    %p143 = scmp.ne.s32.totalorder %s135, %s137
    %p144 = scmp.eq.s32.totalorder %s22, 1
    %p145 = por %p143, %p144
    %p146 = scmp.ne.s32.totalorder %s137, %s138
    %p147 = scmp.eq.s32.totalorder %s22, 0
    %p148 = por %p146, %p147
    %p149 = scmp.ne.s32.totalorder %s137, %s138
    %p150 = scmp.eq.s32.totalorder %s23, 1
    %p151 = por %p149, %p150
    %p153 = scmp.ne.s32.totalorder %s138, %s152
    %p154 = scmp.eq.s32.totalorder %s23, 0
    %p155 = por %p153, %p154
    %s157 = sadd.s32 %s156, 1
    %p160 = scmp.eq.s32.totalorder %s17, 1
    %p161 = scmp.ne.s32.totalorder %s156, %s158
    %p162 = scmp.eq.s32.totalorder %s17, 0
    %p163 = por %p161, %p162
    %p164 = scmp.ne.s32.totalorder %s156, %s158
    %p165 = scmp.eq.s32.totalorder %s22, 1
    %p166 = por %p164, %p165
    %p167 = scmp.ne.s32.totalorder %s158, %s159
    %p168 = scmp.eq.s32.totalorder %s22, 0
    %p169 = por %p167, %p168
    %p170 = scmp.ne.s32.totalorder %s158, %s159
    %p171 = scmp.eq.s32.totalorder %s23, 1
    %p172 = por %p170, %p171
    %p174 = scmp.ne.s32.totalorder %s159, %s173
    %p175 = scmp.eq.s32.totalorder %s23, 0
    %p176 = por %p174, %p175
    %s178 = sadd.s32 %s177, 1
    %p181 = scmp.eq.s32.totalorder %s17, 1
    %p182 = scmp.ne.s32.totalorder %s177, %s179
    %p183 = scmp.eq.s32.totalorder %s17, 0
    %p184 = por %p182, %p183
    %p185 = scmp.ne.s32.totalorder %s177, %s179
    %p186 = scmp.eq.s32.totalorder %s22, 1
    %p187 = por %p185, %p186
    %p188 = scmp.ne.s32.totalorder %s179, %s180
    %p189 = scmp.eq.s32.totalorder %s22, 0
    %p190 = por %p188, %p189
    %p191 = scmp.ne.s32.totalorder %s179, %s180
    %p192 = scmp.eq.s32.totalorder %s23, 1
    %p193 = por %p191, %p192
    %p195 = scmp.ne.s32.totalorder %s180, %s194
    %p196 = scmp.eq.s32.totalorder %s23, 0
    %p197 = por %p195, %p196
    %s198 = ssub.s32 %s17, %s24
    %p199 = scmp.eq.s32.totalorder %s198, 0
    %s201 = sadd.s32 %s200, 1
    %s202 = scalar_select %p199, %s200, %s201
    %p205 = pneg %p199
    %p206 = scmp.eq.s32.totalorder %s17, 1
    %p207 = por %p205, %p206
    %p208 = scmp.ne.s32.totalorder %s200, %s203
    %p209 = scmp.eq.s32.totalorder %s17, 0
    %p210 = por %p208, %p209
    %p211 = scmp.ne.s32.totalorder %s200, %s203
    %p212 = scmp.eq.s32.totalorder %s22, 1
    %p213 = por %p211, %p212
    %p214 = scmp.ne.s32.totalorder %s203, %s204
    %p215 = scmp.eq.s32.totalorder %s22, 0
    %p216 = por %p214, %p215
    %p217 = scmp.ne.s32.totalorder %s203, %s204
    %p218 = scmp.eq.s32.totalorder %s23, 1
    %p219 = por %p217, %p218
    %p221 = scmp.ne.s32.totalorder %s204, %s220
    %p222 = scmp.eq.s32.totalorder %s23, 0
    %p223 = por %p221, %p222
    %s224 = ssub.s32 %s17, %s24
    %p225 = scmp.eq.s32.totalorder %s224, 0
    %s227 = sadd.s32 %s226, 1
    %s228 = scalar_select %p225, %s226, %s227
    %p231 = pneg %p225
    %p232 = scmp.eq.s32.totalorder %s17, 1
    %p233 = por %p231, %p232
    %p234 = scmp.ne.s32.totalorder %s226, %s229
    %p235 = scmp.eq.s32.totalorder %s17, 0
    %p236 = por %p234, %p235
    %p237 = scmp.ne.s32.totalorder %s226, %s229
    %p238 = scmp.eq.s32.totalorder %s22, 1
    %p239 = por %p237, %p238
    %p240 = scmp.ne.s32.totalorder %s229, %s230
    %p241 = scmp.eq.s32.totalorder %s22, 0
    %p242 = por %p240, %p241
    %p243 = scmp.ne.s32.totalorder %s229, %s230
    %p244 = scmp.eq.s32.totalorder %s23, 1
    %p245 = por %p243, %p244
    %p247 = scmp.ne.s32.totalorder %s230, %s246
    %p248 = scmp.eq.s32.totalorder %s23, 0
    %p249 = por %p247, %p248
    %s250 = ssub.s32 %s17, %s24
    %p251 = scmp.eq.s32.totalorder %s250, 0
    %s253 = sadd.s32 %s252, 1
    %s254 = scalar_select %p251, %s252, %s253
    %p257 = pneg %p251
    %p258 = scmp.eq.s32.totalorder %s17, 1
    %p259 = por %p257, %p258
    %p260 = scmp.ne.s32.totalorder %s252, %s255
    %p261 = scmp.eq.s32.totalorder %s17, 0
    %p262 = por %p260, %p261
    %p263 = scmp.ne.s32.totalorder %s252, %s255
    %p264 = scmp.eq.s32.totalorder %s22, 1
    %p265 = por %p263, %p264
    %p266 = scmp.ne.s32.totalorder %s255, %s256
    %p267 = scmp.eq.s32.totalorder %s22, 0
    %p268 = por %p266, %p267
    %p269 = scmp.ne.s32.totalorder %s255, %s256
    %p270 = scmp.eq.s32.totalorder %s23, 1
    %p271 = por %p269, %p270
    %p273 = scmp.ne.s32.totalorder %s256, %s272
    %p274 = scmp.eq.s32.totalorder %s23, 0
    %p275 = por %p273, %p274
    %p276 = scmp.le.s32.totalorder 1, %s17
    %p277 = scmp.lt.s32.totalorder %s17, 3
    %p278 = pnand %p276, %p277
    %p279 = pneg %p278
    // Predicated region
    $region9: #{ga_forward.3} parent=5 // pred_check
      _
    $region10: #{ga_forward.3} parent=5 // pred_check_branch
      %281 = sbr.rel (%p278) target = $region12
    $region11: #{ga_forward.3} parent=5 // pred_region
      %s282 = ssub.s32 %s17, 1
      // Predicated region
      $region13: #{ga_forward.3} parent=11 // pred_check
        %p283 = pneg %p64
      $region14: #{ga_forward.3} parent=11 // pred_check_branch
        %285 = sbr.rel (%p283) target = $region16
      $region15: #{ga_forward.3} parent=11 // pred_region
        _
      $region16: #{ga_forward.3} parent=11 // pred_fallthru
        _
      // Predicated region
      $region17: #{ga_forward.3} parent=11 // pred_check
        %p286 = pneg %p85
      $region18: #{ga_forward.3} parent=11 // pred_check_branch
        %288 = sbr.rel (%p286) target = $region20
      $region19: #{ga_forward.3} parent=11 // pred_region
        _
      $region20: #{ga_forward.3} parent=11 // pred_fallthru
        _
      // Predicated region
      $region21: #{ga_forward.3} parent=11 // pred_check
        %p289 = pneg %p106
      $region22: #{ga_forward.3} parent=11 // pred_check_branch
        %291 = sbr.rel (%p289) target = $region24
      $region23: #{ga_forward.3} parent=11 // pred_region
        _
      $region24: #{ga_forward.3} parent=11 // pred_fallthru
        _
      // Predicated region
      $region25: #{ga_forward.3} parent=11 // pred_check
        %p292 = pneg %p127
      $region26: #{ga_forward.3} parent=11 // pred_check_branch
        %294 = sbr.rel (%p292) target = $region28
      $region27: #{ga_forward.3} parent=11 // pred_region
        _
      $region28: #{ga_forward.3} parent=11 // pred_fallthru
        _
      // Predicated region
      $region29: #{ga_forward.3} parent=11 // pred_check
        %p295 = pneg %p148
      $region30: #{ga_forward.3} parent=11 // pred_check_branch
        %297 = sbr.rel (%p295) target = $region32
      $region31: #{ga_forward.3} parent=11 // pred_region
        _
      $region32: #{ga_forward.3} parent=11 // pred_fallthru
        _
      // Predicated region
      $region33: #{ga_forward.3} parent=11 // pred_check
        %p298 = pneg %p169
      $region34: #{ga_forward.3} parent=11 // pred_check_branch
        %300 = sbr.rel (%p298) target = $region36
      $region35: #{ga_forward.3} parent=11 // pred_region
        _
      $region36: #{ga_forward.3} parent=11 // pred_fallthru
        _
      // Predicated region
      $region37: #{ga_forward.3} parent=11 // pred_check
        %p301 = pneg %p190
      $region38: #{ga_forward.3} parent=11 // pred_check_branch
        %303 = sbr.rel (%p301) target = $region40
      $region39: #{ga_forward.3} parent=11 // pred_region
        _
      $region40: #{ga_forward.3} parent=11 // pred_fallthru
        _
    $region12: #{ga_forward.3} parent=5 // pred_fallthru
      _
    %p304 = scmp.lt.s32.totalorder %s17, 2
    // Predicated region
    $region41: #{ga_forward.3} parent=5 // pred_check
      %p305 = pneg %p304
    $region42: #{ga_forward.3} parent=5 // pred_check_branch
      %307 = sbr.rel (%p305) target = $region44
    $region43: #{ga_forward.3} parent=5 // pred_region
      // Predicated region
      $region45: #{ga_forward.3} parent=43 // pred_check
        %p308 = pneg %p37
      $region46: #{ga_forward.3} parent=43 // pred_check_branch
        %310 = sbr.rel (%p308) target = $region48
      $region47: #{ga_forward.3} parent=43 // pred_region
        %p311 = scmp.lt.s32.totalorder %s17, 1
        %s312 = scalar_select %p311, %s17, 1
        %s313 = smul.addr %s312, 4
        %s314 = smul.addr %s313, 8
        %s315 = scalar_lea.vmem %s0, %s314
      $region48: #{ga_forward.3} parent=43 // pred_fallthru
        _
    $region44: #{ga_forward.3} parent=5 // pred_fallthru
      _
    %p316 = scmp.le.s32.totalorder 1, %s17
    %p317 = scmp.lt.s32.totalorder %s17, 3
    %p318 = pnand %p316, %p317
    %p319 = pneg %p318
    // Predicated region
    $region49: #{ga_forward.3} parent=5 // pred_check
      _
    $region50: #{ga_forward.3} parent=5 // pred_check_branch
      %321 = sbr.rel (%p318) target = $region52
    $region51: #{ga_forward.3} parent=5 // pred_region
      %s322 = ssub.s32 %s17, 1
      %p323 = scmp.lt.s32.totalorder %s22, 1
      %s324 = scalar_select %p323, %s22, 1
      %s325 = smul.addr %s324, 4
      %s326 = smul.addr %s325, 8
      %s327 = scalar_lea.vmem %s0, %s326
      %p328 = pneg %p43
      %p329 = pneg %p40
      %p330 = pneg %p64
      %p331 = pneg %p61
      %p332 = pneg %p85
      %p333 = pneg %p82
      %p334 = pneg %p106
      %p335 = pneg %p103
      %p336 = pneg %p127
      %p337 = pneg %p124
      %p338 = pneg %p148
      %p339 = pneg %p145
      %p340 = pneg %p169
      %p341 = pneg %p166
      %p342 = pneg %p190
      %p343 = pneg %p187
      %p344 = pneg %p216
      %p345 = pneg %p213
      %p346 = scmp.lt.s32.totalorder %s22, 1
      %s347 = scalar_select %p346, %s22, 1
      %s348 = smul.addr %s347, 3
      %s349 = smul.addr %s348, 8
      %s350 = scalar_lea.vmem %s8, %s349
      %p351 = pneg %p242
      %p352 = pneg %p239
      %p353 = scmp.lt.s32.totalorder %s22, 1
      %s354 = scalar_select %p353, %s22, 1
      %s355 = smul.addr %s354, 4
      %s356 = smul.addr %s355, 8
      %s357 = scalar_lea.vmem %s9, %s356
      %p358 = pneg %p268
      %p359 = pneg %p265
      %p360 = scmp.lt.s32.totalorder %s22, 1
      %s361 = scalar_select %p360, %s22, 1
      %s362 = smul.addr %s361, 8
      %s363 = scalar_lea.vmem %s10, %s362
      %p364 = scmp.lt.s32.totalorder %s22, 1
      %s365 = scalar_select %p364, %s22, 1
      %s366 = smul.addr %s365, 4
      %s367 = smul.addr %s366, 8
      %s368 = scalar_lea.vmem %s0, %s367
      %p369 = scmp.lt.s32.totalorder %s22, 1
      %s370 = scalar_select %p369, %s22, 1
      %s371 = smul.addr %s370, 3
      %s372 = smul.addr %s371, 8
      %s373 = scalar_lea.vmem %s8, %s372
      %p374 = scmp.lt.s32.totalorder %s22, 1
      %s375 = scalar_select %p374, %s22, 1
      %s376 = smul.addr %s375, 4
      %s377 = smul.addr %s376, 8
      %s378 = scalar_lea.vmem %s9, %s377
      %p379 = scmp.lt.s32.totalorder %s22, 1
      %s380 = scalar_select %p379, %s22, 1
      %s381 = smul.addr %s380, 8
      %s382 = scalar_lea.vmem %s10, %s381
      %v383 = vld [vmem:[%s368] sm:$0xff]
      %v384 = vld [vmem:[%s368 + $0x8] sm:$0xff]
      %v385 = vld [vmem:[%s368 + $0x10] sm:$0xff]
      %v386 = vld [vmem:[%s368 + $0x18] sm:$0xff]
      %v387 = vld [vmem:[%s1] sm:$0xff]
      %v388 = vld [vmem:[%s2] sm:$0xff]
      %390 = vset.pattern.permute.xlu0 0
      %391 = vperm.xlu0 %390, %v388
      %v392 = vpop.permute.xlu0 %391
      %vm394 = vcmask 64512
      %v396 = vsel %vm394, %v387, 0
      %398 = vmatpush.msra.mxu0 0.0
      %399 = vmatpush.msra.mxu0 0.0
      %400 = vmatpush.msra.mxu0 0.0
      %401 = vmatpush.msra.mxu0 0.0
      %402 = vmatpush.msra.mxu0 0.0
      %403 = vmatpush.msra.mxu0 0.0
      %404 = vmatpush.msra.mxu0 0.0
      %405 = vmatpush.msra.mxu0 0.0
      %406 = vmatpush.msra.mxu0 0.0
      %407 = vmatpush.msra.mxu0 0.0
      %408 = vmatpush.msra.mxu0 0.0
      %409 = vmatpush.msra.mxu0 0.0
      %410 = vmatpush.msra.mxu0 0.0
      %411 = vmatpush.msra.mxu0 0.0
      %412 = vmatpush.msra.mxu0 0.0
      %413 = vmatpush.msra.mxu0 %v383
      %414 = vmatmul.f32.gmra.mxu0 %v396
      %v415 = vpop.f32.mrf.mxu0
      %v416 = vadd.f32 %v392, %v415
      %417 = vdwg.mxu0
      %418 = vmatpush.msra.mxu0 0.0
      %419 = vmatpush.msra.mxu0 0.0
      %420 = vmatpush.msra.mxu0 0.0
      %421 = vmatpush.msra.mxu0 0.0
      %422 = vmatpush.msra.mxu0 0.0
      %423 = vmatpush.msra.mxu0 0.0
      %424 = vmatpush.msra.mxu0 0.0
      %425 = vmatpush.msra.mxu0 0.0
      %426 = vmatpush.msra.mxu0 0.0
      %427 = vmatpush.msra.mxu0 0.0
      %428 = vmatpush.msra.mxu0 0.0
      %429 = vmatpush.msra.mxu0 0.0
      %430 = vmatpush.msra.mxu0 0.0
      %431 = vmatpush.msra.mxu0 0.0
      %432 = vmatpush.msra.mxu0 0.0
      %433 = vmatpush.msra.mxu0 %v384
      %434 = vmatmul.f32.gmra.mxu0 %v396
      %v435 = vpop.f32.mrf.mxu0
      %v436 = vadd.f32 %v392, %v435
      %437 = vdwg.mxu0
      %438 = vmatpush.msra.mxu0 0.0
      %439 = vmatpush.msra.mxu0 0.0
      %440 = vmatpush.msra.mxu0 0.0
      %441 = vmatpush.msra.mxu0 0.0
      %442 = vmatpush.msra.mxu0 0.0
      %443 = vmatpush.msra.mxu0 0.0
      %444 = vmatpush.msra.mxu0 0.0
      %445 = vmatpush.msra.mxu0 0.0
      %446 = vmatpush.msra.mxu0 0.0
      %447 = vmatpush.msra.mxu0 0.0
      %448 = vmatpush.msra.mxu0 0.0
      %449 = vmatpush.msra.mxu0 0.0
      %450 = vmatpush.msra.mxu0 0.0
      %451 = vmatpush.msra.mxu0 0.0
      %452 = vmatpush.msra.mxu0 0.0
      %453 = vmatpush.msra.mxu0 %v385
      %454 = vmatmul.f32.gmra.mxu0 %v396
      %v455 = vpop.f32.mrf.mxu0
      %v456 = vadd.f32 %v392, %v455
      %457 = vdwg.mxu0
      %458 = vmatpush.msra.mxu0 0.0
      %459 = vmatpush.msra.mxu0 0.0
      %460 = vmatpush.msra.mxu0 0.0
      %461 = vmatpush.msra.mxu0 0.0
      %462 = vmatpush.msra.mxu0 0.0
      %463 = vmatpush.msra.mxu0 0.0
      %464 = vmatpush.msra.mxu0 0.0
      %465 = vmatpush.msra.mxu0 0.0
      %466 = vmatpush.msra.mxu0 0.0
      %467 = vmatpush.msra.mxu0 0.0
      %468 = vmatpush.msra.mxu0 0.0
      %469 = vmatpush.msra.mxu0 0.0
      %470 = vmatpush.msra.mxu0 0.0
      %471 = vmatpush.msra.mxu0 0.0
      %472 = vmatpush.msra.mxu0 0.0
      %473 = vmatpush.msra.mxu0 %v386
      %474 = vmatmul.f32.gmra.mxu0 %v396
      %v475 = vpop.f32.mrf.mxu0
      %v476 = vadd.f32 %v392, %v475
      %477 = vdwg.mxu0
      %v478 = vmax.f32 %v416, 0.0
      %v479 = vmax.f32 %v436, 0.0
      %v480 = vmax.f32 %v456, 0.0
      %v481 = vmax.f32 %v476, 0.0
      %v482 = vld [vmem:[%s3] sm:$0xff]
      %v483 = vld [vmem:[%s4] sm:$0xff]
      %485 = vset.pattern.permute.xlu0 0
      %486 = vperm.xlu0 %485, %v483
      %v487 = vpop.permute.xlu0 %486
      %v490 = vsel %vm394, %v482, 0
      %492 = vmatpush.msra.mxu0 0.0
      %493 = vmatpush.msra.mxu0 0.0
      %494 = vmatpush.msra.mxu0 0.0
      %495 = vmatpush.msra.mxu0 0.0
      %496 = vmatpush.msra.mxu0 0.0
      %497 = vmatpush.msra.mxu0 0.0
      %498 = vmatpush.msra.mxu0 0.0
      %499 = vmatpush.msra.mxu0 0.0
      %500 = vmatpush.msra.mxu0 0.0
      %501 = vmatpush.msra.mxu0 0.0
      %502 = vmatpush.msra.mxu0 0.0
      %503 = vmatpush.msra.mxu0 0.0
      %504 = vmatpush.msra.mxu0 0.0
      %505 = vmatpush.msra.mxu0 0.0
      %506 = vmatpush.msra.mxu0 0.0
      %507 = vmatpush.msra.mxu0 %v478
      %508 = vmatmul.f32.gmra.mxu0 %v490
      %v509 = vpop.f32.mrf.mxu0
      %v510 = vadd.f32 %v487, %v509
      %511 = vdwg.mxu0
      %512 = vmatpush.msra.mxu0 0.0
      %513 = vmatpush.msra.mxu0 0.0
      %514 = vmatpush.msra.mxu0 0.0
      %515 = vmatpush.msra.mxu0 0.0
      %516 = vmatpush.msra.mxu0 0.0
      %517 = vmatpush.msra.mxu0 0.0
      %518 = vmatpush.msra.mxu0 0.0
      %519 = vmatpush.msra.mxu0 0.0
      %520 = vmatpush.msra.mxu0 0.0
      %521 = vmatpush.msra.mxu0 0.0
      %522 = vmatpush.msra.mxu0 0.0
      %523 = vmatpush.msra.mxu0 0.0
      %524 = vmatpush.msra.mxu0 0.0
      %525 = vmatpush.msra.mxu0 0.0
      %526 = vmatpush.msra.mxu0 0.0
      %527 = vmatpush.msra.mxu0 %v479
      %528 = vmatmul.f32.gmra.mxu0 %v490
      %v529 = vpop.f32.mrf.mxu0
      %v530 = vadd.f32 %v487, %v529
      %531 = vdwg.mxu0
      %532 = vmatpush.msra.mxu0 0.0
      %533 = vmatpush.msra.mxu0 0.0
      %534 = vmatpush.msra.mxu0 0.0
      %535 = vmatpush.msra.mxu0 0.0
      %536 = vmatpush.msra.mxu0 0.0
      %537 = vmatpush.msra.mxu0 0.0
      %538 = vmatpush.msra.mxu0 0.0
      %539 = vmatpush.msra.mxu0 0.0
      %540 = vmatpush.msra.mxu0 0.0
      %541 = vmatpush.msra.mxu0 0.0
      %542 = vmatpush.msra.mxu0 0.0
      %543 = vmatpush.msra.mxu0 0.0
      %544 = vmatpush.msra.mxu0 0.0
      %545 = vmatpush.msra.mxu0 0.0
      %546 = vmatpush.msra.mxu0 0.0
      %547 = vmatpush.msra.mxu0 %v480
      %548 = vmatmul.f32.gmra.mxu0 %v490
      %v549 = vpop.f32.mrf.mxu0
      %v550 = vadd.f32 %v487, %v549
      %551 = vdwg.mxu0
      %552 = vmatpush.msra.mxu0 0.0
      %553 = vmatpush.msra.mxu0 0.0
      %554 = vmatpush.msra.mxu0 0.0
      %555 = vmatpush.msra.mxu0 0.0
      %556 = vmatpush.msra.mxu0 0.0
      %557 = vmatpush.msra.mxu0 0.0
      %558 = vmatpush.msra.mxu0 0.0
      %559 = vmatpush.msra.mxu0 0.0
      %560 = vmatpush.msra.mxu0 0.0
      %561 = vmatpush.msra.mxu0 0.0
      %562 = vmatpush.msra.mxu0 0.0
      %563 = vmatpush.msra.mxu0 0.0
      %564 = vmatpush.msra.mxu0 0.0
      %565 = vmatpush.msra.mxu0 0.0
      %566 = vmatpush.msra.mxu0 0.0
      %567 = vmatpush.msra.mxu0 %v481
      %568 = vmatmul.f32.gmra.mxu0 %v490
      %v569 = vpop.f32.mrf.mxu0
      %v570 = vadd.f32 %v487, %v569
      %571 = vdwg.mxu0
      %v572 = vmul.f32 %v383, %v510
      %v573 = vmul.f32 %v384, %v530
      %v574 = vmul.f32 %v385, %v550
      %v575 = vmul.f32 %v386, %v570
      %580 = vrot.lane.b32.xlu0 %v572, 59
      %v581 = vpop.permute.xlu0 %580
      %582 = vrot.lane.b32.xlu0 %v573, 59
      %v583 = vpop.permute.xlu0 %582
      %584 = vrot.lane.b32.xlu0 %v574, 59
      %v585 = vpop.permute.xlu0 %584
      %586 = vrot.lane.b32.xlu0 %v575, 59
      %v587 = vpop.permute.xlu0 %586
      %vm588 = vcmask 482304
      %v589 = vsel %vm588, %v581, %v583
      %v590 = vsel %vm588, %v583, %v585
      %v591 = vsel %vm588, %v585, %v587
      %595 = vst [vmem:[%s373] sm:$0xff] %v589
      %596 = vst [vmem:[%s373 + $0x8] sm:$0xff] %v590
      %vm597 = vcmask 785408
      %598 = vst.msk [vmem:[%s373 + $0x10] sm:$0xff] %vm597, %v591
      %v599 = vld [vmem:[%s5] sm:$0xff]
      %v600 = vld [vmem:[%s5 + $0x8] sm:$0xff]
      %v601 = vld [vmem:[%s5 + $0x10] sm:$0xff]
      %v602 = vld [vmem:[%s5 + $0x18] sm:$0xff]
      %v603 = vld [vmem:[%s6] sm:$0xff]
      %vm604 = vcmask 818176
      %v605 = vsel %vm604, %v575, 0.0
      %606 = vrot.lane.b32.xlu0 %v572, 127
      %v607 = vpop.permute.xlu0 %606
      %608 = vrot.lane.b32.xlu0 %v573, 127
      %v609 = vpop.permute.xlu0 %608
      %610 = vrot.lane.b32.xlu0 %v574, 127
      %v611 = vpop.permute.xlu0 %610
      %vm612 = vcmask 1039360
      %v613 = vsel %vm612, %v607, %v609
      %v614 = vsel %vm612, %v609, %v611
      %618 = vrot.lane.b32.xlu0 %v572, 126
      %v619 = vpop.permute.xlu0 %618
      %620 = vrot.lane.b32.xlu0 %v573, 126
      %v621 = vpop.permute.xlu0 %620
      %622 = vrot.lane.b32.xlu0 %v574, 126
      %v623 = vpop.permute.xlu0 %622
      %vm624 = vcmask 1031168
      %v625 = vsel %vm624, %v619, %v621
      %v626 = vsel %vm624, %v621, %v623
      %630 = vrot.lane.b32.xlu0 %v572, 125
      %v631 = vpop.permute.xlu0 %630
      %632 = vrot.lane.b32.xlu0 %v573, 125
      %v633 = vpop.permute.xlu0 %632
      %634 = vrot.lane.b32.xlu0 %v574, 125
      %v635 = vpop.permute.xlu0 %634
      %vm636 = vcmask 1022976
      %v637 = vsel %vm636, %v631, %v633
      %v638 = vsel %vm636, %v633, %v635
      %642 = vrot.lane.b32.xlu0 %v572, 124
      %v643 = vpop.permute.xlu0 %642
      %644 = vrot.lane.b32.xlu0 %v573, 124
      %v645 = vpop.permute.xlu0 %644
      %646 = vrot.lane.b32.xlu0 %v574, 124
      %v647 = vpop.permute.xlu0 %646
      %vm648 = vcmask 1014784
      %v649 = vsel %vm648, %v643, %v645
      %v650 = vsel %vm648, %v645, %v647
      %654 = vrot.lane.b32.xlu0 %v572, 123
      %v655 = vpop.permute.xlu0 %654
      %656 = vrot.lane.b32.xlu0 %v573, 123
      %v657 = vpop.permute.xlu0 %656
      %658 = vrot.lane.b32.xlu0 %v574, 123
      %v659 = vpop.permute.xlu0 %658
      %vm660 = vcmask 1006592
      %v661 = vsel %vm660, %v655, %v657
      %v662 = vsel %vm660, %v657, %v659
      %666 = vrot.lane.b32.xlu0 %v572, 122
      %v667 = vpop.permute.xlu0 %666
      %668 = vrot.lane.b32.xlu0 %v573, 122
      %v669 = vpop.permute.xlu0 %668
      %670 = vrot.lane.b32.xlu0 %v574, 122
      %v671 = vpop.permute.xlu0 %670
      %vm672 = vcmask 998400
      %v673 = vsel %vm672, %v667, %v669
      %v674 = vsel %vm672, %v669, %v671
      %678 = vrot.lane.b32.xlu0 %v572, 106
      %v679 = vpop.permute.xlu0 %678
      %680 = vrot.lane.b32.xlu0 %v573, 106
      %v681 = vpop.permute.xlu0 %680
      %682 = vrot.lane.b32.xlu0 %v574, 106
      %v683 = vpop.permute.xlu0 %682
      %vm684 = vcmask 867328
      %v685 = vsel %vm684, %v679, %v681
      %v686 = vsel %vm684, %v681, %v683
      %690 = vrot.lane.b32.xlu0 %v572, 105
      %v691 = vpop.permute.xlu0 %690
      %692 = vrot.lane.b32.xlu0 %v573, 105
      %v693 = vpop.permute.xlu0 %692
      %694 = vrot.lane.b32.xlu0 %v574, 105
      %v695 = vpop.permute.xlu0 %694
      %vm696 = vcmask 859136
      %v697 = vsel %vm696, %v691, %v693
      %v698 = vsel %vm696, %v693, %v695
      %702 = vrot.lane.b32.xlu0 %v572, 104
      %v703 = vpop.permute.xlu0 %702
      %704 = vrot.lane.b32.xlu0 %v573, 104
      %v705 = vpop.permute.xlu0 %704
      %706 = vrot.lane.b32.xlu0 %v574, 104
      %v707 = vpop.permute.xlu0 %706
      %vm708 = vcmask 850944
      %v709 = vsel %vm708, %v703, %v705
      %v710 = vsel %vm708, %v705, %v707
      %714 = vrot.lane.b32.xlu0 %v572, 103
      %v715 = vpop.permute.xlu0 %714
      %716 = vrot.lane.b32.xlu0 %v573, 103
      %v717 = vpop.permute.xlu0 %716
      %718 = vrot.lane.b32.xlu0 %v574, 103
      %v719 = vpop.permute.xlu0 %718
      %vm720 = vcmask 842752
      %v721 = vsel %vm720, %v715, %v717
      %v722 = vsel %vm720, %v717, %v719
      %726 = vrot.lane.b32.xlu0 %v572, 102
      %v727 = vpop.permute.xlu0 %726
      %728 = vrot.lane.b32.xlu0 %v573, 102
      %v729 = vpop.permute.xlu0 %728
      %730 = vrot.lane.b32.xlu0 %v574, 102
      %v731 = vpop.permute.xlu0 %730
      %vm732 = vcmask 834560
      %v733 = vsel %vm732, %v727, %v729
      %v734 = vsel %vm732, %v729, %v731
      %738 = vrot.lane.b32.xlu0 %v572, 101
      %v739 = vpop.permute.xlu0 %738
      %740 = vrot.lane.b32.xlu0 %v573, 101
      %v741 = vpop.permute.xlu0 %740
      %742 = vrot.lane.b32.xlu0 %v574, 101
      %v743 = vpop.permute.xlu0 %742
      %vm744 = vcmask 826368
      %v745 = vsel %vm744, %v739, %v741
      %v746 = vsel %vm744, %v741, %v743
      %750 = vrot.lane.b32.xlu0 %v572, 100
      %v751 = vpop.permute.xlu0 %750
      %752 = vrot.lane.b32.xlu0 %v573, 100
      %v753 = vpop.permute.xlu0 %752
      %754 = vrot.lane.b32.xlu0 %v574, 100
      %v755 = vpop.permute.xlu0 %754
      %v756 = vsel %vm604, %v751, %v753
      %v757 = vsel %vm604, %v753, %v755
      %762 = vrot.lane.b32.xlu0 %v572, 84
      %v763 = vpop.permute.xlu0 %762
      %764 = vrot.lane.b32.xlu0 %v573, 84
      %v765 = vpop.permute.xlu0 %764
      %766 = vrot.lane.b32.xlu0 %v574, 84
      %v767 = vpop.permute.xlu0 %766
      %768 = vrot.lane.b32.xlu0 %v605, 84
      %v769 = vpop.permute.xlu0 %768
      %vm770 = vcmask 687104
      %v771 = vsel %vm770, %v763, %v765
      %v772 = vsel %vm770, %v765, %v767
      %v773 = vsel %vm770, %v767, %v769
      %777 = vrot.lane.b32.xlu0 %v572, 83
      %v778 = vpop.permute.xlu0 %777
      %779 = vrot.lane.b32.xlu0 %v573, 83
      %v780 = vpop.permute.xlu0 %779
      %781 = vrot.lane.b32.xlu0 %v574, 83
      %v782 = vpop.permute.xlu0 %781
      %783 = vrot.lane.b32.xlu0 %v605, 83
      %v784 = vpop.permute.xlu0 %783
      %vm785 = vcmask 678912
      %v786 = vsel %vm785, %v778, %v780
      %v787 = vsel %vm785, %v780, %v782
      %v788 = vsel %vm785, %v782, %v784
      %792 = vrot.lane.b32.xlu0 %v605, 127
      %v793 = vpop.permute.xlu0 %792
      %v794 = vsel %vm612, %v611, %v793
      %795 = vrot.lane.b32.xlu0 %v605, 126
      %v796 = vpop.permute.xlu0 %795
      %v797 = vsel %vm624, %v623, %v796
      %798 = vrot.lane.b32.xlu0 %v605, 125
      %v799 = vpop.permute.xlu0 %798
      %v800 = vsel %vm636, %v635, %v799
      %801 = vrot.lane.b32.xlu0 %v605, 124
      %v802 = vpop.permute.xlu0 %801
      %v803 = vsel %vm648, %v647, %v802
      %804 = vrot.lane.b32.xlu0 %v572, 108
      %v805 = vpop.permute.xlu0 %804
      %806 = vrot.lane.b32.xlu0 %v573, 108
      %v807 = vpop.permute.xlu0 %806
      %808 = vrot.lane.b32.xlu0 %v574, 108
      %v809 = vpop.permute.xlu0 %808
      %810 = vrot.lane.b32.xlu0 %v605, 108
      %v811 = vpop.permute.xlu0 %810
      %vm812 = vcmask 883712
      %v813 = vsel %vm812, %v805, %v807
      %v814 = vsel %vm812, %v807, %v809
      %v815 = vsel %vm812, %v809, %v811
      %816 = vrot.lane.b32.xlu0 %v572, 107
      %v817 = vpop.permute.xlu0 %816
      %818 = vrot.lane.b32.xlu0 %v573, 107
      %v819 = vpop.permute.xlu0 %818
      %820 = vrot.lane.b32.xlu0 %v574, 107
      %v821 = vpop.permute.xlu0 %820
      %822 = vrot.lane.b32.xlu0 %v605, 107
      %v823 = vpop.permute.xlu0 %822
      %vm824 = vcmask 875520
      %v825 = vsel %vm824, %v817, %v819
      %v826 = vsel %vm824, %v819, %v821
      %v827 = vsel %vm824, %v821, %v823
      %828 = vrot.lane.b32.xlu0 %v605, 106
      %v829 = vpop.permute.xlu0 %828
      %v830 = vsel %vm684, %v683, %v829
      %831 = vrot.lane.b32.xlu0 %v605, 105
      %v832 = vpop.permute.xlu0 %831
      %v833 = vsel %vm696, %v695, %v832
      %834 = vrot.lane.b32.xlu0 %v605, 104
      %v835 = vpop.permute.xlu0 %834
      %v836 = vsel %vm708, %v707, %v835
      %837 = vrot.lane.b32.xlu0 %v605, 103
      %v838 = vpop.permute.xlu0 %837
      %v839 = vsel %vm720, %v719, %v838
      %840 = vrot.lane.b32.xlu0 %v605, 102
      %v841 = vpop.permute.xlu0 %840
      %v842 = vsel %vm732, %v731, %v841
      %843 = vrot.lane.b32.xlu0 %v572, 86
      %v844 = vpop.permute.xlu0 %843
      %845 = vrot.lane.b32.xlu0 %v573, 86
      %v846 = vpop.permute.xlu0 %845
      %847 = vrot.lane.b32.xlu0 %v574, 86
      %v848 = vpop.permute.xlu0 %847
      %849 = vrot.lane.b32.xlu0 %v605, 86
      %v850 = vpop.permute.xlu0 %849
      %vm851 = vcmask 703488
      %v852 = vsel %vm851, %v844, %v846
      %v853 = vsel %vm851, %v846, %v848
      %v854 = vsel %vm851, %v848, %v850
      %855 = vrot.lane.b32.xlu0 %v572, 85
      %v856 = vpop.permute.xlu0 %855
      %857 = vrot.lane.b32.xlu0 %v573, 85
      %v858 = vpop.permute.xlu0 %857
      %859 = vrot.lane.b32.xlu0 %v574, 85
      %v860 = vpop.permute.xlu0 %859
      %861 = vrot.lane.b32.xlu0 %v605, 85
      %v862 = vpop.permute.xlu0 %861
      %vm863 = vcmask 695296
      %v864 = vsel %vm863, %v856, %v858
      %v865 = vsel %vm863, %v858, %v860
      %v866 = vsel %vm863, %v860, %v862
      %867 = vrot.lane.b32.xlu0 %v572, 110
      %v868 = vpop.permute.xlu0 %867
      %869 = vrot.lane.b32.xlu0 %v573, 110
      %v870 = vpop.permute.xlu0 %869
      %871 = vrot.lane.b32.xlu0 %v574, 110
      %v872 = vpop.permute.xlu0 %871
      %873 = vrot.lane.b32.xlu0 %v605, 110
      %v874 = vpop.permute.xlu0 %873
      %vm875 = vcmask 900096
      %v876 = vsel %vm875, %v868, %v870
      %v877 = vsel %vm875, %v870, %v872
      %v878 = vsel %vm875, %v872, %v874
      %879 = vrot.lane.b32.xlu0 %v572, 109
      %v880 = vpop.permute.xlu0 %879
      %881 = vrot.lane.b32.xlu0 %v573, 109
      %v882 = vpop.permute.xlu0 %881
      %883 = vrot.lane.b32.xlu0 %v574, 109
      %v884 = vpop.permute.xlu0 %883
      %885 = vrot.lane.b32.xlu0 %v605, 109
      %v886 = vpop.permute.xlu0 %885
      %vm887 = vcmask 891904
      %v888 = vsel %vm887, %v880, %v882
      %v889 = vsel %vm887, %v882, %v884
      %v890 = vsel %vm887, %v884, %v886
      %891 = vrot.lane.b32.xlu0 %v573, 88
      %v892 = vpop.permute.xlu0 %891
      %893 = vrot.lane.b32.xlu0 %v574, 88
      %v894 = vpop.permute.xlu0 %893
      %895 = vrot.lane.b32.xlu0 %v605, 88
      %v896 = vpop.permute.xlu0 %895
      %vm897 = vcmask 719872
      %v898 = vsel %vm897, %v892, %v894
      %v899 = vsel %vm897, %v894, %v896
      %900 = vrot.lane.b32.xlu0 %v573, 87
      %v901 = vpop.permute.xlu0 %900
      %902 = vrot.lane.b32.xlu0 %v574, 87
      %v903 = vpop.permute.xlu0 %902
      %904 = vrot.lane.b32.xlu0 %v605, 87
      %v905 = vpop.permute.xlu0 %904
      %vm906 = vcmask 711680
      %v907 = vsel %vm906, %v901, %v903
      %v908 = vsel %vm906, %v903, %v905
      %909 = vrot.lane.b32.xlu0 %v572, 82
      %v910 = vpop.permute.xlu0 %909
      %911 = vrot.lane.b32.xlu0 %v573, 82
      %v912 = vpop.permute.xlu0 %911
      %913 = vrot.lane.b32.xlu0 %v574, 82
      %v914 = vpop.permute.xlu0 %913
      %915 = vrot.lane.b32.xlu0 %v605, 82
      %v916 = vpop.permute.xlu0 %915
      %917 = vrot.lane.b32.xlu0 %v613, 82
      %v918 = vpop.permute.xlu0 %917
      %919 = vrot.lane.b32.xlu0 %v614, 82
      %v920 = vpop.permute.xlu0 %919
      %921 = vrot.lane.b32.xlu0 %v794, 82
      %v922 = vpop.permute.xlu0 %921
      %923 = vrot.lane.b32.xlu0 %v793, 82
      %v924 = vpop.permute.xlu0 %923
      %925 = vrot.lane.b32.xlu0 %v625, 82
      %v926 = vpop.permute.xlu0 %925
      %927 = vrot.lane.b32.xlu0 %v626, 82
      %v928 = vpop.permute.xlu0 %927
      %929 = vrot.lane.b32.xlu0 %v797, 82
      %v930 = vpop.permute.xlu0 %929
      %931 = vrot.lane.b32.xlu0 %v796, 82
      %v932 = vpop.permute.xlu0 %931
      %933 = vrot.lane.b32.xlu0 %v637, 82
      %v934 = vpop.permute.xlu0 %933
      %935 = vrot.lane.b32.xlu0 %v638, 82
      %v936 = vpop.permute.xlu0 %935
      %937 = vrot.lane.b32.xlu0 %v800, 82
      %v938 = vpop.permute.xlu0 %937
      %939 = vrot.lane.b32.xlu0 %v799, 82
      %v940 = vpop.permute.xlu0 %939
      %941 = vrot.lane.b32.xlu0 %v649, 82
      %v942 = vpop.permute.xlu0 %941
      %943 = vrot.lane.b32.xlu0 %v650, 82
      %v944 = vpop.permute.xlu0 %943
      %945 = vrot.lane.b32.xlu0 %v803, 82
      %v946 = vpop.permute.xlu0 %945
      %947 = vrot.lane.b32.xlu0 %v802, 82
      %v948 = vpop.permute.xlu0 %947
      %949 = vrot.lane.b32.xlu0 %v813, 82
      %v950 = vpop.permute.xlu0 %949
      %951 = vrot.lane.b32.xlu0 %v814, 82
      %v952 = vpop.permute.xlu0 %951
      %953 = vrot.lane.b32.xlu0 %v815, 82
      %v954 = vpop.permute.xlu0 %953
      %955 = vrot.lane.b32.xlu0 %v811, 82
      %v956 = vpop.permute.xlu0 %955
      %957 = vrot.lane.b32.xlu0 %v825, 82
      %v958 = vpop.permute.xlu0 %957
      %959 = vrot.lane.b32.xlu0 %v826, 82
      %v960 = vpop.permute.xlu0 %959
      %961 = vrot.lane.b32.xlu0 %v827, 82
      %v962 = vpop.permute.xlu0 %961
      %963 = vrot.lane.b32.xlu0 %v823, 82
      %v964 = vpop.permute.xlu0 %963
      %965 = vrot.lane.b32.xlu0 %v685, 82
      %v966 = vpop.permute.xlu0 %965
      %967 = vrot.lane.b32.xlu0 %v686, 82
      %v968 = vpop.permute.xlu0 %967
      %969 = vrot.lane.b32.xlu0 %v830, 82
      %v970 = vpop.permute.xlu0 %969
      %971 = vrot.lane.b32.xlu0 %v829, 82
      %v972 = vpop.permute.xlu0 %971
      %973 = vrot.lane.b32.xlu0 %v697, 82
      %v974 = vpop.permute.xlu0 %973
      %975 = vrot.lane.b32.xlu0 %v698, 82
      %v976 = vpop.permute.xlu0 %975
      %977 = vrot.lane.b32.xlu0 %v833, 82
      %v978 = vpop.permute.xlu0 %977
      %979 = vrot.lane.b32.xlu0 %v832, 82
      %v980 = vpop.permute.xlu0 %979
      %981 = vrot.lane.b32.xlu0 %v709, 82
      %v982 = vpop.permute.xlu0 %981
      %983 = vrot.lane.b32.xlu0 %v710, 82
      %v984 = vpop.permute.xlu0 %983
      %985 = vrot.lane.b32.xlu0 %v836, 82
      %v986 = vpop.permute.xlu0 %985
      %987 = vrot.lane.b32.xlu0 %v835, 82
      %v988 = vpop.permute.xlu0 %987
      %989 = vrot.lane.b32.xlu0 %v721, 82
      %v990 = vpop.permute.xlu0 %989
      %991 = vrot.lane.b32.xlu0 %v722, 82
      %v992 = vpop.permute.xlu0 %991
      %993 = vrot.lane.b32.xlu0 %v839, 82
      %v994 = vpop.permute.xlu0 %993
      %995 = vrot.lane.b32.xlu0 %v838, 82
      %v996 = vpop.permute.xlu0 %995
      %997 = vrot.lane.b32.xlu0 %v733, 82
      %v998 = vpop.permute.xlu0 %997
      %999 = vrot.lane.b32.xlu0 %v734, 82
      %v1000 = vpop.permute.xlu0 %999
      %1001 = vrot.lane.b32.xlu0 %v842, 82
      %v1002 = vpop.permute.xlu0 %1001
      %1003 = vrot.lane.b32.xlu0 %v841, 82
      %v1004 = vpop.permute.xlu0 %1003
      %1005 = vrot.lane.b32.xlu0 %v852, 82
      %v1006 = vpop.permute.xlu0 %1005
      %1007 = vrot.lane.b32.xlu0 %v853, 82
      %v1008 = vpop.permute.xlu0 %1007
      %1009 = vrot.lane.b32.xlu0 %v854, 82
      %v1010 = vpop.permute.xlu0 %1009
      %1011 = vrot.lane.b32.xlu0 %v850, 82
      %v1012 = vpop.permute.xlu0 %1011
      %1013 = vrot.lane.b32.xlu0 %v864, 82
      %v1014 = vpop.permute.xlu0 %1013
      %1015 = vrot.lane.b32.xlu0 %v865, 82
      %v1016 = vpop.permute.xlu0 %1015
      %1017 = vrot.lane.b32.xlu0 %v866, 82
      %v1018 = vpop.permute.xlu0 %1017
      %1019 = vrot.lane.b32.xlu0 %v862, 82
      %v1020 = vpop.permute.xlu0 %1019
      %1021 = vrot.lane.b32.xlu0 %v771, 82
      %v1022 = vpop.permute.xlu0 %1021
      %1023 = vrot.lane.b32.xlu0 %v772, 82
      %v1024 = vpop.permute.xlu0 %1023
      %1025 = vrot.lane.b32.xlu0 %v773, 82
      %v1026 = vpop.permute.xlu0 %1025
      %1027 = vrot.lane.b32.xlu0 %v769, 82
      %v1028 = vpop.permute.xlu0 %1027
      %1029 = vrot.lane.b32.xlu0 %v786, 82
      %v1030 = vpop.permute.xlu0 %1029
      %1031 = vrot.lane.b32.xlu0 %v787, 82
      %v1032 = vpop.permute.xlu0 %1031
      %1033 = vrot.lane.b32.xlu0 %v788, 82
      %v1034 = vpop.permute.xlu0 %1033
      %1035 = vrot.lane.b32.xlu0 %v784, 82
      %v1036 = vpop.permute.xlu0 %1035
      %vm1037 = vcmask 670720
      %v1038 = vsel %vm1037, %v910, %v912
      %v1039 = vsel %vm1037, %v912, %v914
      %v1040 = vsel %vm1037, %v914, %v916
      %v1041 = vsel %vm1037, %v918, %v920
      %v1042 = vsel %vm1037, %v920, %v922
      %v1043 = vsel %vm1037, %v922, %v924
      %v1044 = vsel %vm1037, %v926, %v928
      %v1045 = vsel %vm1037, %v928, %v930
      %v1046 = vsel %vm1037, %v930, %v932
      %v1047 = vsel %vm1037, %v934, %v936
      %v1048 = vsel %vm1037, %v936, %v938
      %v1049 = vsel %vm1037, %v938, %v940
      %v1050 = vsel %vm1037, %v942, %v944
      %v1051 = vsel %vm1037, %v944, %v946
      %v1052 = vsel %vm1037, %v946, %v948
      %v1053 = vsel %vm1037, %v950, %v952
      %v1054 = vsel %vm1037, %v952, %v954
      %v1055 = vsel %vm1037, %v954, %v956
      %v1056 = vsel %vm1037, %v958, %v960
      %v1057 = vsel %vm1037, %v960, %v962
      %v1058 = vsel %vm1037, %v962, %v964
      %v1059 = vsel %vm1037, %v966, %v968
      %v1060 = vsel %vm1037, %v968, %v970
      %v1061 = vsel %vm1037, %v970, %v972
      %v1062 = vsel %vm1037, %v974, %v976
      %v1063 = vsel %vm1037, %v976, %v978
      %v1064 = vsel %vm1037, %v978, %v980
      %v1065 = vsel %vm1037, %v982, %v984
      %v1066 = vsel %vm1037, %v984, %v986
      %v1067 = vsel %vm1037, %v986, %v988
      %v1068 = vsel %vm1037, %v990, %v992
      %v1069 = vsel %vm1037, %v992, %v994
      %v1070 = vsel %vm1037, %v994, %v996
      %v1071 = vsel %vm1037, %v998, %v1000
      %v1072 = vsel %vm1037, %v1000, %v1002
      %v1073 = vsel %vm1037, %v1002, %v1004
      %v1074 = vsel %vm1037, %v1006, %v1008
      %v1075 = vsel %vm1037, %v1008, %v1010
      %v1076 = vsel %vm1037, %v1010, %v1012
      %v1077 = vsel %vm1037, %v1014, %v1016
      %v1078 = vsel %vm1037, %v1016, %v1018
      %v1079 = vsel %vm1037, %v1018, %v1020
      %v1080 = vsel %vm1037, %v1022, %v1024
      %v1081 = vsel %vm1037, %v1024, %v1026
      %v1082 = vsel %vm1037, %v1026, %v1028
      %v1083 = vsel %vm1037, %v1030, %v1032
      %v1084 = vsel %vm1037, %v1032, %v1034
      %v1085 = vsel %vm1037, %v1034, %v1036
      %1134 = vrot.lane.b32.xlu0 %v572, 36
      %v1135 = vpop.permute.xlu0 %1134
      %1136 = vrot.lane.b32.xlu0 %v573, 36
      %v1137 = vpop.permute.xlu0 %1136
      %1138 = vrot.lane.b32.xlu0 %v574, 36
      %v1139 = vpop.permute.xlu0 %1138
      %1140 = vrot.lane.b32.xlu0 %v605, 36
      %v1141 = vpop.permute.xlu0 %1140
      %1142 = vrot.lane.b32.xlu0 %v613, 36
      %v1143 = vpop.permute.xlu0 %1142
      %1144 = vrot.lane.b32.xlu0 %v614, 36
      %v1145 = vpop.permute.xlu0 %1144
      %1146 = vrot.lane.b32.xlu0 %v794, 36
      %v1147 = vpop.permute.xlu0 %1146
      %1148 = vrot.lane.b32.xlu0 %v793, 36
      %v1149 = vpop.permute.xlu0 %1148
      %1150 = vrot.lane.b32.xlu0 %v625, 36
      %v1151 = vpop.permute.xlu0 %1150
      %1152 = vrot.lane.b32.xlu0 %v626, 36
      %v1153 = vpop.permute.xlu0 %1152
      %1154 = vrot.lane.b32.xlu0 %v797, 36
      %v1155 = vpop.permute.xlu0 %1154
      %1156 = vrot.lane.b32.xlu0 %v796, 36
      %v1157 = vpop.permute.xlu0 %1156
      %1158 = vrot.lane.b32.xlu0 %v876, 36
      %v1159 = vpop.permute.xlu0 %1158
      %1160 = vrot.lane.b32.xlu0 %v877, 36
      %v1161 = vpop.permute.xlu0 %1160
      %1162 = vrot.lane.b32.xlu0 %v878, 36
      %v1163 = vpop.permute.xlu0 %1162
      %1164 = vrot.lane.b32.xlu0 %v874, 36
      %v1165 = vpop.permute.xlu0 %1164
      %1166 = vrot.lane.b32.xlu0 %v888, 36
      %v1167 = vpop.permute.xlu0 %1166
      %1168 = vrot.lane.b32.xlu0 %v889, 36
      %v1169 = vpop.permute.xlu0 %1168
      %1170 = vrot.lane.b32.xlu0 %v890, 36
      %v1171 = vpop.permute.xlu0 %1170
      %1172 = vrot.lane.b32.xlu0 %v886, 36
      %v1173 = vpop.permute.xlu0 %1172
      %1174 = vrot.lane.b32.xlu0 %v813, 36
      %v1175 = vpop.permute.xlu0 %1174
      %1176 = vrot.lane.b32.xlu0 %v814, 36
      %v1177 = vpop.permute.xlu0 %1176
      %1178 = vrot.lane.b32.xlu0 %v815, 36
      %v1179 = vpop.permute.xlu0 %1178
      %1180 = vrot.lane.b32.xlu0 %v811, 36
      %v1181 = vpop.permute.xlu0 %1180
      %1182 = vrot.lane.b32.xlu0 %v825, 36
      %v1183 = vpop.permute.xlu0 %1182
      %1184 = vrot.lane.b32.xlu0 %v826, 36
      %v1185 = vpop.permute.xlu0 %1184
      %1186 = vrot.lane.b32.xlu0 %v827, 36
      %v1187 = vpop.permute.xlu0 %1186
      %1188 = vrot.lane.b32.xlu0 %v823, 36
      %v1189 = vpop.permute.xlu0 %1188
      %1190 = vrot.lane.b32.xlu0 %v685, 36
      %v1191 = vpop.permute.xlu0 %1190
      %1192 = vrot.lane.b32.xlu0 %v686, 36
      %v1193 = vpop.permute.xlu0 %1192
      %1194 = vrot.lane.b32.xlu0 %v830, 36
      %v1195 = vpop.permute.xlu0 %1194
      %1196 = vrot.lane.b32.xlu0 %v829, 36
      %v1197 = vpop.permute.xlu0 %1196
      %1198 = vrot.lane.b32.xlu0 %v697, 36
      %v1199 = vpop.permute.xlu0 %1198
      %1200 = vrot.lane.b32.xlu0 %v698, 36
      %v1201 = vpop.permute.xlu0 %1200
      %1202 = vrot.lane.b32.xlu0 %v833, 36
      %v1203 = vpop.permute.xlu0 %1202
      %1204 = vrot.lane.b32.xlu0 %v832, 36
      %v1205 = vpop.permute.xlu0 %1204
      %1206 = vrot.lane.b32.xlu0 %v709, 36
      %v1207 = vpop.permute.xlu0 %1206
      %1208 = vrot.lane.b32.xlu0 %v710, 36
      %v1209 = vpop.permute.xlu0 %1208
      %1210 = vrot.lane.b32.xlu0 %v836, 36
      %v1211 = vpop.permute.xlu0 %1210
      %1212 = vrot.lane.b32.xlu0 %v835, 36
      %v1213 = vpop.permute.xlu0 %1212
      %1214 = vrot.lane.b32.xlu0 %v892, 36
      %v1215 = vpop.permute.xlu0 %1214
      %1216 = vrot.lane.b32.xlu0 %v898, 36
      %v1217 = vpop.permute.xlu0 %1216
      %1218 = vrot.lane.b32.xlu0 %v899, 36
      %v1219 = vpop.permute.xlu0 %1218
      %1220 = vrot.lane.b32.xlu0 %v896, 36
      %v1221 = vpop.permute.xlu0 %1220
      %1222 = vrot.lane.b32.xlu0 %v901, 36
      %v1223 = vpop.permute.xlu0 %1222
      %1224 = vrot.lane.b32.xlu0 %v907, 36
      %v1225 = vpop.permute.xlu0 %1224
      %1226 = vrot.lane.b32.xlu0 %v908, 36
      %v1227 = vpop.permute.xlu0 %1226
      %1228 = vrot.lane.b32.xlu0 %v905, 36
      %v1229 = vpop.permute.xlu0 %1228
      %1230 = vrot.lane.b32.xlu0 %v846, 36
      %v1231 = vpop.permute.xlu0 %1230
      %1232 = vrot.lane.b32.xlu0 %v853, 36
      %v1233 = vpop.permute.xlu0 %1232
      %1234 = vrot.lane.b32.xlu0 %v854, 36
      %v1235 = vpop.permute.xlu0 %1234
      %1236 = vrot.lane.b32.xlu0 %v850, 36
      %v1237 = vpop.permute.xlu0 %1236
      %1238 = vrot.lane.b32.xlu0 %v858, 36
      %v1239 = vpop.permute.xlu0 %1238
      %1240 = vrot.lane.b32.xlu0 %v865, 36
      %v1241 = vpop.permute.xlu0 %1240
      %1242 = vrot.lane.b32.xlu0 %v866, 36
      %v1243 = vpop.permute.xlu0 %1242
      %1244 = vrot.lane.b32.xlu0 %v862, 36
      %v1245 = vpop.permute.xlu0 %1244
      %1246 = vrot.lane.b32.xlu0 %v765, 36
      %v1247 = vpop.permute.xlu0 %1246
      %1248 = vrot.lane.b32.xlu0 %v772, 36
      %v1249 = vpop.permute.xlu0 %1248
      %1250 = vrot.lane.b32.xlu0 %v773, 36
      %v1251 = vpop.permute.xlu0 %1250
      %1252 = vrot.lane.b32.xlu0 %v769, 36
      %v1253 = vpop.permute.xlu0 %1252
      %1254 = vrot.lane.b32.xlu0 %v780, 36
      %v1255 = vpop.permute.xlu0 %1254
      %1256 = vrot.lane.b32.xlu0 %v787, 36
      %v1257 = vpop.permute.xlu0 %1256
      %1258 = vrot.lane.b32.xlu0 %v788, 36
      %v1259 = vpop.permute.xlu0 %1258
      %1260 = vrot.lane.b32.xlu0 %v784, 36
      %v1261 = vpop.permute.xlu0 %1260
      %vm1262 = vcmask 293888
      %v1263 = vsel %vm1262, %v1135, %v1137
      %v1264 = vsel %vm1262, %v1137, %v1139
      %v1265 = vsel %vm1262, %v1139, %v1141
      %v1266 = vsel %vm1262, %v1143, %v1145
      %v1267 = vsel %vm1262, %v1145, %v1147
      %v1268 = vsel %vm1262, %v1147, %v1149
      %v1269 = vsel %vm1262, %v1151, %v1153
      %v1270 = vsel %vm1262, %v1153, %v1155
      %v1271 = vsel %vm1262, %v1155, %v1157
      %v1272 = vsel %vm1262, %v1159, %v1161
      %v1273 = vsel %vm1262, %v1161, %v1163
      %v1274 = vsel %vm1262, %v1163, %v1165
      %v1275 = vsel %vm1262, %v1167, %v1169
      %v1276 = vsel %vm1262, %v1169, %v1171
      %v1277 = vsel %vm1262, %v1171, %v1173
      %v1278 = vsel %vm1262, %v1175, %v1177
      %v1279 = vsel %vm1262, %v1177, %v1179
      %v1280 = vsel %vm1262, %v1179, %v1181
      %v1281 = vsel %vm1262, %v1183, %v1185
      %v1282 = vsel %vm1262, %v1185, %v1187
      %v1283 = vsel %vm1262, %v1187, %v1189
      %v1284 = vsel %vm1262, %v1191, %v1193
      %v1285 = vsel %vm1262, %v1193, %v1195
      %v1286 = vsel %vm1262, %v1195, %v1197
      %v1287 = vsel %vm1262, %v1199, %v1201
      %v1288 = vsel %vm1262, %v1201, %v1203
      %v1289 = vsel %vm1262, %v1203, %v1205
      %v1290 = vsel %vm1262, %v1207, %v1209
      %v1291 = vsel %vm1262, %v1209, %v1211
      %v1292 = vsel %vm1262, %v1211, %v1213
      %v1293 = vsel %vm1262, %v1215, %v1217
      %v1294 = vsel %vm1262, %v1217, %v1219
      %v1295 = vsel %vm1262, %v1219, %v1221
      %v1296 = vsel %vm1262, %v1223, %v1225
      %v1297 = vsel %vm1262, %v1225, %v1227
      %v1298 = vsel %vm1262, %v1227, %v1229
      %v1299 = vsel %vm1262, %v1231, %v1233
      %v1300 = vsel %vm1262, %v1233, %v1235
      %v1301 = vsel %vm1262, %v1235, %v1237
      %v1302 = vsel %vm1262, %v1239, %v1241
      %v1303 = vsel %vm1262, %v1241, %v1243
      %v1304 = vsel %vm1262, %v1243, %v1245
      %v1305 = vsel %vm1262, %v1247, %v1249
      %v1306 = vsel %vm1262, %v1249, %v1251
      %v1307 = vsel %vm1262, %v1251, %v1253
      %v1308 = vsel %vm1262, %v1255, %v1257
      %v1309 = vsel %vm1262, %v1257, %v1259
      %v1310 = vsel %vm1262, %v1259, %v1261
      %1359 = vrot.lane.b32.xlu0 %v573, 118
      %v1360 = vpop.permute.xlu0 %1359
      %1361 = vrot.lane.b32.xlu0 %v574, 118
      %v1362 = vpop.permute.xlu0 %1361
      %1363 = vrot.lane.b32.xlu0 %v605, 118
      %v1364 = vpop.permute.xlu0 %1363
      %vm1365 = vcmask 965632
      %v1366 = vsel %vm1365, %v1360, %v1362
      %v1367 = vsel %vm1365, %v1362, %v1364
      %1372 = vset.pattern.permute.xlu0 0
      %1373 = vperm.xlu0 %1372, %v603
      %v1374 = vpop.permute.xlu0 %1373
      %v1377 = vsel %vm394, %v602, 0
      %1379 = vmatpush.msra.mxu0 %v786
      %1380 = vmatpush.msra.mxu0 %v771
      %1381 = vmatpush.msra.mxu0 %v756
      %1382 = vmatpush.msra.mxu0 %v745
      %1383 = vmatpush.msra.mxu0 %v733
      %1384 = vmatpush.msra.mxu0 %v721
      %1385 = vmatpush.msra.mxu0 %v709
      %1386 = vmatpush.msra.mxu0 %v697
      %1387 = vmatpush.msra.mxu0 %v685
      %1388 = vmatpush.msra.mxu0 %v673
      %1389 = vmatpush.msra.mxu0 %v661
      %1390 = vmatpush.msra.mxu0 %v649
      %1391 = vmatpush.msra.mxu0 %v637
      %1392 = vmatpush.msra.mxu0 %v625
      %1393 = vmatpush.msra.mxu0 %v613
      %1394 = vmatpush.msra.mxu0 %v572
      %1395 = vmatmul.f32.gmra.mxu0 %v599
      %v1396 = vpop.f32.mrf.mxu0
      %v1397 = vadd.f32 %v1374, %v1396
      %1398 = vdwg.mxu0
      %1399 = vmatpush.msra.mxu0 %v1083
      %1400 = vmatpush.msra.mxu0 %v1080
      %1401 = vmatpush.msra.mxu0 %v1077
      %1402 = vmatpush.msra.mxu0 %v1074
      %1403 = vmatpush.msra.mxu0 %v1071
      %1404 = vmatpush.msra.mxu0 %v1068
      %1405 = vmatpush.msra.mxu0 %v1065
      %1406 = vmatpush.msra.mxu0 %v1062
      %1407 = vmatpush.msra.mxu0 %v1059
      %1408 = vmatpush.msra.mxu0 %v1056
      %1409 = vmatpush.msra.mxu0 %v1053
      %1410 = vmatpush.msra.mxu0 %v1050
      %1411 = vmatpush.msra.mxu0 %v1047
      %1412 = vmatpush.msra.mxu0 %v1044
      %1413 = vmatpush.msra.mxu0 %v1041
      %1414 = vmatpush.msra.mxu0 %v1038
      %1415 = vmatmul.f32.gmra.mxu0 %v600
      %v1416 = vpop.f32.mrf.mxu0
      %v1417 = vadd.f32 %v1397, %v1416
      %1418 = vdwg.mxu0
      %1419 = vmatpush.msra.mxu0 %v1308
      %1420 = vmatpush.msra.mxu0 %v1305
      %1421 = vmatpush.msra.mxu0 %v1302
      %1422 = vmatpush.msra.mxu0 %v1299
      %1423 = vmatpush.msra.mxu0 %v1296
      %1424 = vmatpush.msra.mxu0 %v1293
      %1425 = vmatpush.msra.mxu0 %v1290
      %1426 = vmatpush.msra.mxu0 %v1287
      %1427 = vmatpush.msra.mxu0 %v1284
      %1428 = vmatpush.msra.mxu0 %v1281
      %1429 = vmatpush.msra.mxu0 %v1278
      %1430 = vmatpush.msra.mxu0 %v1275
      %1431 = vmatpush.msra.mxu0 %v1272
      %1432 = vmatpush.msra.mxu0 %v1269
      %1433 = vmatpush.msra.mxu0 %v1266
      %1434 = vmatpush.msra.mxu0 %v1263
      %1435 = vmatmul.f32.gmra.mxu0 %v601
      %v1436 = vpop.f32.mrf.mxu0
      %v1437 = vadd.f32 %v1417, %v1436
      %1438 = vdwg.mxu0
      %1439 = vmatpush.msra.mxu0 0.0
      %1440 = vmatpush.msra.mxu0 0.0
      %1441 = vmatpush.msra.mxu0 0.0
      %1442 = vmatpush.msra.mxu0 0.0
      %1443 = vmatpush.msra.mxu0 0.0
      %1444 = vmatpush.msra.mxu0 0.0
      %1445 = vmatpush.msra.mxu0 0.0
      %1446 = vmatpush.msra.mxu0 0.0
      %1447 = vmatpush.msra.mxu0 0.0
      %1448 = vmatpush.msra.mxu0 0.0
      %1449 = vmatpush.msra.mxu0 0.0
      %1450 = vmatpush.msra.mxu0 0.0
      %1451 = vmatpush.msra.mxu0 0.0
      %1452 = vmatpush.msra.mxu0 0.0
      %1453 = vmatpush.msra.mxu0 0.0
      %1454 = vmatpush.msra.mxu0 %v1366
      %1455 = vmatmul.f32.gmra.mxu0 %v1377
      %v1456 = vpop.f32.mrf.mxu0
      %v1457 = vadd.f32 %v1437, %v1456
      %1458 = vdwg.mxu0
      %1459 = vmatpush.msra.mxu0 %v787
      %1460 = vmatpush.msra.mxu0 %v772
      %1461 = vmatpush.msra.mxu0 %v757
      %1462 = vmatpush.msra.mxu0 %v746
      %1463 = vmatpush.msra.mxu0 %v734
      %1464 = vmatpush.msra.mxu0 %v722
      %1465 = vmatpush.msra.mxu0 %v710
      %1466 = vmatpush.msra.mxu0 %v698
      %1467 = vmatpush.msra.mxu0 %v686
      %1468 = vmatpush.msra.mxu0 %v674
      %1469 = vmatpush.msra.mxu0 %v662
      %1470 = vmatpush.msra.mxu0 %v650
      %1471 = vmatpush.msra.mxu0 %v638
      %1472 = vmatpush.msra.mxu0 %v626
      %1473 = vmatpush.msra.mxu0 %v614
      %1474 = vmatpush.msra.mxu0 %v573
      %1475 = vmatmul.f32.gmra.mxu0 %v599
      %v1476 = vpop.f32.mrf.mxu0
      %v1477 = vadd.f32 %v1374, %v1476
      %1478 = vdwg.mxu0
      %1479 = vmatpush.msra.mxu0 %v1084
      %1480 = vmatpush.msra.mxu0 %v1081
      %1481 = vmatpush.msra.mxu0 %v1078
      %1482 = vmatpush.msra.mxu0 %v1075
      %1483 = vmatpush.msra.mxu0 %v1072
      %1484 = vmatpush.msra.mxu0 %v1069
      %1485 = vmatpush.msra.mxu0 %v1066
      %1486 = vmatpush.msra.mxu0 %v1063
      %1487 = vmatpush.msra.mxu0 %v1060
      %1488 = vmatpush.msra.mxu0 %v1057
      %1489 = vmatpush.msra.mxu0 %v1054
      %1490 = vmatpush.msra.mxu0 %v1051
      %1491 = vmatpush.msra.mxu0 %v1048
      %1492 = vmatpush.msra.mxu0 %v1045
      %1493 = vmatpush.msra.mxu0 %v1042
      %1494 = vmatpush.msra.mxu0 %v1039
      %1495 = vmatmul.f32.gmra.mxu0 %v600
      %v1496 = vpop.f32.mrf.mxu0
      %v1497 = vadd.f32 %v1477, %v1496
      %1498 = vdwg.mxu0
      %1499 = vmatpush.msra.mxu0 %v1309
      %1500 = vmatpush.msra.mxu0 %v1306
      %1501 = vmatpush.msra.mxu0 %v1303
      %1502 = vmatpush.msra.mxu0 %v1300
      %1503 = vmatpush.msra.mxu0 %v1297
      %1504 = vmatpush.msra.mxu0 %v1294
      %1505 = vmatpush.msra.mxu0 %v1291
      %1506 = vmatpush.msra.mxu0 %v1288
      %1507 = vmatpush.msra.mxu0 %v1285
      %1508 = vmatpush.msra.mxu0 %v1282
      %1509 = vmatpush.msra.mxu0 %v1279
      %1510 = vmatpush.msra.mxu0 %v1276
      %1511 = vmatpush.msra.mxu0 %v1273
      %1512 = vmatpush.msra.mxu0 %v1270
      %1513 = vmatpush.msra.mxu0 %v1267
      %1514 = vmatpush.msra.mxu0 %v1264
      %1515 = vmatmul.f32.gmra.mxu0 %v601
      %v1516 = vpop.f32.mrf.mxu0
      %v1517 = vadd.f32 %v1497, %v1516
      %1518 = vdwg.mxu0
      %1519 = vmatpush.msra.mxu0 0.0
      %1520 = vmatpush.msra.mxu0 0.0
      %1521 = vmatpush.msra.mxu0 0.0
      %1522 = vmatpush.msra.mxu0 0.0
      %1523 = vmatpush.msra.mxu0 0.0
      %1524 = vmatpush.msra.mxu0 0.0
      %1525 = vmatpush.msra.mxu0 0.0
      %1526 = vmatpush.msra.mxu0 0.0
      %1527 = vmatpush.msra.mxu0 0.0
      %1528 = vmatpush.msra.mxu0 0.0
      %1529 = vmatpush.msra.mxu0 0.0
      %1530 = vmatpush.msra.mxu0 0.0
      %1531 = vmatpush.msra.mxu0 0.0
      %1532 = vmatpush.msra.mxu0 0.0
      %1533 = vmatpush.msra.mxu0 0.0
      %1534 = vmatpush.msra.mxu0 %v1367
      %1535 = vmatmul.f32.gmra.mxu0 %v1377
      %v1536 = vpop.f32.mrf.mxu0
      %v1537 = vadd.f32 %v1517, %v1536
      %1538 = vdwg.mxu0
      %1539 = vmatpush.msra.mxu0 %v788
      %1540 = vmatpush.msra.mxu0 %v773
      %1541 = vmatpush.msra.mxu0 %v755
      %1542 = vmatpush.msra.mxu0 %v743
      %1543 = vmatpush.msra.mxu0 %v731
      %1544 = vmatpush.msra.mxu0 %v719
      %1545 = vmatpush.msra.mxu0 %v707
      %1546 = vmatpush.msra.mxu0 %v695
      %1547 = vmatpush.msra.mxu0 %v683
      %1548 = vmatpush.msra.mxu0 %v671
      %1549 = vmatpush.msra.mxu0 %v659
      %1550 = vmatpush.msra.mxu0 %v647
      %1551 = vmatpush.msra.mxu0 %v635
      %1552 = vmatpush.msra.mxu0 %v623
      %1553 = vmatpush.msra.mxu0 %v611
      %1554 = vmatpush.msra.mxu0 %v574
      %1555 = vmatmul.f32.gmra.mxu0 %v599
      %v1556 = vpop.f32.mrf.mxu0
      %v1557 = vadd.f32 %v1374, %v1556
      %1558 = vdwg.mxu0
      %1559 = vmatpush.msra.mxu0 %v1085
      %1560 = vmatpush.msra.mxu0 %v1082
      %1561 = vmatpush.msra.mxu0 %v1079
      %1562 = vmatpush.msra.mxu0 %v1076
      %1563 = vmatpush.msra.mxu0 %v1073
      %1564 = vmatpush.msra.mxu0 %v1070
      %1565 = vmatpush.msra.mxu0 %v1067
      %1566 = vmatpush.msra.mxu0 %v1064
      %1567 = vmatpush.msra.mxu0 %v1061
      %1568 = vmatpush.msra.mxu0 %v1058
      %1569 = vmatpush.msra.mxu0 %v1055
      %1570 = vmatpush.msra.mxu0 %v1052
      %1571 = vmatpush.msra.mxu0 %v1049
      %1572 = vmatpush.msra.mxu0 %v1046
      %1573 = vmatpush.msra.mxu0 %v1043
      %1574 = vmatpush.msra.mxu0 %v1040
      %1575 = vmatmul.f32.gmra.mxu0 %v600
      %v1576 = vpop.f32.mrf.mxu0
      %v1577 = vadd.f32 %v1557, %v1576
      %1578 = vdwg.mxu0
      %1579 = vmatpush.msra.mxu0 %v1310
      %1580 = vmatpush.msra.mxu0 %v1307
      %1581 = vmatpush.msra.mxu0 %v1304
      %1582 = vmatpush.msra.mxu0 %v1301
      %1583 = vmatpush.msra.mxu0 %v1298
      %1584 = vmatpush.msra.mxu0 %v1295
      %1585 = vmatpush.msra.mxu0 %v1292
      %1586 = vmatpush.msra.mxu0 %v1289
      %1587 = vmatpush.msra.mxu0 %v1286
      %1588 = vmatpush.msra.mxu0 %v1283
      %1589 = vmatpush.msra.mxu0 %v1280
      %1590 = vmatpush.msra.mxu0 %v1277
      %1591 = vmatpush.msra.mxu0 %v1274
      %1592 = vmatpush.msra.mxu0 %v1271
      %1593 = vmatpush.msra.mxu0 %v1268
      %1594 = vmatpush.msra.mxu0 %v1265
      %1595 = vmatmul.f32.gmra.mxu0 %v601
      %v1596 = vpop.f32.mrf.mxu0
      %v1597 = vadd.f32 %v1577, %v1596
      %1598 = vdwg.mxu0
      %1599 = vmatpush.msra.mxu0 0.0
      %1600 = vmatpush.msra.mxu0 0.0
      %1601 = vmatpush.msra.mxu0 0.0
      %1602 = vmatpush.msra.mxu0 0.0
      %1603 = vmatpush.msra.mxu0 0.0
      %1604 = vmatpush.msra.mxu0 0.0
      %1605 = vmatpush.msra.mxu0 0.0
      %1606 = vmatpush.msra.mxu0 0.0
      %1607 = vmatpush.msra.mxu0 0.0
      %1608 = vmatpush.msra.mxu0 0.0
      %1609 = vmatpush.msra.mxu0 0.0
      %1610 = vmatpush.msra.mxu0 0.0
      %1611 = vmatpush.msra.mxu0 0.0
      %1612 = vmatpush.msra.mxu0 0.0
      %1613 = vmatpush.msra.mxu0 0.0
      %1614 = vmatpush.msra.mxu0 %v1364
      %1615 = vmatmul.f32.gmra.mxu0 %v1377
      %v1616 = vpop.f32.mrf.mxu0
      %v1617 = vadd.f32 %v1597, %v1616
      %1618 = vdwg.mxu0
      %v1619 = vld [vmem:[%s7] sm:$0x7]
      %vm1620 = vcmp.lt.s32.totalorder %v1619, 16
      %v1621 = vsel %vm1620, 1, 0
      %v1622 = vcvt.s32.f32 %v1621
      %v1624 = vperm.slane %v1622, 0
      %v1625 = vperm.slane %v1622, 1
      %v1626 = vperm.slane %v1622, 2
      %v1630 = vmul.f32 %v1457, %v1624
      %v1631 = vmul.f32 %v1537, %v1625
      %v1632 = vmul.f32 %v1617, %v1626
      %v1633 = vadd.f32 %v1630, %v1631
      %v1634 = vsel %vm597, %v1632, 0.0
      %v1635 = vadd.f32 %v1633, %v1634
      %1636 = vadd.xlane.f32.xlu0 %v1635
      %v1637 = vpop.xlane.xlu0 %1636
      %v1638 = vmul.f32 %v1457, %v1457
      %v1639 = vmul.f32 %v1537, %v1537
      %v1640 = vmul.f32 %v1617, %v1617
      %v1641 = vmul.f32 %v1638, %v1624
      %v1642 = vmul.f32 %v1639, %v1625
      %v1643 = vmul.f32 %v1640, %v1626
      %v1644 = vadd.f32 %v1641, %v1642
      %v1645 = vsel %vm597, %v1643, 0.0
      %v1646 = vadd.f32 %v1644, %v1645
      %1647 = vadd.xlane.f32.xlu0 %v1646
      %v1648 = vpop.xlane.xlu0 %1647
      %vm1649 = vcmask 7168
      %v1650 = vsel %vm1649, %v1637, %v1648
      %vm1651 = vcmask 15360
      %1652 = vst.msk [vmem:[%s382] sm:$0xff] %vm1651, %v1650
      %1654 = vrot.lane.b32.xlu0 %v1617, 35
      %v1655 = vpop.permute.xlu0 %1654
      %1659 = vrot.lane.b32.xlu0 %v1457, 3
      %v1660 = vpop.permute.xlu0 %1659
      %1661 = vrot.lane.b32.xlu0 %v1537, 3
      %v1662 = vpop.permute.xlu0 %1661
      %1663 = vrot.lane.b32.xlu0 %v1617, 3
      %v1664 = vpop.permute.xlu0 %1663
      %vm1665 = vcmask 23552
      %v1666 = vsel %vm1665, %v1660, %v1662
      %v1667 = vsel %vm1665, %v1662, %v1664
      %v1671 = vsel %vm1665, %v1655, %v1660
      %vm1672 = vcmp.eq.s32.totalorder %v1619, 0
      %v1673 = vsel %vm1672, 1, 0
      %v1674 = vperm.slane %v1673, 0
      %v1675 = vperm.slane %v1673, 1
      %v1676 = vperm.slane %v1673, 2
      %vm1677 = vcmp.eq.s32.totalorder %v1674, 1
      %vm1678 = vcmp.eq.s32.totalorder %v1675, 1
      %vm1679 = vcmp.eq.s32.totalorder %v1676, 1
      %v1680 = vsel %vm1677, %v1457, %v1671
      %v1681 = vsel %vm1678, %v1537, %v1666
      %v1682 = vsel %vm1679, %v1617, %v1667
      %vm1683 = vcmp.eq.s32.totalorder %v1619, 1
      %1684 = vrot.lane.b32.xlu0 %v1617, 33
      %v1685 = vpop.permute.xlu0 %1684
      %1687 = vrot.lane.b32.xlu0 %v1457, 1
      %v1688 = vpop.permute.xlu0 %1687
      %1689 = vrot.lane.b32.xlu0 %v1537, 1
      %v1690 = vpop.permute.xlu0 %1689
      %1691 = vrot.lane.b32.xlu0 %v1617, 1
      %v1692 = vpop.permute.xlu0 %1691
      %v1693 = vsel %vm1649, %v1688, %v1690
      %v1694 = vsel %vm1649, %v1690, %v1692
      %v1698 = vsel %vm1649, %v1685, %v1688
      %v1699 = vsel %vm1683, 1, 0
      %v1700 = vperm.slane %v1699, 0
      %v1701 = vperm.slane %v1699, 1
      %v1702 = vperm.slane %v1699, 2
      %vm1703 = vcmp.eq.s32.totalorder %v1700, 1
      %vm1704 = vcmp.eq.s32.totalorder %v1701, 1
      %vm1705 = vcmp.eq.s32.totalorder %v1702, 1
      %v1706 = vsel %vm1703, %v1698, %v1680
      %v1707 = vsel %vm1704, %v1693, %v1681
      %v1708 = vsel %vm1705, %v1694, %v1682
      %vm1709 = vcmp.eq.s32.totalorder %v1619, 2
      %1710 = vrot.lane.b32.xlu0 %v1617, 34
      %v1711 = vpop.permute.xlu0 %1710
      %1713 = vrot.lane.b32.xlu0 %v1457, 2
      %v1714 = vpop.permute.xlu0 %1713
      %1715 = vrot.lane.b32.xlu0 %v1537, 2
      %v1716 = vpop.permute.xlu0 %1715
      %1717 = vrot.lane.b32.xlu0 %v1617, 2
      %v1718 = vpop.permute.xlu0 %1717
      %v1719 = vsel %vm1651, %v1714, %v1716
      %v1720 = vsel %vm1651, %v1716, %v1718
      %v1724 = vsel %vm1651, %v1711, %v1714
      %v1725 = vsel %vm1709, 1, 0
      %v1726 = vperm.slane %v1725, 0
      %v1727 = vperm.slane %v1725, 1
      %v1728 = vperm.slane %v1725, 2
      %vm1729 = vcmp.eq.s32.totalorder %v1726, 1
      %vm1730 = vcmp.eq.s32.totalorder %v1727, 1
      %vm1731 = vcmp.eq.s32.totalorder %v1728, 1
      %v1732 = vsel %vm1729, %v1724, %v1706
      %v1733 = vsel %vm1730, %v1719, %v1707
      %v1734 = vsel %vm1731, %v1720, %v1708
      %vm1735 = vcmp.eq.s32.totalorder %v1619, 19
      %1736 = vrot.lane.b32.xlu0 %v1617, 36
      %v1737 = vpop.permute.xlu0 %1736
      %1739 = vrot.lane.b32.xlu0 %v1457, 4
      %v1740 = vpop.permute.xlu0 %1739
      %1741 = vrot.lane.b32.xlu0 %v1537, 4
      %v1742 = vpop.permute.xlu0 %1741
      %1743 = vrot.lane.b32.xlu0 %v1617, 4
      %v1744 = vpop.permute.xlu0 %1743
      %vm1745 = vcmask 31744
      %v1746 = vsel %vm1745, %v1740, %v1742
      %v1747 = vsel %vm1745, %v1742, %v1744
      %v1751 = vsel %vm1745, %v1737, %v1740
      %v1752 = vsel %vm1735, 1, 0
      %v1753 = vperm.slane %v1752, 0
      %v1754 = vperm.slane %v1752, 1
      %v1755 = vperm.slane %v1752, 2
      %vm1756 = vcmp.eq.s32.totalorder %v1753, 1
      %vm1757 = vcmp.eq.s32.totalorder %v1754, 1
      %vm1758 = vcmp.eq.s32.totalorder %v1755, 1
      %v1759 = vsel %vm1756, %v1751, %v1732
      %v1760 = vsel %vm1757, %v1746, %v1733
      %v1761 = vsel %vm1758, %v1747, %v1734
      %vm1762 = vcmp.eq.s32.totalorder %v1619, 20
      %1763 = vrot.lane.b32.xlu0 %v1617, 37
      %v1764 = vpop.permute.xlu0 %1763
      %1766 = vrot.lane.b32.xlu0 %v1457, 5
      %v1767 = vpop.permute.xlu0 %1766
      %1768 = vrot.lane.b32.xlu0 %v1537, 5
      %v1769 = vpop.permute.xlu0 %1768
      %1770 = vrot.lane.b32.xlu0 %v1617, 5
      %v1771 = vpop.permute.xlu0 %1770
      %vm1772 = vcmask 39936
      %v1773 = vsel %vm1772, %v1767, %v1769
      %v1774 = vsel %vm1772, %v1769, %v1771
      %v1778 = vsel %vm1772, %v1764, %v1767
      %v1779 = vsel %vm1762, 1, 0
      %v1780 = vperm.slane %v1779, 0
      %v1781 = vperm.slane %v1779, 1
      %v1782 = vperm.slane %v1779, 2
      %vm1783 = vcmp.eq.s32.totalorder %v1780, 1
      %vm1784 = vcmp.eq.s32.totalorder %v1781, 1
      %vm1785 = vcmp.eq.s32.totalorder %v1782, 1
      %v1786 = vsel %vm1783, %v1778, %v1759
      %v1787 = vsel %vm1784, %v1773, %v1760
      %v1788 = vsel %vm1785, %v1774, %v1761
      %vm1789 = vcmp.eq.s32.totalorder %v1619, 21
      %1790 = vrot.lane.b32.xlu0 %v1617, 38
      %v1791 = vpop.permute.xlu0 %1790
      %1793 = vrot.lane.b32.xlu0 %v1457, 6
      %v1794 = vpop.permute.xlu0 %1793
      %1795 = vrot.lane.b32.xlu0 %v1537, 6
      %v1796 = vpop.permute.xlu0 %1795
      %1797 = vrot.lane.b32.xlu0 %v1617, 6
      %v1798 = vpop.permute.xlu0 %1797
      %vm1799 = vcmask 48128
      %v1800 = vsel %vm1799, %v1794, %v1796
      %v1801 = vsel %vm1799, %v1796, %v1798
      %v1805 = vsel %vm1799, %v1791, %v1794
      %v1806 = vsel %vm1789, 1, 0
      %v1807 = vperm.slane %v1806, 0
      %v1808 = vperm.slane %v1806, 1
      %v1809 = vperm.slane %v1806, 2
      %vm1810 = vcmp.eq.s32.totalorder %v1807, 1
      %vm1811 = vcmp.eq.s32.totalorder %v1808, 1
      %vm1812 = vcmp.eq.s32.totalorder %v1809, 1
      %v1813 = vsel %vm1810, %v1805, %v1786
      %v1814 = vsel %vm1811, %v1800, %v1787
      %v1815 = vsel %vm1812, %v1801, %v1788
      %1817 = vrot.lane.b32.xlu0 %v1813, 22
      %v1818 = vpop.permute.xlu0 %1817
      %1820 = vrot.lane.b32.xlu0 %v1813, 44
      %v1821 = vpop.permute.xlu0 %1820
      %1825 = vrot.lane.b32.xlu0 %v1813, 66
      %v1826 = vpop.permute.xlu0 %1825
      %1827 = vrot.lane.b32.xlu0 %v1814, 66
      %v1828 = vpop.permute.xlu0 %1827
      %1829 = vrot.lane.b32.xlu0 %v1815, 66
      %v1830 = vpop.permute.xlu0 %1829
      %vm1831 = vcmask 539648
      %v1832 = vsel %vm1831, %v1826, %v1828
      %v1833 = vsel %vm1831, %v1828, %v1830
      %1838 = vrot.lane.b32.xlu0 %v1815, 88
      %v1839 = vpop.permute.xlu0 %1838
      %1841 = vrot.lane.b32.xlu0 %v1815, 110
      %v1842 = vpop.permute.xlu0 %1841
      %1844 = vrot.lane.b32.xlu0 %v1815, 4
      %v1845 = vpop.permute.xlu0 %1844
      %vm1847 = vcmask 179200
      %v1848 = vsel %vm1847, %v1813, %v1818
      %vm1849 = vcmask 359424
      %v1850 = vsel %vm1849, %v1848, %v1821
      %v1851 = vsel %vm1831, %v1850, %v1826
      %vm1852 = vcmask 277504
      %v1853 = vsel %vm1852, %v1830, %v1839
      %vm1854 = vcmask 457728
      %v1855 = vsel %vm1854, %v1853, %v1842
      %vm1856 = vcmask 637952
      %v1857 = vsel %vm1856, %v1855, %v1845
      %1858 = vst [vmem:[%s378] sm:$0xff] %v1851
      %1859 = vst [vmem:[%s378 + $0x8] sm:$0xff] %v1832
      %1860 = vst [vmem:[%s378 + $0x10] sm:$0xff] %v1833
      %1861 = vst.msk [vmem:[%s378 + $0x18] sm:$0xff] %vm604, %v1857
      %p1862 = scmp.lt.s32.totalorder %s22, 1
      %s1863 = scalar_select %p1862, %s22, 1
      %s1864 = smul.addr %s1863, 3
      %s1865 = smul.addr %s1864, 8
      %s1866 = scalar_lea.vmem %s8, %s1865
      %p1867 = scmp.lt.s32.totalorder %s22, 1
      %s1868 = scalar_select %p1867, %s22, 1
      %s1869 = smul.addr %s1868, 4
      %s1870 = smul.addr %s1869, 8
      %s1871 = scalar_lea.vmem %s9, %s1870
      %p1872 = scmp.lt.s32.totalorder %s22, 1
      %s1873 = scalar_select %p1872, %s22, 1
      %s1874 = smul.addr %s1873, 8
      %s1875 = scalar_lea.vmem %s10, %s1874
      // Predicated region
      $region53: #{ga_forward.3} parent=51 // pred_check
        %p1876 = pneg %p213
      $region54: #{ga_forward.3} parent=51 // pred_check_branch
        %1878 = sbr.rel (%p1876) target = $region56
      $region55: #{ga_forward.3} parent=51 // pred_region
        _
      $region56: #{ga_forward.3} parent=51 // pred_fallthru
        _
      // Predicated region
      $region57: #{ga_forward.3} parent=51 // pred_check
        %p1879 = pneg %p239
      $region58: #{ga_forward.3} parent=51 // pred_check_branch
        %1881 = sbr.rel (%p1879) target = $region60
      $region59: #{ga_forward.3} parent=51 // pred_region
        _
      $region60: #{ga_forward.3} parent=51 // pred_fallthru
        _
      // Predicated region
      $region61: #{ga_forward.3} parent=51 // pred_check
        %p1882 = pneg %p265
      $region62: #{ga_forward.3} parent=51 // pred_check_branch
        %1884 = sbr.rel (%p1882) target = $region64
      $region63: #{ga_forward.3} parent=51 // pred_region
        _
      $region64: #{ga_forward.3} parent=51 // pred_fallthru
        _
    $region52: #{ga_forward.3} parent=5 // pred_fallthru
      _
    %p1885 = scmp.le.s32.totalorder 2, %s17
    // Predicated region
    $region65: #{ga_forward.3} parent=5 // pred_check
      %p1886 = pneg %p1885
    $region66: #{ga_forward.3} parent=5 // pred_check_branch
      %1888 = sbr.rel (%p1886) target = $region68
    $region67: #{ga_forward.3} parent=5 // pred_region
      %s1889 = ssub.s32 %s17, 2
      // Predicated region
      $region69: #{ga_forward.3} parent=67 // pred_check
        %p1890 = pneg %p219
      $region70: #{ga_forward.3} parent=67 // pred_check_branch
        %1892 = sbr.rel (%p1890) target = $region72
      $region71: #{ga_forward.3} parent=67 // pred_region
        %p1893 = scmp.lt.s32.totalorder %s23, 1
        %s1894 = scalar_select %p1893, %s23, 1
        %s1895 = smul.addr %s1894, 3
        %s1896 = smul.addr %s1895, 8
        %s1897 = scalar_lea.vmem %s8, %s1896
      $region72: #{ga_forward.3} parent=67 // pred_fallthru
        _
      // Predicated region
      $region73: #{ga_forward.3} parent=67 // pred_check
        %p1898 = pneg %p245
      $region74: #{ga_forward.3} parent=67 // pred_check_branch
        %1900 = sbr.rel (%p1898) target = $region76
      $region75: #{ga_forward.3} parent=67 // pred_region
        %p1901 = scmp.lt.s32.totalorder %s23, 1
        %s1902 = scalar_select %p1901, %s23, 1
        %s1903 = smul.addr %s1902, 4
        %s1904 = smul.addr %s1903, 8
        %s1905 = scalar_lea.vmem %s9, %s1904
      $region76: #{ga_forward.3} parent=67 // pred_fallthru
        _
      // Predicated region
      $region77: #{ga_forward.3} parent=67 // pred_check
        %p1906 = pneg %p271
      $region78: #{ga_forward.3} parent=67 // pred_check_branch
        %1908 = sbr.rel (%p1906) target = $region80
      $region79: #{ga_forward.3} parent=67 // pred_region
        %p1909 = scmp.lt.s32.totalorder %s23, 1
        %s1910 = scalar_select %p1909, %s23, 1
        %s1911 = smul.addr %s1910, 8
        %s1912 = scalar_lea.vmem %s10, %s1911
      $region80: #{ga_forward.3} parent=67 // pred_fallthru
        _
    $region68: #{ga_forward.3} parent=5 // pred_fallthru
      _
  $region6: #{ga_forward.3} parent=0 // loop_footer
    %s21 = sadd.s32 1, %s17
  $region7: #{ga_forward.3} parent=0 // loop_footer_branch
    %16 = sbr.rel target = $region3
  $region8: #{ga_forward.3} parent=0 // loop_exit
    _

</llo_original>
